<compile_context>
chip_gen: v6e
topology: v6e:2x2x1
jax: 0.10.0
libtpu: 0.0.40
codegen_flags: <defaults>
</compile_context>

<pallas_src>
import functools

import jax
import jax.numpy as jnp
from jax import lax
from jax.experimental import pallas as pl
from jax.experimental.pallas import tpu as pltpu


_VMEM_LIMIT = None
_CALL_CACHE = {}


def _vmem_limit_bytes():
    """32 MiB scoped VMEM on v7x (64 MiB physical), 64 MiB on v5e/v6e."""
    global _VMEM_LIMIT
    if _VMEM_LIMIT is None:
        try:
            cap = int(pltpu.get_tpu_info().vmem_capacity_bytes)
        except Exception:
            cap = 0
        _VMEM_LIMIT = (64 << 20) if cap > (96 << 20) else (32 << 20)
    return _VMEM_LIMIT


# --------------------------------------------------------------------------
# Pallas kernels
# --------------------------------------------------------------------------
def _gemm_kernel(x_ref, w_ref, s_ref, b_ref, o_ref, acc_ref, *, relu):
    """bf16 GEMM tile, f32 VMEM accumulator, fused BN affine (+ReLU)."""
    @pl.when(pl.program_id(2) == 0)
    def _():
        acc_ref[...] = jnp.zeros_like(acc_ref)

    acc_ref[...] += jnp.dot(x_ref[...], w_ref[...],
                            preferred_element_type=jnp.float32)

    # NOTE: on a ragged last M tile the out-of-bounds rows of acc hold garbage;
    # this is safe only because the store below is row-masked and the epilogue
    # is purely elementwise (never reduce over the tile here).
    @pl.when(pl.program_id(2) == pl.num_programs(2) - 1)
    def _():
        r = acc_ref[...] * s_ref[...] + b_ref[...]
        if relu:
            r = jnp.maximum(r, 0.0)
        o_ref[...] = r.astype(o_ref.dtype)


def _gemm_res_kernel(x_ref, w_ref, s_ref, b_ref, r_ref, o_ref, acc_ref, *,
                     relu):
    """Same as _gemm_kernel but fuses a residual add before the ReLU."""
    @pl.when(pl.program_id(2) == 0)
    def _():
        acc_ref[...] = jnp.zeros_like(acc_ref)

    acc_ref[...] += jnp.dot(x_ref[...], w_ref[...],
                            preferred_element_type=jnp.float32)

    @pl.when(pl.program_id(2) == pl.num_programs(2) - 1)
    def _():
        r = acc_ref[...] * s_ref[...] + b_ref[...]
        r = r + r_ref[...].astype(jnp.float32)
        if relu:
            r = jnp.maximum(r, 0.0)
        o_ref[...] = r.astype(o_ref.dtype)


def _conv3x3_kernel(x_ref, w_ref, s_ref, b_ref, o_ref, acc_ref, *,
                    hb, wp, wo, relu):
    """Implicit-im2col 3x3 / stride-1 conv on one padded row group.

    x_ref:   (1, (hb+3)*wp, C)  flattened padded rows of this group (bf16)
    w_ref:   (9, C, tn)         one [C, tn] weight slab per (dh, dw) tap
    o_ref:   (1, hb, wo, tn)
    acc_ref: (hb*wp, tn) f32    "wide" output rows incl. 2 garbage columns/row
    """
    L = hb * wp
    for t in range(9):
        dh, dw = divmod(t, 3)
        s0 = dh * wp + dw                      # contiguous flat-row offset
        part = jnp.dot(x_ref[0, s0:s0 + L, :], w_ref[t],
                       preferred_element_type=jnp.float32)
        if t == 0:
            acc_ref[...] = part
        else:
            acc_ref[...] += part
    scale = s_ref[...]
    shift = b_ref[...]
    for r in range(hb):                        # drop per-row garbage columns
        row = acc_ref[r * wp:r * wp + wo, :] * scale + shift
        if relu:
            row = jnp.maximum(row, 0.0)
        o_ref[0, r] = row.astype(o_ref.dtype)


def _maxpool_kernel(x_ref, o_ref, *, ho, wo, c, rchunk):
    """3x3/s2/p1 max-pool of one image, all 9 taps from a single VMEM block.

    x_ref: (1, ho+1, 2, wo+1, 2*c) -- zero-padded input with H/W parity folded
           into small axes so every tap is a cheap static slice.
    """
    for r0 in range(0, ho, rchunk):
        rs = min(rchunk, ho - r0)
        m = None
        for dh in range(3):
            a, i = dh // 2, dh % 2
            for dw in range(3):
                b, j = dw // 2, dw % 2
                v = x_ref[0, a + r0:a + r0 + rs, i, b:b + wo,
                          j * c:(j + 1) * c]
                m = v if m is None else jnp.maximum(m, v)
        o_ref[0, r0:r0 + rs] = m


def _gap_kernel(x_ref, o_ref, *, inv):
    # (1, H*W, C): reduce along sublanes, write a lane-dense 2048-wide row.
    s = jnp.sum(x_ref[...].astype(jnp.float32), axis=1, keepdims=True)
    o_ref[...] = (s * inv).astype(o_ref.dtype)


# --------------------------------------------------------------------------
# Tiled GEMM (1x1 convs, explicit-im2col convs, embed head)
# --------------------------------------------------------------------------
def _pick_tm(m, cap=512):
    if m <= cap:
        return m
    for t in range(cap, 63, -8):     # prefer a tile that divides M exactly
        if m % t == 0:
            return t
    return 256                       # ragged (masked) tail fallback


def _pick_tk(k, cap=1024):
    if k <= cap:
        return k
    for c in (1024, 768, 512, 384, 256, 128):
        if k % c == 0:
            return c
    return k


def _gemm_call(M, K, N, relu, has_res, out_dtype):
    key = ("gemm", M, K, N, relu, has_res, jnp.dtype(out_dtype).name)
    if key in _CALL_CACHE:
        return _CALL_CACHE[key]
    tm = _pick_tm(M)
    tn = N if N <= 512 else 512
    tk = _pick_tk(K)
    mb, nb = pl.cdiv(M, tm), pl.cdiv(N, tn)
    # v7x has 2 TensorCores: make sure a parallel axis has >=2 blocks.
    if mb == 1 and nb == 1:
        if N >= 256:
            tn, nb = N // 2, 2
        elif M >= 256 and M % 16 == 0:
            tm, mb = M // 2, 2
    grid = (mb, nb, pl.cdiv(K, tk))
    in_specs = [
        pl.BlockSpec((tm, tk), lambda i, j, k: (i, k)),
        pl.BlockSpec((tk, tn), lambda i, j, k: (k, j)),
        pl.BlockSpec((1, tn), lambda i, j, k: (0, j)),
        pl.BlockSpec((1, tn), lambda i, j, k: (0, j)),
    ]
    if has_res:
        in_specs.append(pl.BlockSpec((tm, tn), lambda i, j, k: (i, j)))
        kernel = functools.partial(_gemm_res_kernel, relu=relu)
    else:
        kernel = functools.partial(_gemm_kernel, relu=relu)
    bytes_acc = 2 * (M * K + K * N + M * N) + 8 * N
    if has_res:
        bytes_acc += 2 * M * N
    call = pl.pallas_call(
        kernel,
        out_shape=jax.ShapeDtypeStruct((M, N), out_dtype),
        grid_spec=pltpu.PrefetchScalarGridSpec(
            num_scalar_prefetch=0,
            grid=grid,
            in_specs=in_specs,
            out_specs=pl.BlockSpec((tm, tn), lambda i, j, k: (i, j)),
            scratch_shapes=[pltpu.VMEM((tm, tn), jnp.float32)],
        ),
        compiler_params=pltpu.CompilerParams(
            dimension_semantics=("parallel", "parallel", "arbitrary"),
            vmem_limit_bytes=_vmem_limit_bytes()),
        cost_estimate=pl.CostEstimate(flops=2 * M * N * K, transcendentals=0,
                                      bytes_accessed=bytes_acc),
    )
    _CALL_CACHE[key] = jax.jit(call)
    return _CALL_CACHE[key]


def gemm_affine(x, w, scale, shift, *, relu, residual=None,
                out_dtype=jnp.bfloat16):
    """out = (x @ w) * scale + shift (+ residual) (+ ReLU)."""
    M, K = x.shape
    N = w.shape[1]
    # Lane-dense trick for 64-wide outputs: fold row pairs into one 128-lane
    # row via a block-diagonal weight so stores are full vregs (no vst.msk).
    if N == 64 and residual is None and M % 2 == 0 and M >= 2:
        wb = w.astype(jnp.bfloat16)
        wf = jnp.zeros((2 * K, 128), jnp.bfloat16)
        wf = wf.at[:K, :64].set(wb).at[K:, 64:].set(wb)
        out = gemm_affine(x.reshape(M // 2, 2 * K), wf,
                          jnp.tile(scale.reshape(-1), 2),
                          jnp.tile(shift.reshape(-1), 2),
                          relu=relu, residual=None, out_dtype=out_dtype)
        return out.reshape(M, N)
    call = _gemm_call(M, K, N, bool(relu), residual is not None, out_dtype)
    args = [x.astype(jnp.bfloat16), w.astype(jnp.bfloat16),
            scale.reshape(1, N).astype(jnp.float32),
            shift.reshape(1, N).astype(jnp.float32)]
    if residual is not None:
        args.append(residual.astype(jnp.bfloat16))
    return call(*args)


# --------------------------------------------------------------------------
# Implicit-im2col 3x3 stride-1 conv
# --------------------------------------------------------------------------
def _pick_hb(ho, wp, cap_rows=1024):
    best = 1
    for h in range(1, ho + 1):
        if ho % h == 0 and h * wp <= cap_rows:
            best = h
    return best


def _conv3x3_call(G, R, Wp, hb, Wo, C, cout, tn, relu, out_dtype):
    key = ("c3", G, R, Wp, hb, Wo, C, cout, tn, relu, jnp.dtype(out_dtype).name)
    if key in _CALL_CACHE:
        return _CALL_CACHE[key]
    kernel = functools.partial(_conv3x3_kernel, hb=hb, wp=Wp, wo=Wo, relu=relu)
    flops = 2 * G * hb * Wp * 9 * C * cout
    bytes_acc = 2 * (G * R * Wp * C + 9 * C * cout + G * hb * Wo * cout)
    call = pl.pallas_call(
        kernel,
        out_shape=jax.ShapeDtypeStruct((G, hb, Wo, cout), out_dtype),
        grid_spec=pltpu.PrefetchScalarGridSpec(
            num_scalar_prefetch=0,
            grid=(G, cout // tn),
            in_specs=[
                pl.BlockSpec((1, R * Wp, C), lambda g, j: (g, 0, 0)),
                pl.BlockSpec((9, C, tn), lambda g, j: (0, 0, j)),
                pl.BlockSpec((1, tn), lambda g, j: (0, j)),
                pl.BlockSpec((1, tn), lambda g, j: (0, j)),
            ],
            out_specs=pl.BlockSpec((1, hb, Wo, tn), lambda g, j: (g, 0, 0, j)),
            scratch_shapes=[pltpu.VMEM((hb * Wp, tn), jnp.float32)],
        ),
        compiler_params=pltpu.CompilerParams(
            dimension_semantics=("parallel", "parallel"),
            vmem_limit_bytes=_vmem_limit_bytes()),
        cost_estimate=pl.CostEstimate(flops=flops, transcendentals=0,
                                      bytes_accessed=bytes_acc),
    )
    _CALL_CACHE[key] = jax.jit(call)
    return _CALL_CACHE[key]


def _conv3x3_s1_bn(x, conv, *, relu, out_dtype=jnp.bfloat16):
    """3x3 / stride-1 / pad-1 conv + BN (+ReLU) with in-kernel im2col.

    The padded activation is re-packed into non-overlapping row groups (each
    carrying its own 2-row halo) so the kernel never reads a 9x-expanded patch
    tensor from HBM.  Inside the kernel each (dh, dw) tap is a contiguous row
    slice of the flattened group (offset dh*Wp+dw), accumulated over 9 matmuls.
    """
    w9, scale, shift = conv["w9"], conv["scale"], conv["shift"]
    Nb, H, W, C = x.shape
    cout = w9.shape[2]
    Ho, Wo, Wp = H, W, W + 2
    hb = _pick_hb(Ho, Wp)
    Gn = Ho // hb
    R = hb + 3                              # 2-row halo + 1 spill row
    G = Nb * Gn
    xp = jnp.pad(x.astype(jnp.bfloat16), ((0, 0), (1, 1), (1, 1), (0, 0)))
    idx = (jnp.arange(Gn) * hb)[:, None] + jnp.arange(R)[None, :]
    idx = jnp.minimum(idx.reshape(-1), H + 1)   # clip the spill row
    xg = jnp.take(xp, idx, axis=1).reshape(G, R * Wp, C)
    tn = cout if cout <= 256 else 256
    if G == 1 and cout // tn == 1 and cout >= 256:   # keep both TCs busy (v7x)
        tn = cout // 2
    call = _conv3x3_call(G, R, Wp, hb, Wo, C, cout, tn, bool(relu), out_dtype)
    out = call(xg, w9,
               scale.reshape(1, cout).astype(jnp.float32),
               shift.reshape(1, cout).astype(jnp.float32))
    return out.reshape(Nb, Ho, Wo, cout)


# --------------------------------------------------------------------------
# Conv / pooling wrappers (NHWC layout end-to-end)
# --------------------------------------------------------------------------
def conv_bn(x, conv, *, stride, padding, relu, residual=None,
            out_dtype=jnp.bfloat16):
    """Conv2d(no bias) + folded eval-mode BN (+residual add)(+ReLU)."""
    kh, kw = conv["ksize"]
    Nb, H, W, C = x.shape
    if kh == 3 and kw == 3 and stride == 1 and padding == 1 and residual is None:
        return _conv3x3_s1_bn(x, conv, relu=relu, out_dtype=out_dtype)
    wm, scale, shift = conv["wm"], conv["scale"], conv["shift"]
    if kh == 1 and kw == 1:                        # 1x1: pure GEMM, no im2col
        xs = x if stride == 1 else x[:, ::stride, ::stride, :]
        Ho, Wo = xs.shape[1], xs.shape[2]
        patches = xs.reshape(Nb * Ho * Wo, C)
    else:
        # TODO(synk): the 7x7 stem and the 3 stride-2 3x3 convs keep explicit
        # im2col (stride 2 keeps the expansion at ~9/4x, not 9x-18x).
        # Patch feature order is (Cin, kh, kw) and matches the wm row order;
        # verified numerically in _self_test against lax.conv_general_dilated.
        p = lax.conv_general_dilated_patches(
            x, (kh, kw), (stride, stride),
            [(padding, padding), (padding, padding)],
            dimension_numbers=("NHWC", "HWIO", "NHWC"))
        Ho, Wo = p.shape[1], p.shape[2]
        patches = p.reshape(Nb * Ho * Wo, p.shape[3])
        if conv["kpad"]:                           # conv1 stem: K 147 -> 256
            patches = jnp.pad(patches, ((0, 0), (0, conv["kpad"])))
    cout = wm.shape[1]
    res2 = None if residual is None else residual.reshape(Nb * Ho * Wo, cout)
    out = gemm_affine(patches, wm, scale, shift, relu=relu, residual=res2,
                      out_dtype=out_dtype)
    return out.reshape(Nb, Ho, Wo, cout)


def maxpool_3x3_s2(x):
    """3x3 stride-2 pad-1 max-pool (NHWC).  Zero padding == -inf padding only
    because the input is post-ReLU (>= 0)."""
    Nb, H, W, C = x.shape
    Ho, Wo = (H - 1) // 2 + 1, (W - 1) // 2 + 1
    xp = jnp.pad(x, ((0, 0), (1, 2 * Ho + 1 - H), (1, 2 * Wo + 1 - W), (0, 0)))
    xr = xp.reshape(Nb, Ho + 1, 2, Wo + 1, 2 * C)       # free parity reshape
    kernel = functools.partial(_maxpool_kernel, ho=Ho, wo=Wo, c=C,
                               rchunk=min(8, Ho))
    return pl.pallas_call(
        kernel,
        out_shape=jax.ShapeDtypeStruct((Nb, Ho, Wo, C), x.dtype),
        grid=(Nb,),
        in_specs=[pl.BlockSpec((1, Ho + 1, 2, Wo + 1, 2 * C),
                               lambda n: (n, 0, 0, 0, 0))],
        out_specs=pl.BlockSpec((1, Ho, Wo, C), lambda n: (n, 0, 0, 0)),
        compiler_params=pltpu.CompilerParams(
            dimension_semantics=("parallel",),
            vmem_limit_bytes=_vmem_limit_bytes()),
    )(xr)


def global_avg_pool(x):
    """[N,H,W,C] -> [N,C]; sublane reduction, lane-dense 2048-wide output."""
    Nb, H, W, C = x.shape
    x3 = x.reshape(Nb, H * W, C)
    out = pl.pallas_call(
        functools.partial(_gap_kernel, inv=1.0 / float(H * W)),
        out_shape=jax.ShapeDtypeStruct((Nb, 1, C), x.dtype),
        grid=(Nb,),
        in_specs=[pl.BlockSpec((1, H * W, C), lambda n: (n, 0, 0))],
        out_specs=pl.BlockSpec((1, 1, C), lambda n: (n, 0, 0)),
        compiler_params=pltpu.CompilerParams(
            dimension_semantics=("parallel",),
            vmem_limit_bytes=_vmem_limit_bytes()),
    )(x3)
    return out.reshape(Nb, C)


# --------------------------------------------------------------------------
# Deterministic synthetic ResNet-50 parameters (shapes match torchvision)
# --------------------------------------------------------------------------
class _ParamGen:
    def __init__(self, key):
        self._key = key
        self._i = 0

    def next_key(self):
        self._i += 1
        return jax.random.fold_in(self._key, self._i)

    def conv(self, cout, cin, kh, kw):
        fan_in = cin * kh * kw
        return jax.random.normal(self.next_key(), (cout, cin, kh, kw),
                                 jnp.float32) * ((2.0 / fan_in) ** 0.5)

    def bn(self, c):
        gamma = 1.0 + 0.1 * jax.random.normal(self.next_key(), (c,), jnp.float32)
        beta = 0.1 * jax.random.normal(self.next_key(), (c,), jnp.float32)
        mean = 0.1 * jax.random.normal(self.next_key(), (c,), jnp.float32)
        var = jnp.abs(1.0 + 0.1 * jax.random.normal(self.next_key(), (c,),
                                                    jnp.float32))
        scale = gamma / jnp.sqrt(var + 1e-5)
        shift = beta - mean * scale
        return scale, shift


def _make_conv_layer(g, cout, cin, kh, kw):
    w = g.conv(cout, cin, kh, kw)
    scale, shift = g.bn(cout)
    kdim = cin * kh * kw
    wm = w.reshape(cout, kdim).T                    # rows ordered (cin, kh, kw)
    kpad = 256 - kdim if kdim == 147 else 0         # conv1 stem: pad K to 256
    if kpad:
        wm = jnp.pad(wm, ((0, kpad), (0, 0)))
    layer = {"w": w, "wm": wm.astype(jnp.bfloat16), "scale": scale,
             "shift": shift, "ksize": (kh, kw), "kpad": kpad}
    if kh == 3 and kw == 3:                         # per-tap slabs [9, Cin, Cout]
        layer["w9"] = jnp.transpose(w, (2, 3, 1, 0)).reshape(
            9, cin, cout).astype(jnp.bfloat16)
    return layer


def init_params(key, embed_size):
    # TODO(synk): pretrained ImageNet weights cannot be loaded here; parameters
    # are deterministic synthetic values with the exact torchvision shapes.
    # Frozen backbone: eval-mode BatchNorm folded into a per-channel affine.
    g = _ParamGen(key)
    params = {"conv1": _make_conv_layer(g, 64, 3, 7, 7)}
    layers = []
    in_c = 64
    for width, n_blocks, first_stride in ((64, 3, 1), (128, 4, 2),
                                          (256, 6, 2), (512, 3, 2)):
        blocks = []
        for b in range(n_blocks):
            stride = first_stride if b == 0 else 1
            blk = {
                "conv1": _make_conv_layer(g, width, in_c, 1, 1),
                "conv2": _make_conv_layer(g, width, width, 3, 3),
                "conv3": _make_conv_layer(g, width * 4, width, 1, 1),
                "stride": stride,
            }
            if stride != 1 or in_c != width * 4:
                blk["downsample"] = _make_conv_layer(g, width * 4, in_c, 1, 1)
            in_c = width * 4
            blocks.append(blk)
        layers.append(blocks)
    params["layers"] = layers
    bound = 1.0 / (2048 ** 0.5)                     # nn.Linear default-ish init
    embed_w = jax.random.uniform(g.next_key(), (embed_size, 2048),
                                 jnp.float32, -bound, bound)
    params["embed_wm"] = embed_w.T.astype(jnp.bfloat16)    # [2048, embed]
    params["embed_b"] = jax.random.uniform(g.next_key(), (embed_size,),
                                           jnp.float32, -bound, bound)
    return params


# --------------------------------------------------------------------------
# Forward pass:  features = embed(flatten(resnet(images)))
# --------------------------------------------------------------------------
def _bottleneck(x, blk):
    stride = blk["stride"]
    out = conv_bn(x, blk["conv1"], stride=1, padding=0, relu=True)
    out = conv_bn(out, blk["conv2"], stride=stride, padding=1, relu=True)
    if "downsample" in blk:
        identity = conv_bn(x, blk["downsample"], stride=stride, padding=0,
                           relu=False)
    else:
        identity = x
    # conv3 + BN + residual add + ReLU fused into one Pallas GEMM epilogue.
    return conv_bn(out, blk["conv3"], stride=1, padding=0, relu=True,
                   residual=identity)


def encoder_cnn_forward(params, images):
    # PyTorch NCHW f32 input -> channel-last bf16 (lane/MXU friendly layout).
    x = jnp.transpose(images, (0, 2, 3, 1)).astype(jnp.bfloat16)
    x = conv_bn(x, params["conv1"], stride=2, padding=3, relu=True)
    x = maxpool_3x3_s2(x)
    for blocks in params["layers"]:
        for blk in blocks:
            x = _bottleneck(x, blk)
    feats = global_avg_pool(x)                 # [N, 2048] == flatten (H=W=1)
    ones = jnp.ones((params["embed_wm"].shape[1],), jnp.float32)
    return gemm_affine(feats, params["embed_wm"], ones, params["embed_b"],
                       relu=False, out_dtype=jnp.float32)


# --------------------------------------------------------------------------
# Numerical self-test against XLA references (bf16 tolerances)
# --------------------------------------------------------------------------
def _conv_bn_ref(x, layer, *, stride, padding, relu, residual=None):
    xf = x.astype(jnp.bfloat16).astype(jnp.float32)
    wf = layer["w"].astype(jnp.bfloat16).astype(jnp.float32)
    rhs = jnp.transpose(wf, (2, 3, 1, 0))          # OIHW -> HWIO
    out = lax.conv_general_dilated(
        xf, rhs, (stride, stride), [(padding, padding), (padding, padding)],
        dimension_numbers=("NHWC", "HWIO", "NHWC"))
    out = out * layer["scale"] + layer["shift"]
    if residual is not None:
        out = out + residual.astype(jnp.float32)
    if relu:
        out = jnp.maximum(out, 0.0)
    return out


def _check(got, want, atol=6e-2, rtol=6e-2):
    assert got.shape == want.shape, (got.shape, want.shape)
    assert bool(jnp.allclose(got.astype(jnp.float32), want,
                             atol=atol, rtol=rtol))


def _self_test(key):
    g = _ParamGen(jax.random.fold_in(key, 7))
    x = jax.random.normal(jax.random.fold_in(key, 8), (2, 10, 10, 64),
                          jnp.float32).astype(jnp.bfloat16)
    l3 = _make_conv_layer(g, 64, 64, 3, 3)
    _check(conv_bn(x, l3, stride=1, padding=1, relu=True),       # implicit path
           _conv_bn_ref(x, l3, stride=1, padding=1, relu=True))
    _check(conv_bn(x, l3, stride=2, padding=1, relu=True),       # explicit path
           _conv_bn_ref(x, l3, stride=2, padding=1, relu=True))
    l1 = _make_conv_layer(g, 256, 64, 1, 1)
    res = jax.random.normal(jax.random.fold_in(key, 9), (2, 10, 10, 256),
                            jnp.float32).astype(jnp.bfloat16)
    _check(conv_bn(x, l1, stride=1, padding=0, relu=True, residual=res),
           _conv_bn_ref(x, l1, stride=1, padding=0, relu=True, residual=res))
    l7 = _make_conv_layer(g, 64, 3, 7, 7)
    x7 = jax.random.normal(jax.random.fold_in(key, 10), (2, 12, 12, 3),
                           jnp.float32).astype(jnp.bfloat16)
    _check(conv_bn(x7, l7, stride=2, padding=3, relu=True),      # stem + K pad
           _conv_bn_ref(x7, l7, stride=2, padding=3, relu=True))
    xm = jnp.abs(x)                                              # post-ReLU-like
    want = lax.reduce_window(xm.astype(jnp.float32), -jnp.inf, lax.max,
                             (1, 3, 3, 1), (1, 2, 2, 1),
                             [(0, 0), (1, 1), (1, 1), (0, 0)])
    _check(maxpool_3x3_s2(xm), want, atol=1e-5, rtol=1e-5)
    _check(global_avg_pool(xm),
           jnp.mean(xm.astype(jnp.float32), axis=(1, 2)), atol=1e-2, rtol=1e-2)


if __name__ == "__main__":
    key = jax.random.PRNGKey(0)
    _self_test(jax.random.fold_in(key, 3))
    embed_size = 32
    params = init_params(jax.random.fold_in(key, 1), embed_size)
    images = jax.random.normal(jax.random.fold_in(key, 2),
                               (2, 3, 32, 32), jnp.float32)   # NCHW like PyTorch
    feats = encoder_cnn_forward(params, images)
    feats = jax.block_until_ready(feats)
    assert feats.shape == (2, embed_size), feats.shape
    assert bool(jnp.all(jnp.isfinite(feats)))
    print("KERNEL_OK")
</pallas_src>

<mosaic_0001>
module attributes {stable_mosaic.version = 11 : i64} {
  func.func @_conv3x3_kernel(%arg0: i32, %arg1: i32, %arg2: memref<1x156x64xbf16, #tpu.memory_space<vmem>>, %arg3: memref<9x64x64xbf16, #tpu.memory_space<vmem>>, %arg4: memref<1x64xf32, #tpu.memory_space<vmem>>, %arg5: memref<1x64xf32, #tpu.memory_space<vmem>>, %arg6: memref<1x10x10x64xbf16, #tpu.memory_space<vmem>>, %arg7: memref<120x64xf32, #tpu.memory_space<vmem>>) attributes {dimension_semantics = [#tpu.dimension_semantics<parallel>, #tpu.dimension_semantics<parallel>], iteration_bounds = array<i64: 2, 1>, scalar_prefetch = 0 : i64, scratch_operands = 1 : i64, tpu.core_type = #tpu.core_type<tc>, window_params = [{transform_indices = @transform_0, window_bounds = array<i64: 1, 156, 64>}, {transform_indices = @transform_1, window_bounds = array<i64: 9, 64, 64>}, {transform_indices = @transform_2, window_bounds = array<i64: 1, 64>}, {transform_indices = @transform_3, window_bounds = array<i64: 1, 64>}, {transform_indices = @transform_4, window_bounds = array<i64: 1, 10, 10, 64>}]} {
    %c0 = arith.constant 0 : index
    %c0_0 = arith.constant 0 : index
    %c0_1 = arith.constant 0 : index
    %0 = vector.load %arg2[%c0, %c0_0, %c0_1] : memref<1x156x64xbf16, #tpu.memory_space<vmem>>, vector<1x120x64xbf16>
    %1 = vector.shape_cast %0 : vector<1x120x64xbf16> to vector<120x64xbf16>
    %c0_2 = arith.constant 0 : index
    %c0_3 = arith.constant 0 : index
    %c0_4 = arith.constant 0 : index
    %2 = vector.load %arg3[%c0_2, %c0_3, %c0_4] : memref<9x64x64xbf16, #tpu.memory_space<vmem>>, vector<1x64x64xbf16>
    %3 = vector.shape_cast %2 : vector<1x64x64xbf16> to vector<64x64xbf16>
    %cst = arith.constant dense<0.000000e+00> : vector<120x64xf32>
    %4 = tpu.matmul %1, %3, %cst {dimension_numbers = #tpu.dot_dimension_numbers<[1], [0], [0], [1], [0, 0, 1, 1], [], []>} : vector<120x64xbf16>, vector<64x64xbf16>, vector<120x64xf32> -> vector<120x64xf32>
    %c0_5 = arith.constant 0 : index
    %c0_6 = arith.constant 0 : index
    %5 = vector.load %arg7[%c0_5, %c0_6] : memref<120x64xf32, #tpu.memory_space<vmem>>, vector<120x64xf32>
    tpu.vector_store %arg7[%c0_5, %c0_6], %4 {strides = array<i32>} : memref<120x64xf32, #tpu.memory_space<vmem>>, vector<120x64xf32>,
    %c0_7 = arith.constant 0 : index
    %c1 = arith.constant 1 : index
    %c0_8 = arith.constant 0 : index
    %6 = vector.load %arg2[%c0_7, %c1, %c0_8] : memref<1x156x64xbf16, #tpu.memory_space<vmem>>, vector<1x120x64xbf16>
    %7 = vector.shape_cast %6 : vector<1x120x64xbf16> to vector<120x64xbf16>
    %c1_9 = arith.constant 1 : index
    %c0_10 = arith.constant 0 : index
    %c0_11 = arith.constant 0 : index
    %8 = vector.load %arg3[%c1_9, %c0_10, %c0_11] : memref<9x64x64xbf16, #tpu.memory_space<vmem>>, vector<1x64x64xbf16>
    %9 = vector.shape_cast %8 : vector<1x64x64xbf16> to vector<64x64xbf16>
    %cst_12 = arith.constant dense<0.000000e+00> : vector<120x64xf32>
    %10 = tpu.matmul %7, %9, %cst_12 {dimension_numbers = #tpu.dot_dimension_numbers<[1], [0], [0], [1], [0, 0, 1, 1], [], []>} : vector<120x64xbf16>, vector<64x64xbf16>, vector<120x64xf32> -> vector<120x64xf32>
    %c0_13 = arith.constant 0 : index
    %c0_14 = arith.constant 0 : index
    %11 = vector.load %arg7[%c0_13, %c0_14] : memref<120x64xf32, #tpu.memory_space<vmem>>, vector<120x64xf32>
    %12 = arith.addf %11, %10 : vector<120x64xf32>
    %c0_15 = arith.constant 0 : index
    %c0_16 = arith.constant 0 : index
    %13 = vector.load %arg7[%c0_15, %c0_16] : memref<120x64xf32, #tpu.memory_space<vmem>>, vector<120x64xf32>
    tpu.vector_store %arg7[%c0_15, %c0_16], %12 {strides = array<i32>} : memref<120x64xf32, #tpu.memory_space<vmem>>, vector<120x64xf32>,
    %c0_17 = arith.constant 0 : index
    %c2 = arith.constant 2 : index
    %c0_18 = arith.constant 0 : index
    %14 = vector.load %arg2[%c0_17, %c2, %c0_18] : memref<1x156x64xbf16, #tpu.memory_space<vmem>>, vector<1x120x64xbf16>
    %15 = vector.shape_cast %14 : vector<1x120x64xbf16> to vector<120x64xbf16>
    %c2_19 = arith.constant 2 : index
    %c0_20 = arith.constant 0 : index
    %c0_21 = arith.constant 0 : index
    %16 = vector.load %arg3[%c2_19, %c0_20, %c0_21] : memref<9x64x64xbf16, #tpu.memory_space<vmem>>, vector<1x64x64xbf16>
    %17 = vector.shape_cast %16 : vector<1x64x64xbf16> to vector<64x64xbf16>
    %cst_22 = arith.constant dense<0.000000e+00> : vector<120x64xf32>
    %18 = tpu.matmul %15, %17, %cst_22 {dimension_numbers = #tpu.dot_dimension_numbers<[1], [0], [0], [1], [0, 0, 1, 1], [], []>} : vector<120x64xbf16>, vector<64x64xbf16>, vector<120x64xf32> -> vector<120x64xf32>
    %c0_23 = arith.constant 0 : index
    %c0_24 = arith.constant 0 : index
    %19 = vector.load %arg7[%c0_23, %c0_24] : memref<120x64xf32, #tpu.memory_space<vmem>>, vector<120x64xf32>
    %20 = arith.addf %19, %18 : vector<120x64xf32>
    %c0_25 = arith.constant 0 : index
    %c0_26 = arith.constant 0 : index
    %21 = vector.load %arg7[%c0_25, %c0_26] : memref<120x64xf32, #tpu.memory_space<vmem>>, vector<120x64xf32>
    tpu.vector_store %arg7[%c0_25, %c0_26], %20 {strides = array<i32>} : memref<120x64xf32, #tpu.memory_space<vmem>>, vector<120x64xf32>,
    %c0_27 = arith.constant 0 : index
    %c12 = arith.constant 12 : index
    %c0_28 = arith.constant 0 : index
    %22 = vector.load %arg2[%c0_27, %c12, %c0_28] : memref<1x156x64xbf16, #tpu.memory_space<vmem>>, vector<1x120x64xbf16>
    %23 = vector.shape_cast %22 : vector<1x120x64xbf16> to vector<120x64xbf16>
    %c3 = arith.constant 3 : index
    %c0_29 = arith.constant 0 : index
    %c0_30 = arith.constant 0 : index
    %24 = vector.load %arg3[%c3, %c0_29, %c0_30] : memref<9x64x64xbf16, #tpu.memory_space<vmem>>, vector<1x64x64xbf16>
    %25 = vector.shape_cast %24 : vector<1x64x64xbf16> to vector<64x64xbf16>
    %cst_31 = arith.constant dense<0.000000e+00> : vector<120x64xf32>
    %26 = tpu.matmul %23, %25, %cst_31 {dimension_numbers = #tpu.dot_dimension_numbers<[1], [0], [0], [1], [0, 0, 1, 1], [], []>} : vector<120x64xbf16>, vector<64x64xbf16>, vector<120x64xf32> -> vector<120x64xf32>
    %c0_32 = arith.constant 0 : index
    %c0_33 = arith.constant 0 : index
    %27 = vector.load %arg7[%c0_32, %c0_33] : memref<120x64xf32, #tpu.memory_space<vmem>>, vector<120x64xf32>
    %28 = arith.addf %27, %26 : vector<120x64xf32>
    %c0_34 = arith.constant 0 : index
    %c0_35 = arith.constant 0 : index
    %29 = vector.load %arg7[%c0_34, %c0_35] : memref<120x64xf32, #tpu.memory_space<vmem>>, vector<120x64xf32>
    tpu.vector_store %arg7[%c0_34, %c0_35], %28 {strides = array<i32>} : memref<120x64xf32, #tpu.memory_space<vmem>>, vector<120x64xf32>,
    %c0_36 = arith.constant 0 : index
    %c13 = arith.constant 13 : index
    %c0_37 = arith.constant 0 : index
    %30 = vector.load %arg2[%c0_36, %c13, %c0_37] : memref<1x156x64xbf16, #tpu.memory_space<vmem>>, vector<1x120x64xbf16>
    %31 = vector.shape_cast %30 : vector<1x120x64xbf16> to vector<120x64xbf16>
    %c4 = arith.constant 4 : index
    %c0_38 = arith.constant 0 : index
    %c0_39 = arith.constant 0 : index
    %32 = vector.load %arg3[%c4, %c0_38, %c0_39] : memref<9x64x64xbf16, #tpu.memory_space<vmem>>, vector<1x64x64xbf16>
    %33 = vector.shape_cast %32 : vector<1x64x64xbf16> to vector<64x64xbf16>
    %cst_40 = arith.constant dense<0.000000e+00> : vector<120x64xf32>
    %34 = tpu.matmul %31, %33, %cst_40 {dimension_numbers = #tpu.dot_dimension_numbers<[1], [0], [0], [1], [0, 0, 1, 1], [], []>} : vector<120x64xbf16>, vector<64x64xbf16>, vector<120x64xf32> -> vector<120x64xf32>
    %c0_41 = arith.constant 0 : index
    %c0_42 = arith.constant 0 : index
    %35 = vector.load %arg7[%c0_41, %c0_42] : memref<120x64xf32, #tpu.memory_space<vmem>>, vector<120x64xf32>
    %36 = arith.addf %35, %34 : vector<120x64xf32>
    %c0_43 = arith.constant 0 : index
    %c0_44 = arith.constant 0 : index
    %37 = vector.load %arg7[%c0_43, %c0_44] : memref<120x64xf32, #tpu.memory_space<vmem>>, vector<120x64xf32>
    tpu.vector_store %arg7[%c0_43, %c0_44], %36 {strides = array<i32>} : memref<120x64xf32, #tpu.memory_space<vmem>>, vector<120x64xf32>,
    %c0_45 = arith.constant 0 : index
    %c14 = arith.constant 14 : index
    %c0_46 = arith.constant 0 : index
    %38 = vector.load %arg2[%c0_45, %c14, %c0_46] : memref<1x156x64xbf16, #tpu.memory_space<vmem>>, vector<1x120x64xbf16>
    %39 = vector.shape_cast %38 : vector<1x120x64xbf16> to vector<120x64xbf16>
    %c5 = arith.constant 5 : index
    %c0_47 = arith.constant 0 : index
    %c0_48 = arith.constant 0 : index
    %40 = vector.load %arg3[%c5, %c0_47, %c0_48] : memref<9x64x64xbf16, #tpu.memory_space<vmem>>, vector<1x64x64xbf16>
    %41 = vector.shape_cast %40 : vector<1x64x64xbf16> to vector<64x64xbf16>
    %cst_49 = arith.constant dense<0.000000e+00> : vector<120x64xf32>
    %42 = tpu.matmul %39, %41, %cst_49 {dimension_numbers = #tpu.dot_dimension_numbers<[1], [0], [0], [1], [0, 0, 1, 1], [], []>} : vector<120x64xbf16>, vector<64x64xbf16>, vector<120x64xf32> -> vector<120x64xf32>
    %c0_50 = arith.constant 0 : index
    %c0_51 = arith.constant 0 : index
    %43 = vector.load %arg7[%c0_50, %c0_51] : memref<120x64xf32, #tpu.memory_space<vmem>>, vector<120x64xf32>
    %44 = arith.addf %43, %42 : vector<120x64xf32>
    %c0_52 = arith.constant 0 : index
    %c0_53 = arith.constant 0 : index
    %45 = vector.load %arg7[%c0_52, %c0_53] : memref<120x64xf32, #tpu.memory_space<vmem>>, vector<120x64xf32>
    tpu.vector_store %arg7[%c0_52, %c0_53], %44 {strides = array<i32>} : memref<120x64xf32, #tpu.memory_space<vmem>>, vector<120x64xf32>,
    %c0_54 = arith.constant 0 : index
    %c24 = arith.constant 24 : index
    %c0_55 = arith.constant 0 : index
    %46 = vector.load %arg2[%c0_54, %c24, %c0_55] : memref<1x156x64xbf16, #tpu.memory_space<vmem>>, vector<1x120x64xbf16>
    %47 = vector.shape_cast %46 : vector<1x120x64xbf16> to vector<120x64xbf16>
    %c6 = arith.constant 6 : index
    %c0_56 = arith.constant 0 : index
    %c0_57 = arith.constant 0 : index
    %48 = vector.load %arg3[%c6, %c0_56, %c0_57] : memref<9x64x64xbf16, #tpu.memory_space<vmem>>, vector<1x64x64xbf16>
    %49 = vector.shape_cast %48 : vector<1x64x64xbf16> to vector<64x64xbf16>
    %cst_58 = arith.constant dense<0.000000e+00> : vector<120x64xf32>
    %50 = tpu.matmul %47, %49, %cst_58 {dimension_numbers = #tpu.dot_dimension_numbers<[1], [0], [0], [1], [0, 0, 1, 1], [], []>} : vector<120x64xbf16>, vector<64x64xbf16>, vector<120x64xf32> -> vector<120x64xf32>
    %c0_59 = arith.constant 0 : index
    %c0_60 = arith.constant 0 : index
    %51 = vector.load %arg7[%c0_59, %c0_60] : memref<120x64xf32, #tpu.memory_space<vmem>>, vector<120x64xf32>
    %52 = arith.addf %51, %50 : vector<120x64xf32>
    %c0_61 = arith.constant 0 : index
    %c0_62 = arith.constant 0 : index
    %53 = vector.load %arg7[%c0_61, %c0_62] : memref<120x64xf32, #tpu.memory_space<vmem>>, vector<120x64xf32>
    tpu.vector_store %arg7[%c0_61, %c0_62], %52 {strides = array<i32>} : memref<120x64xf32, #tpu.memory_space<vmem>>, vector<120x64xf32>,
    %c0_63 = arith.constant 0 : index
    %c25 = arith.constant 25 : index
    %c0_64 = arith.constant 0 : index
    %54 = vector.load %arg2[%c0_63, %c25, %c0_64] : memref<1x156x64xbf16, #tpu.memory_space<vmem>>, vector<1x120x64xbf16>
    %55 = vector.shape_cast %54 : vector<1x120x64xbf16> to vector<120x64xbf16>
    %c7 = arith.constant 7 : index
    %c0_65 = arith.constant 0 : index
    %c0_66 = arith.constant 0 : index
    %56 = vector.load %arg3[%c7, %c0_65, %c0_66] : memref<9x64x64xbf16, #tpu.memory_space<vmem>>, vector<1x64x64xbf16>
    %57 = vector.shape_cast %56 : vector<1x64x64xbf16> to vector<64x64xbf16>
    %cst_67 = arith.constant dense<0.000000e+00> : vector<120x64xf32>
    %58 = tpu.matmul %55, %57, %cst_67 {dimension_numbers = #tpu.dot_dimension_numbers<[1], [0], [0], [1], [0, 0, 1, 1], [], []>} : vector<120x64xbf16>, vector<64x64xbf16>, vector<120x64xf32> -> vector<120x64xf32>
    %c0_68 = arith.constant 0 : index
    %c0_69 = arith.constant 0 : index
    %59 = vector.load %arg7[%c0_68, %c0_69] : memref<120x64xf32, #tpu.memory_space<vmem>>, vector<120x64xf32>
    %60 = arith.addf %59, %58 : vector<120x64xf32>
    %c0_70 = arith.constant 0 : index
    %c0_71 = arith.constant 0 : index
    %61 = vector.load %arg7[%c0_70, %c0_71] : memref<120x64xf32, #tpu.memory_space<vmem>>, vector<120x64xf32>
    tpu.vector_store %arg7[%c0_70, %c0_71], %60 {strides = array<i32>} : memref<120x64xf32, #tpu.memory_space<vmem>>, vector<120x64xf32>,
    %c0_72 = arith.constant 0 : index
    %c26 = arith.constant 26 : index
    %c0_73 = arith.constant 0 : index
    %62 = vector.load %arg2[%c0_72, %c26, %c0_73] : memref<1x156x64xbf16, #tpu.memory_space<vmem>>, vector<1x120x64xbf16>
    %63 = vector.shape_cast %62 : vector<1x120x64xbf16> to vector<120x64xbf16>
    %c8 = arith.constant 8 : index
    %c0_74 = arith.constant 0 : index
    %c0_75 = arith.constant 0 : index
    %64 = vector.load %arg3[%c8, %c0_74, %c0_75] : memref<9x64x64xbf16, #tpu.memory_space<vmem>>, vector<1x64x64xbf16>
    %65 = vector.shape_cast %64 : vector<1x64x64xbf16> to vector<64x64xbf16>
    %cst_76 = arith.constant dense<0.000000e+00> : vector<120x64xf32>
    %66 = tpu.matmul %63, %65, %cst_76 {dimension_numbers = #tpu.dot_dimension_numbers<[1], [0], [0], [1], [0, 0, 1, 1], [], []>} : vector<120x64xbf16>, vector<64x64xbf16>, vector<120x64xf32> -> vector<120x64xf32>
    %c0_77 = arith.constant 0 : index
    %c0_78 = arith.constant 0 : index
    %67 = vector.load %arg7[%c0_77, %c0_78] : memref<120x64xf32, #tpu.memory_space<vmem>>, vector<120x64xf32>
    %68 = arith.addf %67, %66 : vector<120x64xf32>
    %c0_79 = arith.constant 0 : index
    %c0_80 = arith.constant 0 : index
    %69 = vector.load %arg7[%c0_79, %c0_80] : memref<120x64xf32, #tpu.memory_space<vmem>>, vector<120x64xf32>
    tpu.vector_store %arg7[%c0_79, %c0_80], %68 {strides = array<i32>} : memref<120x64xf32, #tpu.memory_space<vmem>>, vector<120x64xf32>,
    %c0_81 = arith.constant 0 : index
    %c0_82 = arith.constant 0 : index
    %70 = vector.load %arg4[%c0_81, %c0_82] : memref<1x64xf32, #tpu.memory_space<vmem>>, vector<1x64xf32>
    %c0_83 = arith.constant 0 : index
    %c0_84 = arith.constant 0 : index
    %71 = vector.load %arg5[%c0_83, %c0_84] : memref<1x64xf32, #tpu.memory_space<vmem>>, vector<1x64xf32>
    %c0_85 = arith.constant 0 : index
    %c0_86 = arith.constant 0 : index
    %72 = vector.load %arg7[%c0_85, %c0_86] : memref<120x64xf32, #tpu.memory_space<vmem>>, vector<10x64xf32>
    %73 = vector.broadcast %70 : vector<1x64xf32> to vector<10x64xf32>
    %74 = arith.mulf %72, %73 : vector<10x64xf32>
    %75 = vector.broadcast %71 : vector<1x64xf32> to vector<10x64xf32>
    %76 = arith.addf %74, %75 : vector<10x64xf32>
    %cst_87 = arith.constant 0.000000e+00 : f32
    %77 = vector.broadcast %cst_87 : f32 to vector<10x64xf32>
    %78 = arith.maximumf %76, %77 : vector<10x64xf32>
    %79 = arith.truncf %78 : vector<10x64xf32> to vector<10x64xbf16>
    %c0_88 = arith.constant 0 : index
    %c0_89 = arith.constant 0 : index
    %c0_90 = arith.constant 0 : index
    %c0_91 = arith.constant 0 : index
    %80 = vector.load %arg6[%c0_88, %c0_89, %c0_90, %c0_91] : memref<1x10x10x64xbf16, #tpu.memory_space<vmem>>, vector<1x1x10x64xbf16>
    %81 = vector.shape_cast %80 : vector<1x1x10x64xbf16> to vector<10x64xbf16>
    %82 = vector.shape_cast %79 : vector<10x64xbf16> to vector<1x1x10x64xbf16>
    tpu.vector_store %arg6[%c0_88, %c0_89, %c0_90, %c0_91], %82 {strides = array<i32>} : memref<1x10x10x64xbf16, #tpu.memory_space<vmem>>, vector<1x1x10x64xbf16>,
    %c12_92 = arith.constant 12 : index
    %c0_93 = arith.constant 0 : index
    %83 = vector.load %arg7[%c12_92, %c0_93] : memref<120x64xf32, #tpu.memory_space<vmem>>, vector<10x64xf32>
    %84 = vector.broadcast %70 : vector<1x64xf32> to vector<10x64xf32>
    %85 = arith.mulf %83, %84 : vector<10x64xf32>
    %86 = vector.broadcast %71 : vector<1x64xf32> to vector<10x64xf32>
    %87 = arith.addf %85, %86 : vector<10x64xf32>
    %cst_94 = arith.constant 0.000000e+00 : f32
    %88 = vector.broadcast %cst_94 : f32 to vector<10x64xf32>
    %89 = arith.maximumf %87, %88 : vector<10x64xf32>
    %90 = arith.truncf %89 : vector<10x64xf32> to vector<10x64xbf16>
    %c0_95 = arith.constant 0 : index
    %c1_96 = arith.constant 1 : index
    %c0_97 = arith.constant 0 : index
    %c0_98 = arith.constant 0 : index
    %91 = vector.load %arg6[%c0_95, %c1_96, %c0_97, %c0_98] : memref<1x10x10x64xbf16, #tpu.memory_space<vmem>>, vector<1x1x10x64xbf16>
    %92 = vector.shape_cast %91 : vector<1x1x10x64xbf16> to vector<10x64xbf16>
    %93 = vector.shape_cast %90 : vector<10x64xbf16> to vector<1x1x10x64xbf16>
    tpu.vector_store %arg6[%c0_95, %c1_96, %c0_97, %c0_98], %93 {strides = array<i32>} : memref<1x10x10x64xbf16, #tpu.memory_space<vmem>>, vector<1x1x10x64xbf16>,
    %c24_99 = arith.constant 24 : index
    %c0_100 = arith.constant 0 : index
    %94 = vector.load %arg7[%c24_99, %c0_100] : memref<120x64xf32, #tpu.memory_space<vmem>>, vector<10x64xf32>
    %95 = vector.broadcast %70 : vector<1x64xf32> to vector<10x64xf32>
    %96 = arith.mulf %94, %95 : vector<10x64xf32>
    %97 = vector.broadcast %71 : vector<1x64xf32> to vector<10x64xf32>
    %98 = arith.addf %96, %97 : vector<10x64xf32>
    %cst_101 = arith.constant 0.000000e+00 : f32
    %99 = vector.broadcast %cst_101 : f32 to vector<10x64xf32>
    %100 = arith.maximumf %98, %99 : vector<10x64xf32>
    %101 = arith.truncf %100 : vector<10x64xf32> to vector<10x64xbf16>
    %c0_102 = arith.constant 0 : index
    %c2_103 = arith.constant 2 : index
    %c0_104 = arith.constant 0 : index
    %c0_105 = arith.constant 0 : index
    %102 = vector.load %arg6[%c0_102, %c2_103, %c0_104, %c0_105] : memref<1x10x10x64xbf16, #tpu.memory_space<vmem>>, vector<1x1x10x64xbf16>
    %103 = vector.shape_cast %102 : vector<1x1x10x64xbf16> to vector<10x64xbf16>
    %104 = vector.shape_cast %101 : vector<10x64xbf16> to vector<1x1x10x64xbf16>
    tpu.vector_store %arg6[%c0_102, %c2_103, %c0_104, %c0_105], %104 {strides = array<i32>} : memref<1x10x10x64xbf16, #tpu.memory_space<vmem>>, vector<1x1x10x64xbf16>,
    %c36 = arith.constant 36 : index
    %c0_106 = arith.constant 0 : index
    %105 = vector.load %arg7[%c36, %c0_106] : memref<120x64xf32, #tpu.memory_space<vmem>>, vector<10x64xf32>
    %106 = vector.broadcast %70 : vector<1x64xf32> to vector<10x64xf32>
    %107 = arith.mulf %105, %106 : vector<10x64xf32>
    %108 = vector.broadcast %71 : vector<1x64xf32> to vector<10x64xf32>
    %109 = arith.addf %107, %108 : vector<10x64xf32>
    %cst_107 = arith.constant 0.000000e+00 : f32
    %110 = vector.broadcast %cst_107 : f32 to vector<10x64xf32>
    %111 = arith.maximumf %109, %110 : vector<10x64xf32>
    %112 = arith.truncf %111 : vector<10x64xf32> to vector<10x64xbf16>
    %c0_108 = arith.constant 0 : index
    %c3_109 = arith.constant 3 : index
    %c0_110 = arith.constant 0 : index
    %c0_111 = arith.constant 0 : index
    %113 = vector.load %arg6[%c0_108, %c3_109, %c0_110, %c0_111] : memref<1x10x10x64xbf16, #tpu.memory_space<vmem>>, vector<1x1x10x64xbf16>
    %114 = vector.shape_cast %113 : vector<1x1x10x64xbf16> to vector<10x64xbf16>
    %115 = vector.shape_cast %112 : vector<10x64xbf16> to vector<1x1x10x64xbf16>
    tpu.vector_store %arg6[%c0_108, %c3_109, %c0_110, %c0_111], %115 {strides = array<i32>} : memref<1x10x10x64xbf16, #tpu.memory_space<vmem>>, vector<1x1x10x64xbf16>,
    %c48 = arith.constant 48 : index
    %c0_112 = arith.constant 0 : index
    %116 = vector.load %arg7[%c48, %c0_112] : memref<120x64xf32, #tpu.memory_space<vmem>>, vector<10x64xf32>
    %117 = vector.broadcast %70 : vector<1x64xf32> to vector<10x64xf32>
    %118 = arith.mulf %116, %117 : vector<10x64xf32>
    %119 = vector.broadcast %71 : vector<1x64xf32> to vector<10x64xf32>
    %120 = arith.addf %118, %119 : vector<10x64xf32>
    %cst_113 = arith.constant 0.000000e+00 : f32
    %121 = vector.broadcast %cst_113 : f32 to vector<10x64xf32>
    %122 = arith.maximumf %120, %121 : vector<10x64xf32>
    %123 = arith.truncf %122 : vector<10x64xf32> to vector<10x64xbf16>
    %c0_114 = arith.constant 0 : index
    %c4_115 = arith.constant 4 : index
    %c0_116 = arith.constant 0 : index
    %c0_117 = arith.constant 0 : index
    %124 = vector.load %arg6[%c0_114, %c4_115, %c0_116, %c0_117] : memref<1x10x10x64xbf16, #tpu.memory_space<vmem>>, vector<1x1x10x64xbf16>
    %125 = vector.shape_cast %124 : vector<1x1x10x64xbf16> to vector<10x64xbf16>
    %126 = vector.shape_cast %123 : vector<10x64xbf16> to vector<1x1x10x64xbf16>
    tpu.vector_store %arg6[%c0_114, %c4_115, %c0_116, %c0_117], %126 {strides = array<i32>} : memref<1x10x10x64xbf16, #tpu.memory_space<vmem>>, vector<1x1x10x64xbf16>,
    %c60 = arith.constant 60 : index
    %c0_118 = arith.constant 0 : index
    %127 = vector.load %arg7[%c60, %c0_118] : memref<120x64xf32, #tpu.memory_space<vmem>>, vector<10x64xf32>
    %128 = vector.broadcast %70 : vector<1x64xf32> to vector<10x64xf32>
    %129 = arith.mulf %127, %128 : vector<10x64xf32>
    %130 = vector.broadcast %71 : vector<1x64xf32> to vector<10x64xf32>
    %131 = arith.addf %129, %130 : vector<10x64xf32>
    %cst_119 = arith.constant 0.000000e+00 : f32
    %132 = vector.broadcast %cst_119 : f32 to vector<10x64xf32>
    %133 = arith.maximumf %131, %132 : vector<10x64xf32>
    %134 = arith.truncf %133 : vector<10x64xf32> to vector<10x64xbf16>
    %c0_120 = arith.constant 0 : index
    %c5_121 = arith.constant 5 : index
    %c0_122 = arith.constant 0 : index
    %c0_123 = arith.constant 0 : index
    %135 = vector.load %arg6[%c0_120, %c5_121, %c0_122, %c0_123] : memref<1x10x10x64xbf16, #tpu.memory_space<vmem>>, vector<1x1x10x64xbf16>
    %136 = vector.shape_cast %135 : vector<1x1x10x64xbf16> to vector<10x64xbf16>
    %137 = vector.shape_cast %134 : vector<10x64xbf16> to vector<1x1x10x64xbf16>
    tpu.vector_store %arg6[%c0_120, %c5_121, %c0_122, %c0_123], %137 {strides = array<i32>} : memref<1x10x10x64xbf16, #tpu.memory_space<vmem>>, vector<1x1x10x64xbf16>,
    %c72 = arith.constant 72 : index
    %c0_124 = arith.constant 0 : index
    %138 = vector.load %arg7[%c72, %c0_124] : memref<120x64xf32, #tpu.memory_space<vmem>>, vector<10x64xf32>
    %139 = vector.broadcast %70 : vector<1x64xf32> to vector<10x64xf32>
    %140 = arith.mulf %138, %139 : vector<10x64xf32>
    %141 = vector.broadcast %71 : vector<1x64xf32> to vector<10x64xf32>
    %142 = arith.addf %140, %141 : vector<10x64xf32>
    %cst_125 = arith.constant 0.000000e+00 : f32
    %143 = vector.broadcast %cst_125 : f32 to vector<10x64xf32>
    %144 = arith.maximumf %142, %143 : vector<10x64xf32>
    %145 = arith.truncf %144 : vector<10x64xf32> to vector<10x64xbf16>
    %c0_126 = arith.constant 0 : index
    %c6_127 = arith.constant 6 : index
    %c0_128 = arith.constant 0 : index
    %c0_129 = arith.constant 0 : index
    %146 = vector.load %arg6[%c0_126, %c6_127, %c0_128, %c0_129] : memref<1x10x10x64xbf16, #tpu.memory_space<vmem>>, vector<1x1x10x64xbf16>
    %147 = vector.shape_cast %146 : vector<1x1x10x64xbf16> to vector<10x64xbf16>
    %148 = vector.shape_cast %145 : vector<10x64xbf16> to vector<1x1x10x64xbf16>
    tpu.vector_store %arg6[%c0_126, %c6_127, %c0_128, %c0_129], %148 {strides = array<i32>} : memref<1x10x10x64xbf16, #tpu.memory_space<vmem>>, vector<1x1x10x64xbf16>,
    %c84 = arith.constant 84 : index
    %c0_130 = arith.constant 0 : index
    %149 = vector.load %arg7[%c84, %c0_130] : memref<120x64xf32, #tpu.memory_space<vmem>>, vector<10x64xf32>
    %150 = vector.broadcast %70 : vector<1x64xf32> to vector<10x64xf32>
    %151 = arith.mulf %149, %150 : vector<10x64xf32>
    %152 = vector.broadcast %71 : vector<1x64xf32> to vector<10x64xf32>
    %153 = arith.addf %151, %152 : vector<10x64xf32>
    %cst_131 = arith.constant 0.000000e+00 : f32
    %154 = vector.broadcast %cst_131 : f32 to vector<10x64xf32>
    %155 = arith.maximumf %153, %154 : vector<10x64xf32>
    %156 = arith.truncf %155 : vector<10x64xf32> to vector<10x64xbf16>
    %c0_132 = arith.constant 0 : index
    %c7_133 = arith.constant 7 : index
    %c0_134 = arith.constant 0 : index
    %c0_135 = arith.constant 0 : index
    %157 = vector.load %arg6[%c0_132, %c7_133, %c0_134, %c0_135] : memref<1x10x10x64xbf16, #tpu.memory_space<vmem>>, vector<1x1x10x64xbf16>
    %158 = vector.shape_cast %157 : vector<1x1x10x64xbf16> to vector<10x64xbf16>
    %159 = vector.shape_cast %156 : vector<10x64xbf16> to vector<1x1x10x64xbf16>
    tpu.vector_store %arg6[%c0_132, %c7_133, %c0_134, %c0_135], %159 {strides = array<i32>} : memref<1x10x10x64xbf16, #tpu.memory_space<vmem>>, vector<1x1x10x64xbf16>,
    %c96 = arith.constant 96 : index
    %c0_136 = arith.constant 0 : index
    %160 = vector.load %arg7[%c96, %c0_136] : memref<120x64xf32, #tpu.memory_space<vmem>>, vector<10x64xf32>
    %161 = vector.broadcast %70 : vector<1x64xf32> to vector<10x64xf32>
    %162 = arith.mulf %160, %161 : vector<10x64xf32>
    %163 = vector.broadcast %71 : vector<1x64xf32> to vector<10x64xf32>
    %164 = arith.addf %162, %163 : vector<10x64xf32>
    %cst_137 = arith.constant 0.000000e+00 : f32
    %165 = vector.broadcast %cst_137 : f32 to vector<10x64xf32>
    %166 = arith.maximumf %164, %165 : vector<10x64xf32>
    %167 = arith.truncf %166 : vector<10x64xf32> to vector<10x64xbf16>
    %c0_138 = arith.constant 0 : index
    %c8_139 = arith.constant 8 : index
    %c0_140 = arith.constant 0 : index
    %c0_141 = arith.constant 0 : index
    %168 = vector.load %arg6[%c0_138, %c8_139, %c0_140, %c0_141] : memref<1x10x10x64xbf16, #tpu.memory_space<vmem>>, vector<1x1x10x64xbf16>
    %169 = vector.shape_cast %168 : vector<1x1x10x64xbf16> to vector<10x64xbf16>
    %170 = vector.shape_cast %167 : vector<10x64xbf16> to vector<1x1x10x64xbf16>
    tpu.vector_store %arg6[%c0_138, %c8_139, %c0_140, %c0_141], %170 {strides = array<i32>} : memref<1x10x10x64xbf16, #tpu.memory_space<vmem>>, vector<1x1x10x64xbf16>,
    %c108 = arith.constant 108 : index
    %c0_142 = arith.constant 0 : index
    %171 = vector.load %arg7[%c108, %c0_142] : memref<120x64xf32, #tpu.memory_space<vmem>>, vector<10x64xf32>
    %172 = vector.broadcast %70 : vector<1x64xf32> to vector<10x64xf32>
    %173 = arith.mulf %171, %172 : vector<10x64xf32>
    %174 = vector.broadcast %71 : vector<1x64xf32> to vector<10x64xf32>
    %175 = arith.addf %173, %174 : vector<10x64xf32>
    %cst_143 = arith.constant 0.000000e+00 : f32
    %176 = vector.broadcast %cst_143 : f32 to vector<10x64xf32>
    %177 = arith.maximumf %175, %176 : vector<10x64xf32>
    %178 = arith.truncf %177 : vector<10x64xf32> to vector<10x64xbf16>
    %c0_144 = arith.constant 0 : index
    %c9 = arith.constant 9 : index
    %c0_145 = arith.constant 0 : index
    %c0_146 = arith.constant 0 : index
    %179 = vector.load %arg6[%c0_144, %c9, %c0_145, %c0_146] : memref<1x10x10x64xbf16, #tpu.memory_space<vmem>>, vector<1x1x10x64xbf16>
    %180 = vector.shape_cast %179 : vector<1x1x10x64xbf16> to vector<10x64xbf16>
    %181 = vector.shape_cast %178 : vector<10x64xbf16> to vector<1x1x10x64xbf16>
    tpu.vector_store %arg6[%c0_144, %c9, %c0_145, %c0_146], %181 {strides = array<i32>} : memref<1x10x10x64xbf16, #tpu.memory_space<vmem>>, vector<1x1x10x64xbf16>,
    return
  }
  func.func @transform_0(%arg0: i32, %arg1: i32) -> (i32, i32, i32) {
    %c0_i32 = arith.constant 0 : i32
    %c0_i32_0 = arith.constant 0 : i32
    %c0_i32_1 = arith.constant 0 : i32
    return %arg0, %c0_i32, %c0_i32_0 : i32, i32, i32
  }
  func.func @transform_1(%arg0: i32, %arg1: i32) -> (i32, i32, i32) {
    %c0_i32 = arith.constant 0 : i32
    %c0_i32_0 = arith.constant 0 : i32
    %c0_i32_1 = arith.constant 0 : i32
    return %c0_i32, %c0_i32_0, %arg1 : i32, i32, i32
  }
  func.func @transform_2(%arg0: i32, %arg1: i32) -> (i32, i32) {
    %c0_i32 = arith.constant 0 : i32
    %c0_i32_0 = arith.constant 0 : i32
    return %c0_i32, %arg1 : i32, i32
  }
  func.func @transform_3(%arg0: i32, %arg1: i32) -> (i32, i32) {
    %c0_i32 = arith.constant 0 : i32
    %c0_i32_0 = arith.constant 0 : i32
    return %c0_i32, %arg1 : i32, i32
  }
  func.func @transform_4(%arg0: i32, %arg1: i32) -> (i32, i32, i32, i32) {
    %c0_i32 = arith.constant 0 : i32
    %c0_i32_0 = arith.constant 0 : i32
    %c0_i32_1 = arith.constant 0 : i32
    return %arg0, %c0_i32, %c0_i32_0, %arg1 : i32, i32, i32, i32
  }
}

</mosaic_0001>

<llo_original>
// kernel: tpu_custom_call.1
$region0: #{tpu_custom_call.1}
  #allocation0 [shape = 'u32[]', space=smem, size = 0x4, offset = 0x4, fixed_abs, tag = 'smem constant byte address 0x4 - core index']
  #allocation1 [shape = 'u32[144,128]{1,0:T(1,128)}', space=vmem, size = 0x12000, scoped, tag = 'internal scratch']
  #allocation2 [shape = 'f32[120,64]{1,0:T(8,128)}', space=vmem, size = 0xf000, scoped, tag = 'scratch operand']
  %s0 = inlined_call_operand.vmem [shape: bf16[2,156,64], index: 0, kind: input, shape index: {}]
  %s1 = inlined_call_operand.vmem [shape: bf16[9,64,64], index: 1, kind: input, shape index: {}]
  %s2 = inlined_call_operand.vmem [shape: f32[1,64], index: 2, kind: input, shape index: {}]
  %s3 = inlined_call_operand.vmem [shape: f32[1,64], index: 3, kind: input, shape index: {}]
  %s4 = inlined_call_operand.vmem [shape: bf16[2,10,10,64], index: 4, kind: output, shape index: {}]
  %s5 = sld [smem:[#allocation0]]
  $region49: #{tpu_custom_call.1} parent=0
    _
  %s7 = ssub.s32 1, %s5
  %s8 = scalar_select 0, %s7, %s5
  loop: start=0, step=1, limit=4
  $region2: #{tpu_custom_call.1} parent=0 // loop_pre_header
    _
  $region3: #{tpu_custom_call.1} parent=0 // loop_header
    %s10 = sphi 0, %s14
    %p11 = scmp.ge.s32.totalorder %s10, 4
    %s17 = sphi 0, %s29
    %s18 = sphi 0, %s25
    %s19 = sphi 0, %s17
    %s20 = sphi 0, %s18
    %s21 = sphi 0, %s19
    %s22 = sphi 0, %s20
    %s32 = sphi 0, %s34
    %s35 = sphi 0, %s32
    %s36 = sphi 0, %s35
    %s52 = sphi 0, %s36
    %s58 = sphi 0, %s60
    %s61 = sphi 0, %s58
    %s62 = sphi 0, %s61
    %s78 = sphi 0, %s62
    %s84 = sphi 0, %s86
    %s87 = sphi 0, %s84
    %s88 = sphi 0, %s87
    %s104 = sphi 0, %s88
    %s110 = sphi 0, %s112
    %s113 = sphi 0, %s110
    %s114 = sphi 0, %s113
    %s130 = sphi 0, %s114
    %s138 = sphi 0, %s140
    %s141 = sphi 0, %s138
    %s142 = sphi 0, %s141
    %s158 = sphi 0, %s142
  $region4: #{tpu_custom_call.1} parent=0 // loop_header_branch
    %13 = sbr.rel (%p11) target = $region8
  $region5: #{tpu_custom_call.1} parent=0 // loop_body
    %s15 = ssub.s32 %s10, 1
    %s16 = ssub.s32 %s10, 2
    %s23 = sadd.s32 1, %s18
    %p24 = scmp.ge.s32.totalorder %s23, 1
    %s25 = scalar_select %p24, 0, %s23
    %s26 = sadd.s32 1, %s17
    %s27 = scalar_select %p24, %s26, %s17
    %p28 = scmp.ge.s32.totalorder %s27, 2
    %s29 = scalar_select %p28, 0, %s27
    %s30 = ssub.s32 %s17, %s29
    %p31 = scmp.eq.s32.totalorder %s30, 0
    %s33 = sadd.s32 %s32, 1
    %s34 = scalar_select %p31, %s32, %s33
    %p37 = pneg %p31
    %p38 = scmp.eq.s32.totalorder %s10, 1
    %p39 = por %p37, %p38
    %p40 = scmp.ne.s32.totalorder %s32, %s35
    %p41 = scmp.eq.s32.totalorder %s10, 0
    %p42 = por %p40, %p41
    %p43 = scmp.ne.s32.totalorder %s32, %s35
    %p44 = scmp.eq.s32.totalorder %s15, 1
    %p45 = por %p43, %p44
    %p46 = scmp.ne.s32.totalorder %s35, %s36
    %p47 = scmp.eq.s32.totalorder %s15, 0
    %p48 = por %p46, %p47
    %p49 = scmp.ne.s32.totalorder %s35, %s36
    %p50 = scmp.eq.s32.totalorder %s16, 1
    %p51 = por %p49, %p50
    %p53 = scmp.ne.s32.totalorder %s36, %s52
    %p54 = scmp.eq.s32.totalorder %s16, 0
    %p55 = por %p53, %p54
    %s56 = ssub.s32 %s18, %s25
    %p57 = scmp.eq.s32.totalorder %s56, 0
    %s59 = sadd.s32 %s58, 1
    %s60 = scalar_select %p57, %s58, %s59
    %p63 = pneg %p57
    %p64 = scmp.eq.s32.totalorder %s10, 1
    %p65 = por %p63, %p64
    %p66 = scmp.ne.s32.totalorder %s58, %s61
    %p67 = scmp.eq.s32.totalorder %s10, 0
    %p68 = por %p66, %p67
    %p69 = scmp.ne.s32.totalorder %s58, %s61
    %p70 = scmp.eq.s32.totalorder %s15, 1
    %p71 = por %p69, %p70
    %p72 = scmp.ne.s32.totalorder %s61, %s62
    %p73 = scmp.eq.s32.totalorder %s15, 0
    %p74 = por %p72, %p73
    %p75 = scmp.ne.s32.totalorder %s61, %s62
    %p76 = scmp.eq.s32.totalorder %s16, 1
    %p77 = por %p75, %p76
    %p79 = scmp.ne.s32.totalorder %s62, %s78
    %p80 = scmp.eq.s32.totalorder %s16, 0
    %p81 = por %p79, %p80
    %s82 = ssub.s32 %s18, %s25
    %p83 = scmp.eq.s32.totalorder %s82, 0
    %s85 = sadd.s32 %s84, 1
    %s86 = scalar_select %p83, %s84, %s85
    %p89 = pneg %p83
    %p90 = scmp.eq.s32.totalorder %s10, 1
    %p91 = por %p89, %p90
    %p92 = scmp.ne.s32.totalorder %s84, %s87
    %p93 = scmp.eq.s32.totalorder %s10, 0
    %p94 = por %p92, %p93
    %p95 = scmp.ne.s32.totalorder %s84, %s87
    %p96 = scmp.eq.s32.totalorder %s15, 1
    %p97 = por %p95, %p96
    %p98 = scmp.ne.s32.totalorder %s87, %s88
    %p99 = scmp.eq.s32.totalorder %s15, 0
    %p100 = por %p98, %p99
    %p101 = scmp.ne.s32.totalorder %s87, %s88
    %p102 = scmp.eq.s32.totalorder %s16, 1
    %p103 = por %p101, %p102
    %p105 = scmp.ne.s32.totalorder %s88, %s104
    %p106 = scmp.eq.s32.totalorder %s16, 0
    %p107 = por %p105, %p106
    %s108 = ssub.s32 %s18, %s25
    %p109 = scmp.eq.s32.totalorder %s108, 0
    %s111 = sadd.s32 %s110, 1
    %s112 = scalar_select %p109, %s110, %s111
    %p115 = pneg %p109
    %p116 = scmp.eq.s32.totalorder %s10, 1
    %p117 = por %p115, %p116
    %p118 = scmp.ne.s32.totalorder %s110, %s113
    %p119 = scmp.eq.s32.totalorder %s10, 0
    %p120 = por %p118, %p119
    %p121 = scmp.ne.s32.totalorder %s110, %s113
    %p122 = scmp.eq.s32.totalorder %s15, 1
    %p123 = por %p121, %p122
    %p124 = scmp.ne.s32.totalorder %s113, %s114
    %p125 = scmp.eq.s32.totalorder %s15, 0
    %p126 = por %p124, %p125
    %p127 = scmp.ne.s32.totalorder %s113, %s114
    %p128 = scmp.eq.s32.totalorder %s16, 1
    %p129 = por %p127, %p128
    %p131 = scmp.ne.s32.totalorder %s114, %s130
    %p132 = scmp.eq.s32.totalorder %s16, 0
    %p133 = por %p131, %p132
    %s134 = ssub.s32 %s17, %s29
    %s135 = ssub.s32 %s18, %s25
    %s136 = sor.u32 %s134, %s135
    %p137 = scmp.eq.s32.totalorder %s136, 0
    %s139 = sadd.s32 %s138, 1
    %s140 = scalar_select %p137, %s138, %s139
    %p143 = pneg %p137
    %p144 = scmp.eq.s32.totalorder %s10, 1
    %p145 = por %p143, %p144
    %p146 = scmp.ne.s32.totalorder %s138, %s141
    %p147 = scmp.eq.s32.totalorder %s10, 0
    %p148 = por %p146, %p147
    %p149 = scmp.ne.s32.totalorder %s138, %s141
    %p150 = scmp.eq.s32.totalorder %s15, 1
    %p151 = por %p149, %p150
    %p152 = scmp.ne.s32.totalorder %s141, %s142
    %p153 = scmp.eq.s32.totalorder %s15, 0
    %p154 = por %p152, %p153
    %p155 = scmp.ne.s32.totalorder %s141, %s142
    %p156 = scmp.eq.s32.totalorder %s16, 1
    %p157 = por %p155, %p156
    %p159 = scmp.ne.s32.totalorder %s142, %s158
    %p160 = scmp.eq.s32.totalorder %s16, 0
    %p161 = por %p159, %p160
    %p162 = scmp.le.s32.totalorder 1, %s10
    %p163 = scmp.lt.s32.totalorder %s10, 3
    %p164 = pnand %p162, %p163
    %p165 = pneg %p164
    // Predicated region
    $region9: #{tpu_custom_call.1} parent=5 // pred_check
      _
    $region10: #{tpu_custom_call.1} parent=5 // pred_check_branch
      %167 = sbr.rel (%p164) target = $region12
    $region11: #{tpu_custom_call.1} parent=5 // pred_region
      %s168 = ssub.s32 %s10, 1
      // Predicated region
      $region13: #{tpu_custom_call.1} parent=11 // pred_check
        %p169 = pneg %p74
      $region14: #{tpu_custom_call.1} parent=11 // pred_check_branch
        %171 = sbr.rel (%p169) target = $region16
      $region15: #{tpu_custom_call.1} parent=11 // pred_region
        %p172 = scmp.lt.s32.totalorder %s20, 0
        %s173 = scalar_select %p172, %s20, 0
        %s174 = smul.addr %s173, 4
        %s175 = scalar_lea.vmem %s1, %s174
      $region16: #{tpu_custom_call.1} parent=11 // pred_fallthru
        _
      // Predicated region
      $region17: #{tpu_custom_call.1} parent=11 // pred_check
        %p176 = pneg %p100
      $region18: #{tpu_custom_call.1} parent=11 // pred_check_branch
        %178 = sbr.rel (%p176) target = $region20
      $region19: #{tpu_custom_call.1} parent=11 // pred_region
        %p179 = scmp.lt.s32.totalorder %s20, 0
        %s180 = scalar_select %p179, %s20, 0
        %s181 = scalar_lea.vmem %s2, %s180
      $region20: #{tpu_custom_call.1} parent=11 // pred_fallthru
        _
      // Predicated region
      $region21: #{tpu_custom_call.1} parent=11 // pred_check
        %p182 = pneg %p126
      $region22: #{tpu_custom_call.1} parent=11 // pred_check_branch
        %184 = sbr.rel (%p182) target = $region24
      $region23: #{tpu_custom_call.1} parent=11 // pred_region
        %p185 = scmp.lt.s32.totalorder %s20, 0
        %s186 = scalar_select %p185, %s20, 0
        %s187 = scalar_lea.vmem %s3, %s186
      $region24: #{tpu_custom_call.1} parent=11 // pred_fallthru
        _
    $region12: #{tpu_custom_call.1} parent=5 // pred_fallthru
      _
    %p188 = scmp.lt.s32.totalorder %s10, 2
    // Predicated region
    $region25: #{tpu_custom_call.1} parent=5 // pred_check
      %p189 = pneg %p188
    $region26: #{tpu_custom_call.1} parent=5 // pred_check_branch
      %191 = sbr.rel (%p189) target = $region28
    $region27: #{tpu_custom_call.1} parent=5 // pred_region
      // Predicated region
      $region29: #{tpu_custom_call.1} parent=27 // pred_check
        %p192 = pneg %p42
      $region30: #{tpu_custom_call.1} parent=27 // pred_check_branch
        %194 = sbr.rel (%p192) target = $region32
      $region31: #{tpu_custom_call.1} parent=27 // pred_region
        %p195 = scmp.lt.s32.totalorder %s17, 1
        %s196 = scalar_select %p195, %s17, 1
        %s197 = smul.addr %s196, 20
        %s198 = smul.addr %s197, 4
        %s199 = scalar_lea.vmem %s0, %s198
      $region32: #{tpu_custom_call.1} parent=27 // pred_fallthru
        _
    $region28: #{tpu_custom_call.1} parent=5 // pred_fallthru
      _
    %p200 = scmp.le.s32.totalorder 1, %s10
    %p201 = scmp.lt.s32.totalorder %s10, 3
    %p202 = pnand %p200, %p201
    %p203 = pneg %p202
    // Predicated region
    $region33: #{tpu_custom_call.1} parent=5 // pred_check
      _
    $region34: #{tpu_custom_call.1} parent=5 // pred_check_branch
      %205 = sbr.rel (%p202) target = $region36
    $region35: #{tpu_custom_call.1} parent=5 // pred_region
      %s206 = ssub.s32 %s10, 1
      %p207 = scmp.lt.s32.totalorder %s19, 1
      %s208 = scalar_select %p207, %s19, 1
      %s209 = smul.addr %s208, 20
      %s210 = smul.addr %s209, 4
      %s211 = scalar_lea.vmem %s0, %s210
      %p212 = pneg %p48
      %p213 = pneg %p45
      %p214 = scmp.lt.s32.totalorder %s20, 0
      %s215 = scalar_select %p214, %s20, 0
      %s216 = smul.addr %s215, 4
      %s217 = scalar_lea.vmem %s1, %s216
      %p218 = pneg %p74
      %p219 = pneg %p71
      %p220 = scmp.lt.s32.totalorder %s20, 0
      %s221 = scalar_select %p220, %s20, 0
      %s222 = scalar_lea.vmem %s2, %s221
      %p223 = pneg %p100
      %p224 = pneg %p97
      %p225 = scmp.lt.s32.totalorder %s20, 0
      %s226 = scalar_select %p225, %s20, 0
      %s227 = scalar_lea.vmem %s3, %s226
      %p228 = pneg %p126
      %p229 = pneg %p123
      %p230 = pneg %p154
      %p231 = pneg %p151
      %p232 = scmp.lt.s32.totalorder %s19, 1
      %s233 = scalar_select %p232, %s19, 1
      %p234 = scmp.lt.s32.totalorder %s20, 0
      %s235 = scalar_select %p234, %s20, 0
      %s236 = smul.addr %s233, 20
      %s237 = sadd.s32 %s235, %s236
      %s238 = smul.addr %s237, 4
      %s239 = scalar_lea.vmem %s4, %s238
      %p240 = scmp.lt.s32.totalorder %s19, 1
      %s241 = scalar_select %p240, %s19, 1
      %s242 = smul.addr %s241, 20
      %s243 = smul.addr %s242, 4
      %s244 = scalar_lea.vmem %s0, %s243
      %p245 = scmp.lt.s32.totalorder %s20, 0
      %s246 = scalar_select %p245, %s20, 0
      %s247 = smul.addr %s246, 4
      %s248 = scalar_lea.vmem %s1, %s247
      %p249 = scmp.lt.s32.totalorder %s20, 0
      %s250 = scalar_select %p249, %s20, 0
      %s251 = scalar_lea.vmem %s2, %s250
      %p252 = scmp.lt.s32.totalorder %s20, 0
      %s253 = scalar_select %p252, %s20, 0
      %s254 = scalar_lea.vmem %s3, %s253
      %p255 = scmp.lt.s32.totalorder %s19, 1
      %s256 = scalar_select %p255, %s19, 1
      %p257 = scmp.lt.s32.totalorder %s20, 0
      %s258 = scalar_select %p257, %s20, 0
      %s259 = smul.addr %s256, 20
      %s260 = sadd.s32 %s258, %s259
      %s261 = smul.addr %s260, 4
      %s262 = scalar_lea.vmem %s4, %s261
      %v264 = vld [vmem:[%s244] sm:$0xf]
      %v265 = vld [vmem:[%s244 + $0x4] sm:$0xf]
      %v266 = vld [vmem:[%s244 + $0x8] sm:$0xf]
      %v267 = vld [vmem:[%s244 + $0xc] sm:$0xf]
      %v268 = vld [vmem:[%s244 + $0x10] sm:$0xf]
      %v269 = vld [vmem:[%s244 + $0x14] sm:$0xf]
      %v270 = vld [vmem:[%s244 + $0x18] sm:$0xf]
      %v271 = vld [vmem:[%s244 + $0x1c] sm:$0xf]
      %v272 = vld [vmem:[%s244 + $0x20] sm:$0xf]
      %v273 = vld [vmem:[%s244 + $0x24] sm:$0xf]
      %v274 = vld [vmem:[%s244 + $0x28] sm:$0xf]
      %v275 = vld [vmem:[%s244 + $0x2c] sm:$0xf]
      %v276 = vld [vmem:[%s244 + $0x30] sm:$0xf]
      %v277 = vld [vmem:[%s244 + $0x34] sm:$0xf]
      %v278 = vld [vmem:[%s244 + $0x38] sm:$0xf]
      %v279 = vld [vmem:[%s248] sm:$0xf]
      %v280 = vld [vmem:[%s248 + $0x4] sm:$0xf]
      %v281 = vld [vmem:[%s248 + $0x8] sm:$0xf]
      %v282 = vld [vmem:[%s248 + $0xc] sm:$0xf]
      %v283 = vld [vmem:[%s248 + $0x10] sm:$0xf]
      %v284 = vld [vmem:[%s248 + $0x14] sm:$0xf]
      %v285 = vld [vmem:[%s248 + $0x18] sm:$0xf]
      %v286 = vld [vmem:[%s248 + $0x1c] sm:$0xf]
      %v302 = vunpack.c.l.b16 %v264
      %v303 = vunpack.c.l.b16 %v265
      %v304 = vunpack.c.l.b16 %v266
      %v305 = vunpack.c.l.b16 %v267
      %v306 = vunpack.c.l.b16 %v268
      %v307 = vunpack.c.l.b16 %v269
      %v308 = vunpack.c.l.b16 %v270
      %v309 = vunpack.c.l.b16 %v271
      %v310 = vunpack.c.l.b16 %v272
      %v311 = vunpack.c.l.b16 %v273
      %v312 = vunpack.c.l.b16 %v274
      %v313 = vunpack.c.l.b16 %v275
      %v314 = vunpack.c.l.b16 %v276
      %v315 = vunpack.c.l.b16 %v277
      %v316 = vunpack.c.l.b16 %v278
      %v317 = vpack.c.b16 %v303, %v302
      %v318 = vpack.c.b16 %v305, %v304
      %v319 = vpack.c.b16 %v307, %v306
      %v320 = vpack.c.b16 %v309, %v308
      %v321 = vpack.c.b16 %v311, %v310
      %v322 = vpack.c.b16 %v313, %v312
      %v323 = vpack.c.b16 %v315, %v314
      %v324 = vpack.c.b16 %v316, %v316
      %v333 = vunpack.c.l.b16 %v279
      %v334 = vunpack.c.l.b16 %v280
      %v335 = vunpack.c.l.b16 %v281
      %v336 = vunpack.c.l.b16 %v282
      %v337 = vunpack.c.l.b16 %v283
      %v338 = vunpack.c.l.b16 %v284
      %v339 = vunpack.c.l.b16 %v285
      %v340 = vunpack.c.l.b16 %v286
      %v341 = vpack.c.b16 %v334, %v333
      %v342 = vpack.c.b16 %v336, %v335
      %v343 = vpack.c.b16 %v338, %v337
      %v344 = vpack.c.b16 %v340, %v339
      %vm349 = vcmask 523264
      %v351 = vsel %vm349, %v317, 0
      %v354 = vsel %vm349, %v318, 0
      %v357 = vsel %vm349, %v319, 0
      %v360 = vsel %vm349, %v320, 0
      %v363 = vsel %vm349, %v321, 0
      %v366 = vsel %vm349, %v322, 0
      %v369 = vsel %vm349, %v323, 0
      %v372 = vsel %vm349, %v324, 0
      %374 = vmatprep.subr.bf16.mxu0 0
      %375 = vmatpush1.bf16.msra.mxu0 0
      %376 = vmatprep.subr.bf16.mxu0 0
      %377 = vmatpush1.bf16.msra.mxu0 0
      %378 = vmatprep.subr.bf16.mxu0 0
      %379 = vmatpush1.bf16.msra.mxu0 0
      %380 = vmatprep.subr.bf16.mxu0 0
      %381 = vmatpush1.bf16.msra.mxu0 0
      %382 = vmatprep.subr.bf16.mxu0 0
      %383 = vmatpush1.bf16.msra.mxu0 %v344
      %384 = vmatprep.subr.bf16.mxu0 0
      %385 = vmatpush1.bf16.msra.mxu0 %v343
      %386 = vmatprep.subr.bf16.mxu0 0
      %387 = vmatpush1.bf16.msra.mxu0 %v342
      %388 = vmatprep.subr.bf16.mxu0 0
      %389 = vmatpush1.bf16.msra.mxu0 %v341
      %390 = vmatprep.subr.bf16.mxu0 0
      %391 = vmatpush2.bf16.msra.mxu0 0
      %392 = vmatprep.subr.bf16.mxu0 0
      %393 = vmatpush2.bf16.msra.mxu0 0
      %394 = vmatprep.subr.bf16.mxu0 0
      %395 = vmatpush2.bf16.msra.mxu0 0
      %396 = vmatprep.subr.bf16.mxu0 0
      %397 = vmatpush2.bf16.msra.mxu0 0
      %398 = vmatprep.subr.bf16.mxu0 0
      %399 = vmatpush2.bf16.msra.mxu0 0
      %400 = vmatprep.subr.bf16.mxu0 0
      %401 = vmatpush2.bf16.msra.mxu0 0
      %402 = vmatprep.subr.bf16.mxu0 0
      %403 = vmatpush2.bf16.msra.mxu0 0
      %404 = vmatprep.subr.bf16.mxu0 0
      %405 = vmatpush2.bf16.msra.mxu0 0
      %406 = vmatprep.mubr.bf16.mxu0 0
      %407 = vmatmul.mubr.bf16.gmra.mxu0 %v351
      %v408 = vpop.f32.mrf.mxu0
      %v409 = vadd.f32 0.0, %v408
      %v410 = vpop.f32.mrf.mxu0
      %v411 = vpop.f32.mrf.mxu0
      %v412 = vadd.f32 0.0, %v411
      %v413 = vpop.f32.mrf.mxu0
      %414 = vmatprep.mubr.bf16.mxu0 0
      %415 = vmatmul.mubr.bf16.gmra.mxu0 %v354
      %v416 = vpop.f32.mrf.mxu0
      %v417 = vadd.f32 0.0, %v416
      %v418 = vpop.f32.mrf.mxu0
      %v419 = vpop.f32.mrf.mxu0
      %v420 = vadd.f32 0.0, %v419
      %v421 = vpop.f32.mrf.mxu0
      %422 = vmatprep.mubr.bf16.mxu0 0
      %423 = vmatmul.mubr.bf16.gmra.mxu0 %v357
      %v424 = vpop.f32.mrf.mxu0
      %v425 = vadd.f32 0.0, %v424
      %v426 = vpop.f32.mrf.mxu0
      %v427 = vpop.f32.mrf.mxu0
      %v428 = vadd.f32 0.0, %v427
      %v429 = vpop.f32.mrf.mxu0
      %430 = vmatprep.mubr.bf16.mxu0 0
      %431 = vmatmul.mubr.bf16.gmra.mxu0 %v360
      %v432 = vpop.f32.mrf.mxu0
      %v433 = vadd.f32 0.0, %v432
      %v434 = vpop.f32.mrf.mxu0
      %v435 = vpop.f32.mrf.mxu0
      %v436 = vadd.f32 0.0, %v435
      %v437 = vpop.f32.mrf.mxu0
      %438 = vmatprep.mubr.bf16.mxu0 0
      %439 = vmatmul.mubr.bf16.gmra.mxu0 %v363
      %v440 = vpop.f32.mrf.mxu0
      %v441 = vadd.f32 0.0, %v440
      %v442 = vpop.f32.mrf.mxu0
      %v443 = vpop.f32.mrf.mxu0
      %v444 = vadd.f32 0.0, %v443
      %v445 = vpop.f32.mrf.mxu0
      %446 = vmatprep.mubr.bf16.mxu0 0
      %447 = vmatmul.mubr.bf16.gmra.mxu0 %v366
      %v448 = vpop.f32.mrf.mxu0
      %v449 = vadd.f32 0.0, %v448
      %v450 = vpop.f32.mrf.mxu0
      %v451 = vpop.f32.mrf.mxu0
      %v452 = vadd.f32 0.0, %v451
      %v453 = vpop.f32.mrf.mxu0
      %454 = vmatprep.mubr.bf16.mxu0 0
      %455 = vmatmul.mubr.bf16.gmra.mxu0 %v369
      %v456 = vpop.f32.mrf.mxu0
      %v457 = vadd.f32 0.0, %v456
      %v458 = vpop.f32.mrf.mxu0
      %v459 = vpop.f32.mrf.mxu0
      %v460 = vadd.f32 0.0, %v459
      %v461 = vpop.f32.mrf.mxu0
      %462 = vmatprep.mubr.bf16.mxu0 0
      %463 = vmatmul.mubr.bf16.gmra.mxu0 %v372
      %v464 = vpop.f32.mrf.mxu0
      %v465 = vadd.f32 0.0, %v464
      %v466 = vpop.f32.mrf.mxu0
      %v467 = vpop.f32.mrf.mxu0
      %v468 = vpop.f32.mrf.mxu0
      %469 = vdwg.mxu0
      %470 = vst.msk [vmem:[#allocation2] sm:$0xff] %vm349, %v409
      %471 = vst.msk [vmem:[#allocation2 + $0x8] sm:$0xff] %vm349, %v412
      %472 = vst.msk [vmem:[#allocation2 + $0x10] sm:$0xff] %vm349, %v417
      %473 = vst.msk [vmem:[#allocation2 + $0x18] sm:$0xff] %vm349, %v420
      %474 = vst.msk [vmem:[#allocation2 + $0x20] sm:$0xff] %vm349, %v425
      %475 = vst.msk [vmem:[#allocation2 + $0x28] sm:$0xff] %vm349, %v428
      %476 = vst.msk [vmem:[#allocation2 + $0x30] sm:$0xff] %vm349, %v433
      %477 = vst.msk [vmem:[#allocation2 + $0x38] sm:$0xff] %vm349, %v436
      %478 = vst.msk [vmem:[#allocation2 + $0x40] sm:$0xff] %vm349, %v441
      %479 = vst.msk [vmem:[#allocation2 + $0x48] sm:$0xff] %vm349, %v444
      %480 = vst.msk [vmem:[#allocation2 + $0x50] sm:$0xff] %vm349, %v449
      %481 = vst.msk [vmem:[#allocation2 + $0x58] sm:$0xff] %vm349, %v452
      %482 = vst.msk [vmem:[#allocation2 + $0x60] sm:$0xff] %vm349, %v457
      %483 = vst.msk [vmem:[#allocation2 + $0x68] sm:$0xff] %vm349, %v460
      %484 = vst.msk [vmem:[#allocation2 + $0x70] sm:$0xff] %vm349, %v465
      %v485 = vld [vmem:[%s244] sm:$0xf]
      %v486 = vld [vmem:[%s244 + $0x4] sm:$0xf]
      %v487 = vld [vmem:[%s244 + $0x8] sm:$0xf]
      %v488 = vld [vmem:[%s244 + $0xc] sm:$0xf]
      %v489 = vld [vmem:[%s244 + $0x10] sm:$0xf]
      %v490 = vld [vmem:[%s244 + $0x14] sm:$0xf]
      %v491 = vld [vmem:[%s244 + $0x18] sm:$0xf]
      %v492 = vld [vmem:[%s244 + $0x1c] sm:$0xf]
      %v493 = vld [vmem:[%s244 + $0x20] sm:$0xf]
      %v494 = vld [vmem:[%s244 + $0x24] sm:$0xf]
      %v495 = vld [vmem:[%s244 + $0x28] sm:$0xf]
      %v496 = vld [vmem:[%s244 + $0x2c] sm:$0xf]
      %v497 = vld [vmem:[%s244 + $0x30] sm:$0xf]
      %v498 = vld [vmem:[%s244 + $0x34] sm:$0xf]
      %v499 = vld [vmem:[%s244 + $0x38] sm:$0xf]
      %v500 = vld [vmem:[%s244 + $0x3c] sm:$0x1]
      %s501 = scalar_lea.vmem %s248, 32
      %v502 = vld [vmem:[%s501] sm:$0xf]
      %v503 = vld [vmem:[%s501 + $0x4] sm:$0xf]
      %v504 = vld [vmem:[%s501 + $0x8] sm:$0xf]
      %v505 = vld [vmem:[%s501 + $0xc] sm:$0xf]
      %v506 = vld [vmem:[%s501 + $0x10] sm:$0xf]
      %v507 = vld [vmem:[%s501 + $0x14] sm:$0xf]
      %v508 = vld [vmem:[%s501 + $0x18] sm:$0xf]
      %v509 = vld [vmem:[%s501 + $0x1c] sm:$0xf]
      %v526 = vunpack.c.l.b16 %v485
      %v527 = vunpack.c.l.b16 %v486
      %v528 = vunpack.c.l.b16 %v487
      %v529 = vunpack.c.l.b16 %v488
      %v530 = vunpack.c.l.b16 %v489
      %v531 = vunpack.c.l.b16 %v490
      %v532 = vunpack.c.l.b16 %v491
      %v533 = vunpack.c.l.b16 %v492
      %v534 = vunpack.c.l.b16 %v493
      %v535 = vunpack.c.l.b16 %v494
      %v536 = vunpack.c.l.b16 %v495
      %v537 = vunpack.c.l.b16 %v496
      %v538 = vunpack.c.l.b16 %v497
      %v539 = vunpack.c.l.b16 %v498
      %v540 = vunpack.c.l.b16 %v499
      %v541 = vunpack.c.l.b16 %v500
      %v542 = vpack.c.b16 %v527, %v526
      %v543 = vpack.c.b16 %v529, %v528
      %v544 = vpack.c.b16 %v531, %v530
      %v545 = vpack.c.b16 %v533, %v532
      %v546 = vpack.c.b16 %v535, %v534
      %v547 = vpack.c.b16 %v537, %v536
      %v548 = vpack.c.b16 %v539, %v538
      %v549 = vpack.c.b16 %v541, %v540
      %vm550 = vsmask.f32 7424
      %v552 = vshrl.u32 %v542, 16
      %v554 = vshll.u32 %v542, 16
      %v556 = vrot.slane %v554, 1
      %v557 = vor.u32 %v552, %v556
      %v559 = vshll.u32 %v543, 16
      %v561 = vrot.slane %v559, 1
      %v562 = vsel %vm550, %v557, %v561
      %v563 = vshrl.u32 %v543, 16
      %v565 = vor.u32 %v563, %v561
      %v567 = vshll.u32 %v544, 16
      %v569 = vrot.slane %v567, 1
      %v570 = vsel %vm550, %v565, %v569
      %v571 = vshrl.u32 %v544, 16
      %v573 = vor.u32 %v571, %v569
      %v575 = vshll.u32 %v545, 16
      %v577 = vrot.slane %v575, 1
      %v578 = vsel %vm550, %v573, %v577
      %v579 = vshrl.u32 %v545, 16
      %v581 = vor.u32 %v579, %v577
      %v583 = vshll.u32 %v546, 16
      %v585 = vrot.slane %v583, 1
      %v586 = vsel %vm550, %v581, %v585
      %v587 = vshrl.u32 %v546, 16
      %v589 = vor.u32 %v587, %v585
      %v591 = vshll.u32 %v547, 16
      %v593 = vrot.slane %v591, 1
      %v594 = vsel %vm550, %v589, %v593
      %v595 = vshrl.u32 %v547, 16
      %v597 = vor.u32 %v595, %v593
      %v599 = vshll.u32 %v548, 16
      %v601 = vrot.slane %v599, 1
      %v602 = vsel %vm550, %v597, %v601
      %v603 = vshrl.u32 %v548, 16
      %v605 = vor.u32 %v603, %v601
      %v607 = vshll.u32 %v549, 16
      %v609 = vrot.slane %v607, 1
      %v610 = vsel %vm550, %v605, %v609
      %v611 = vshrl.u32 %v549, 16
      %v613 = vor.u32 %v611, %v609
      %v622 = vunpack.c.l.b16 %v502
      %v623 = vunpack.c.l.b16 %v503
      %v624 = vunpack.c.l.b16 %v504
      %v625 = vunpack.c.l.b16 %v505
      %v626 = vunpack.c.l.b16 %v506
      %v627 = vunpack.c.l.b16 %v507
      %v628 = vunpack.c.l.b16 %v508
      %v629 = vunpack.c.l.b16 %v509
      %v630 = vpack.c.b16 %v623, %v622
      %v631 = vpack.c.b16 %v625, %v624
      %v632 = vpack.c.b16 %v627, %v626
      %v633 = vpack.c.b16 %v629, %v628
      %v639 = vsel %vm349, %v562, 0
      %v642 = vsel %vm349, %v570, 0
      %v645 = vsel %vm349, %v578, 0
      %v648 = vsel %vm349, %v586, 0
      %v651 = vsel %vm349, %v594, 0
      %v654 = vsel %vm349, %v602, 0
      %v657 = vsel %vm349, %v610, 0
      %v660 = vsel %vm349, %v613, 0
      %662 = vmatprep.subr.bf16.mxu0 0
      %663 = vmatpush1.bf16.msra.mxu0 0
      %664 = vmatprep.subr.bf16.mxu0 0
      %665 = vmatpush1.bf16.msra.mxu0 0
      %666 = vmatprep.subr.bf16.mxu0 0
      %667 = vmatpush1.bf16.msra.mxu0 0
      %668 = vmatprep.subr.bf16.mxu0 0
      %669 = vmatpush1.bf16.msra.mxu0 0
      %670 = vmatprep.subr.bf16.mxu0 0
      %671 = vmatpush1.bf16.msra.mxu0 %v633
      %672 = vmatprep.subr.bf16.mxu0 0
      %673 = vmatpush1.bf16.msra.mxu0 %v632
      %674 = vmatprep.subr.bf16.mxu0 0
      %675 = vmatpush1.bf16.msra.mxu0 %v631
      %676 = vmatprep.subr.bf16.mxu0 0
      %677 = vmatpush1.bf16.msra.mxu0 %v630
      %678 = vmatprep.subr.bf16.mxu0 0
      %679 = vmatpush2.bf16.msra.mxu0 0
      %680 = vmatprep.subr.bf16.mxu0 0
      %681 = vmatpush2.bf16.msra.mxu0 0
      %682 = vmatprep.subr.bf16.mxu0 0
      %683 = vmatpush2.bf16.msra.mxu0 0
      %684 = vmatprep.subr.bf16.mxu0 0
      %685 = vmatpush2.bf16.msra.mxu0 0
      %686 = vmatprep.subr.bf16.mxu0 0
      %687 = vmatpush2.bf16.msra.mxu0 0
      %688 = vmatprep.subr.bf16.mxu0 0
      %689 = vmatpush2.bf16.msra.mxu0 0
      %690 = vmatprep.subr.bf16.mxu0 0
      %691 = vmatpush2.bf16.msra.mxu0 0
      %692 = vmatprep.subr.bf16.mxu0 0
      %693 = vmatpush2.bf16.msra.mxu0 0
      %694 = vmatprep.mubr.bf16.mxu0 0
      %695 = vmatmul.mubr.bf16.gmra.mxu0 %v639
      %v696 = vpop.f32.mrf.mxu0
      %v697 = vadd.f32 0.0, %v696
      %v698 = vpop.f32.mrf.mxu0
      %v699 = vpop.f32.mrf.mxu0
      %v700 = vadd.f32 0.0, %v699
      %v701 = vpop.f32.mrf.mxu0
      %702 = vmatprep.mubr.bf16.mxu0 0
      %703 = vmatmul.mubr.bf16.gmra.mxu0 %v642
      %v704 = vpop.f32.mrf.mxu0
      %v705 = vadd.f32 0.0, %v704
      %v706 = vpop.f32.mrf.mxu0
      %v707 = vpop.f32.mrf.mxu0
      %v708 = vadd.f32 0.0, %v707
      %v709 = vpop.f32.mrf.mxu0
      %710 = vmatprep.mubr.bf16.mxu0 0
      %711 = vmatmul.mubr.bf16.gmra.mxu0 %v645
      %v712 = vpop.f32.mrf.mxu0
      %v713 = vadd.f32 0.0, %v712
      %v714 = vpop.f32.mrf.mxu0
      %v715 = vpop.f32.mrf.mxu0
      %v716 = vadd.f32 0.0, %v715
      %v717 = vpop.f32.mrf.mxu0
      %718 = vmatprep.mubr.bf16.mxu0 0
      %719 = vmatmul.mubr.bf16.gmra.mxu0 %v648
      %v720 = vpop.f32.mrf.mxu0
      %v721 = vadd.f32 0.0, %v720
      %v722 = vpop.f32.mrf.mxu0
      %v723 = vpop.f32.mrf.mxu0
      %v724 = vadd.f32 0.0, %v723
      %v725 = vpop.f32.mrf.mxu0
      %726 = vmatprep.mubr.bf16.mxu0 0
      %727 = vmatmul.mubr.bf16.gmra.mxu0 %v651
      %v728 = vpop.f32.mrf.mxu0
      %v729 = vadd.f32 0.0, %v728
      %v730 = vpop.f32.mrf.mxu0
      %v731 = vpop.f32.mrf.mxu0
      %v732 = vadd.f32 0.0, %v731
      %v733 = vpop.f32.mrf.mxu0
      %734 = vmatprep.mubr.bf16.mxu0 0
      %735 = vmatmul.mubr.bf16.gmra.mxu0 %v654
      %v736 = vpop.f32.mrf.mxu0
      %v737 = vadd.f32 0.0, %v736
      %v738 = vpop.f32.mrf.mxu0
      %v739 = vpop.f32.mrf.mxu0
      %v740 = vadd.f32 0.0, %v739
      %v741 = vpop.f32.mrf.mxu0
      %742 = vmatprep.mubr.bf16.mxu0 0
      %743 = vmatmul.mubr.bf16.gmra.mxu0 %v657
      %v744 = vpop.f32.mrf.mxu0
      %v745 = vadd.f32 0.0, %v744
      %v746 = vpop.f32.mrf.mxu0
      %v747 = vpop.f32.mrf.mxu0
      %v748 = vadd.f32 0.0, %v747
      %v749 = vpop.f32.mrf.mxu0
      %750 = vmatprep.mubr.bf16.mxu0 0
      %751 = vmatmul.mubr.bf16.gmra.mxu0 %v660
      %v752 = vpop.f32.mrf.mxu0
      %v753 = vadd.f32 0.0, %v752
      %v754 = vpop.f32.mrf.mxu0
      %v755 = vpop.f32.mrf.mxu0
      %v756 = vpop.f32.mrf.mxu0
      %757 = vdwg.mxu0
      %v758 = vld [vmem:[#allocation2] sm:$0xff]
      %v759 = vld [vmem:[#allocation2 + $0x8] sm:$0xff]
      %v760 = vld [vmem:[#allocation2 + $0x10] sm:$0xff]
      %v761 = vld [vmem:[#allocation2 + $0x18] sm:$0xff]
      %v762 = vld [vmem:[#allocation2 + $0x20] sm:$0xff]
      %v763 = vld [vmem:[#allocation2 + $0x28] sm:$0xff]
      %v764 = vld [vmem:[#allocation2 + $0x30] sm:$0xff]
      %v765 = vld [vmem:[#allocation2 + $0x38] sm:$0xff]
      %v766 = vld [vmem:[#allocation2 + $0x40] sm:$0xff]
      %v767 = vld [vmem:[#allocation2 + $0x48] sm:$0xff]
      %v768 = vld [vmem:[#allocation2 + $0x50] sm:$0xff]
      %v769 = vld [vmem:[#allocation2 + $0x58] sm:$0xff]
      %v770 = vld [vmem:[#allocation2 + $0x60] sm:$0xff]
      %v771 = vld [vmem:[#allocation2 + $0x68] sm:$0xff]
      %v772 = vld [vmem:[#allocation2 + $0x70] sm:$0xff]
      %v773 = vadd.f32 %v758, %v697
      %v774 = vadd.f32 %v759, %v700
      %v775 = vadd.f32 %v760, %v705
      %v776 = vadd.f32 %v761, %v708
      %v777 = vadd.f32 %v762, %v713
      %v778 = vadd.f32 %v763, %v716
      %v779 = vadd.f32 %v764, %v721
      %v780 = vadd.f32 %v765, %v724
      %v781 = vadd.f32 %v766, %v729
      %v782 = vadd.f32 %v767, %v732
      %v783 = vadd.f32 %v768, %v737
      %v784 = vadd.f32 %v769, %v740
      %v785 = vadd.f32 %v770, %v745
      %v786 = vadd.f32 %v771, %v748
      %v787 = vadd.f32 %v772, %v753
      %788 = vst.msk [vmem:[#allocation2] sm:$0xff] %vm349, %v773
      %789 = vst.msk [vmem:[#allocation2 + $0x8] sm:$0xff] %vm349, %v774
      %790 = vst.msk [vmem:[#allocation2 + $0x10] sm:$0xff] %vm349, %v775
      %791 = vst.msk [vmem:[#allocation2 + $0x18] sm:$0xff] %vm349, %v776
      %792 = vst.msk [vmem:[#allocation2 + $0x20] sm:$0xff] %vm349, %v777
      %793 = vst.msk [vmem:[#allocation2 + $0x28] sm:$0xff] %vm349, %v778
      %794 = vst.msk [vmem:[#allocation2 + $0x30] sm:$0xff] %vm349, %v779
      %795 = vst.msk [vmem:[#allocation2 + $0x38] sm:$0xff] %vm349, %v780
      %796 = vst.msk [vmem:[#allocation2 + $0x40] sm:$0xff] %vm349, %v781
      %797 = vst.msk [vmem:[#allocation2 + $0x48] sm:$0xff] %vm349, %v782
      %798 = vst.msk [vmem:[#allocation2 + $0x50] sm:$0xff] %vm349, %v783
      %799 = vst.msk [vmem:[#allocation2 + $0x58] sm:$0xff] %vm349, %v784
      %800 = vst.msk [vmem:[#allocation2 + $0x60] sm:$0xff] %vm349, %v785
      %801 = vst.msk [vmem:[#allocation2 + $0x68] sm:$0xff] %vm349, %v786
      %802 = vst.msk [vmem:[#allocation2 + $0x70] sm:$0xff] %vm349, %v787
      %v803 = vld [vmem:[%s244] sm:$0xe]
      %v804 = vld [vmem:[%s244 + $0x4] sm:$0xf]
      %v805 = vld [vmem:[%s244 + $0x8] sm:$0xf]
      %v806 = vld [vmem:[%s244 + $0xc] sm:$0xf]
      %v807 = vld [vmem:[%s244 + $0x10] sm:$0xf]
      %v808 = vld [vmem:[%s244 + $0x14] sm:$0xf]
      %v809 = vld [vmem:[%s244 + $0x18] sm:$0xf]
      %v810 = vld [vmem:[%s244 + $0x1c] sm:$0xf]
      %v811 = vld [vmem:[%s244 + $0x20] sm:$0xf]
      %v812 = vld [vmem:[%s244 + $0x24] sm:$0xf]
      %v813 = vld [vmem:[%s244 + $0x28] sm:$0xf]
      %v814 = vld [vmem:[%s244 + $0x2c] sm:$0xf]
      %v815 = vld [vmem:[%s244 + $0x30] sm:$0xf]
      %v816 = vld [vmem:[%s244 + $0x34] sm:$0xf]
      %v817 = vld [vmem:[%s244 + $0x38] sm:$0xf]
      %v818 = vld [vmem:[%s244 + $0x3c] sm:$0x1]
      %s819 = scalar_lea.vmem %s248, 64
      %v820 = vld [vmem:[%s819] sm:$0xf]
      %v821 = vld [vmem:[%s819 + $0x4] sm:$0xf]
      %v822 = vld [vmem:[%s819 + $0x8] sm:$0xf]
      %v823 = vld [vmem:[%s819 + $0xc] sm:$0xf]
      %v824 = vld [vmem:[%s819 + $0x10] sm:$0xf]
      %v825 = vld [vmem:[%s819 + $0x14] sm:$0xf]
      %v826 = vld [vmem:[%s819 + $0x18] sm:$0xf]
      %v827 = vld [vmem:[%s819 + $0x1c] sm:$0xf]
      %v844 = vunpack.c.l.b16 %v803
      %v845 = vunpack.c.l.b16 %v804
      %v846 = vunpack.c.l.b16 %v805
      %v847 = vunpack.c.l.b16 %v806
      %v848 = vunpack.c.l.b16 %v807
      %v849 = vunpack.c.l.b16 %v808
      %v850 = vunpack.c.l.b16 %v809
      %v851 = vunpack.c.l.b16 %v810
      %v852 = vunpack.c.l.b16 %v811
      %v853 = vunpack.c.l.b16 %v812
      %v854 = vunpack.c.l.b16 %v813
      %v855 = vunpack.c.l.b16 %v814
      %v856 = vunpack.c.l.b16 %v815
      %v857 = vunpack.c.l.b16 %v816
      %v858 = vunpack.c.l.b16 %v817
      %v859 = vunpack.c.l.b16 %v818
      %v860 = vpack.c.b16 %v845, %v844
      %v861 = vpack.c.b16 %v847, %v846
      %v862 = vpack.c.b16 %v849, %v848
      %v863 = vpack.c.b16 %v851, %v850
      %v864 = vpack.c.b16 %v853, %v852
      %v865 = vpack.c.b16 %v855, %v854
      %v866 = vpack.c.b16 %v857, %v856
      %v867 = vpack.c.b16 %v859, %v858
      %vm868 = vcmask 1046528
      %v869 = vrot.slane %v860, 1
      %v870 = vrot.slane %v861, 1
      %v871 = vsel %vm868, %v869, %v870
      %v872 = vrot.slane %v862, 1
      %v873 = vsel %vm868, %v870, %v872
      %v874 = vrot.slane %v863, 1
      %v875 = vsel %vm868, %v872, %v874
      %v876 = vrot.slane %v864, 1
      %v877 = vsel %vm868, %v874, %v876
      %v878 = vrot.slane %v865, 1
      %v879 = vsel %vm868, %v876, %v878
      %v880 = vrot.slane %v866, 1
      %v881 = vsel %vm868, %v878, %v880
      %v882 = vrot.slane %v867, 1
      %v883 = vsel %vm868, %v880, %v882
      %v892 = vunpack.c.l.b16 %v820
      %v893 = vunpack.c.l.b16 %v821
      %v894 = vunpack.c.l.b16 %v822
      %v895 = vunpack.c.l.b16 %v823
      %v896 = vunpack.c.l.b16 %v824
      %v897 = vunpack.c.l.b16 %v825
      %v898 = vunpack.c.l.b16 %v826
      %v899 = vunpack.c.l.b16 %v827
      %v900 = vpack.c.b16 %v893, %v892
      %v901 = vpack.c.b16 %v895, %v894
      %v902 = vpack.c.b16 %v897, %v896
      %v903 = vpack.c.b16 %v899, %v898
      %v909 = vsel %vm349, %v871, 0
      %v912 = vsel %vm349, %v873, 0
      %v915 = vsel %vm349, %v875, 0
      %v918 = vsel %vm349, %v877, 0
      %v921 = vsel %vm349, %v879, 0
      %v924 = vsel %vm349, %v881, 0
      %v927 = vsel %vm349, %v883, 0
      %v930 = vsel %vm349, %v882, 0
      %932 = vmatprep.subr.bf16.mxu0 0
      %933 = vmatpush1.bf16.msra.mxu0 0
      %934 = vmatprep.subr.bf16.mxu0 0
      %935 = vmatpush1.bf16.msra.mxu0 0
      %936 = vmatprep.subr.bf16.mxu0 0
      %937 = vmatpush1.bf16.msra.mxu0 0
      %938 = vmatprep.subr.bf16.mxu0 0
      %939 = vmatpush1.bf16.msra.mxu0 0
      %940 = vmatprep.subr.bf16.mxu0 0
      %941 = vmatpush1.bf16.msra.mxu0 %v903
      %942 = vmatprep.subr.bf16.mxu0 0
      %943 = vmatpush1.bf16.msra.mxu0 %v902
      %944 = vmatprep.subr.bf16.mxu0 0
      %945 = vmatpush1.bf16.msra.mxu0 %v901
      %946 = vmatprep.subr.bf16.mxu0 0
      %947 = vmatpush1.bf16.msra.mxu0 %v900
      %948 = vmatprep.subr.bf16.mxu0 0
      %949 = vmatpush2.bf16.msra.mxu0 0
      %950 = vmatprep.subr.bf16.mxu0 0
      %951 = vmatpush2.bf16.msra.mxu0 0
      %952 = vmatprep.subr.bf16.mxu0 0
      %953 = vmatpush2.bf16.msra.mxu0 0
      %954 = vmatprep.subr.bf16.mxu0 0
      %955 = vmatpush2.bf16.msra.mxu0 0
      %956 = vmatprep.subr.bf16.mxu0 0
      %957 = vmatpush2.bf16.msra.mxu0 0
      %958 = vmatprep.subr.bf16.mxu0 0
      %959 = vmatpush2.bf16.msra.mxu0 0
      %960 = vmatprep.subr.bf16.mxu0 0
      %961 = vmatpush2.bf16.msra.mxu0 0
      %962 = vmatprep.subr.bf16.mxu0 0
      %963 = vmatpush2.bf16.msra.mxu0 0
      %964 = vmatprep.mubr.bf16.mxu0 0
      %965 = vmatmul.mubr.bf16.gmra.mxu0 %v909
      %v966 = vpop.f32.mrf.mxu0
      %v967 = vadd.f32 0.0, %v966
      %v968 = vpop.f32.mrf.mxu0
      %v969 = vpop.f32.mrf.mxu0
      %v970 = vadd.f32 0.0, %v969
      %v971 = vpop.f32.mrf.mxu0
      %972 = vmatprep.mubr.bf16.mxu0 0
      %973 = vmatmul.mubr.bf16.gmra.mxu0 %v912
      %v974 = vpop.f32.mrf.mxu0
      %v975 = vadd.f32 0.0, %v974
      %v976 = vpop.f32.mrf.mxu0
      %v977 = vpop.f32.mrf.mxu0
      %v978 = vadd.f32 0.0, %v977
      %v979 = vpop.f32.mrf.mxu0
      %980 = vmatprep.mubr.bf16.mxu0 0
      %981 = vmatmul.mubr.bf16.gmra.mxu0 %v915
      %v982 = vpop.f32.mrf.mxu0
      %v983 = vadd.f32 0.0, %v982
      %v984 = vpop.f32.mrf.mxu0
      %v985 = vpop.f32.mrf.mxu0
      %v986 = vadd.f32 0.0, %v985
      %v987 = vpop.f32.mrf.mxu0
      %988 = vmatprep.mubr.bf16.mxu0 0
      %989 = vmatmul.mubr.bf16.gmra.mxu0 %v918
      %v990 = vpop.f32.mrf.mxu0
      %v991 = vadd.f32 0.0, %v990
      %v992 = vpop.f32.mrf.mxu0
      %v993 = vpop.f32.mrf.mxu0
      %v994 = vadd.f32 0.0, %v993
      %v995 = vpop.f32.mrf.mxu0
      %996 = vmatprep.mubr.bf16.mxu0 0
      %997 = vmatmul.mubr.bf16.gmra.mxu0 %v921
      %v998 = vpop.f32.mrf.mxu0
      %v999 = vadd.f32 0.0, %v998
      %v1000 = vpop.f32.mrf.mxu0
      %v1001 = vpop.f32.mrf.mxu0
      %v1002 = vadd.f32 0.0, %v1001
      %v1003 = vpop.f32.mrf.mxu0
      %1004 = vmatprep.mubr.bf16.mxu0 0
      %1005 = vmatmul.mubr.bf16.gmra.mxu0 %v924
      %v1006 = vpop.f32.mrf.mxu0
      %v1007 = vadd.f32 0.0, %v1006
      %v1008 = vpop.f32.mrf.mxu0
      %v1009 = vpop.f32.mrf.mxu0
      %v1010 = vadd.f32 0.0, %v1009
      %v1011 = vpop.f32.mrf.mxu0
      %1012 = vmatprep.mubr.bf16.mxu0 0
      %1013 = vmatmul.mubr.bf16.gmra.mxu0 %v927
      %v1014 = vpop.f32.mrf.mxu0
      %v1015 = vadd.f32 0.0, %v1014
      %v1016 = vpop.f32.mrf.mxu0
      %v1017 = vpop.f32.mrf.mxu0
      %v1018 = vadd.f32 0.0, %v1017
      %v1019 = vpop.f32.mrf.mxu0
      %1020 = vmatprep.mubr.bf16.mxu0 0
      %1021 = vmatmul.mubr.bf16.gmra.mxu0 %v930
      %v1022 = vpop.f32.mrf.mxu0
      %v1023 = vadd.f32 0.0, %v1022
      %v1024 = vpop.f32.mrf.mxu0
      %v1025 = vpop.f32.mrf.mxu0
      %v1026 = vpop.f32.mrf.mxu0
      %1027 = vdwg.mxu0
      %v1028 = vld [vmem:[#allocation2] sm:$0xff]
      %v1029 = vld [vmem:[#allocation2 + $0x8] sm:$0xff]
      %v1030 = vld [vmem:[#allocation2 + $0x10] sm:$0xff]
      %v1031 = vld [vmem:[#allocation2 + $0x18] sm:$0xff]
      %v1032 = vld [vmem:[#allocation2 + $0x20] sm:$0xff]
      %v1033 = vld [vmem:[#allocation2 + $0x28] sm:$0xff]
      %v1034 = vld [vmem:[#allocation2 + $0x30] sm:$0xff]
      %v1035 = vld [vmem:[#allocation2 + $0x38] sm:$0xff]
      %v1036 = vld [vmem:[#allocation2 + $0x40] sm:$0xff]
      %v1037 = vld [vmem:[#allocation2 + $0x48] sm:$0xff]
      %v1038 = vld [vmem:[#allocation2 + $0x50] sm:$0xff]
      %v1039 = vld [vmem:[#allocation2 + $0x58] sm:$0xff]
      %v1040 = vld [vmem:[#allocation2 + $0x60] sm:$0xff]
      %v1041 = vld [vmem:[#allocation2 + $0x68] sm:$0xff]
      %v1042 = vld [vmem:[#allocation2 + $0x70] sm:$0xff]
      %v1043 = vadd.f32 %v1028, %v967
      %v1044 = vadd.f32 %v1029, %v970
      %v1045 = vadd.f32 %v1030, %v975
      %v1046 = vadd.f32 %v1031, %v978
      %v1047 = vadd.f32 %v1032, %v983
      %v1048 = vadd.f32 %v1033, %v986
      %v1049 = vadd.f32 %v1034, %v991
      %v1050 = vadd.f32 %v1035, %v994
      %v1051 = vadd.f32 %v1036, %v999
      %v1052 = vadd.f32 %v1037, %v1002
      %v1053 = vadd.f32 %v1038, %v1007
      %v1054 = vadd.f32 %v1039, %v1010
      %v1055 = vadd.f32 %v1040, %v1015
      %v1056 = vadd.f32 %v1041, %v1018
      %v1057 = vadd.f32 %v1042, %v1023
      %1058 = vst.msk [vmem:[#allocation2] sm:$0xff] %vm349, %v1043
      %1059 = vst.msk [vmem:[#allocation2 + $0x8] sm:$0xff] %vm349, %v1044
      %1060 = vst.msk [vmem:[#allocation2 + $0x10] sm:$0xff] %vm349, %v1045
      %1061 = vst.msk [vmem:[#allocation2 + $0x18] sm:$0xff] %vm349, %v1046
      %1062 = vst.msk [vmem:[#allocation2 + $0x20] sm:$0xff] %vm349, %v1047
      %1063 = vst.msk [vmem:[#allocation2 + $0x28] sm:$0xff] %vm349, %v1048
      %1064 = vst.msk [vmem:[#allocation2 + $0x30] sm:$0xff] %vm349, %v1049
      %1065 = vst.msk [vmem:[#allocation2 + $0x38] sm:$0xff] %vm349, %v1050
      %1066 = vst.msk [vmem:[#allocation2 + $0x40] sm:$0xff] %vm349, %v1051
      %1067 = vst.msk [vmem:[#allocation2 + $0x48] sm:$0xff] %vm349, %v1052
      %1068 = vst.msk [vmem:[#allocation2 + $0x50] sm:$0xff] %vm349, %v1053
      %1069 = vst.msk [vmem:[#allocation2 + $0x58] sm:$0xff] %vm349, %v1054
      %1070 = vst.msk [vmem:[#allocation2 + $0x60] sm:$0xff] %vm349, %v1055
      %1071 = vst.msk [vmem:[#allocation2 + $0x68] sm:$0xff] %vm349, %v1056
      %1072 = vst.msk [vmem:[#allocation2 + $0x70] sm:$0xff] %vm349, %v1057
      %v1073 = vld [vmem:[%s244 + $0x4] sm:$0xc]
      %v1074 = vld [vmem:[%s244 + $0x8] sm:$0xf]
      %v1075 = vld [vmem:[%s244 + $0xc] sm:$0xf]
      %v1076 = vld [vmem:[%s244 + $0x10] sm:$0xf]
      %v1077 = vld [vmem:[%s244 + $0x14] sm:$0xf]
      %v1078 = vld [vmem:[%s244 + $0x18] sm:$0xf]
      %v1079 = vld [vmem:[%s244 + $0x1c] sm:$0xf]
      %v1080 = vld [vmem:[%s244 + $0x20] sm:$0xf]
      %v1081 = vld [vmem:[%s244 + $0x24] sm:$0xf]
      %v1082 = vld [vmem:[%s244 + $0x28] sm:$0xf]
      %v1083 = vld [vmem:[%s244 + $0x2c] sm:$0xf]
      %v1084 = vld [vmem:[%s244 + $0x30] sm:$0xf]
      %v1085 = vld [vmem:[%s244 + $0x34] sm:$0xf]
      %v1086 = vld [vmem:[%s244 + $0x38] sm:$0xf]
      %v1087 = vld [vmem:[%s244 + $0x3c] sm:$0xf]
      %v1088 = vld [vmem:[%s244 + $0x40] sm:$0x3]
      %s1089 = scalar_lea.vmem %s248, 96
      %v1090 = vld [vmem:[%s1089] sm:$0xf]
      %v1091 = vld [vmem:[%s1089 + $0x4] sm:$0xf]
      %v1092 = vld [vmem:[%s1089 + $0x8] sm:$0xf]
      %v1093 = vld [vmem:[%s1089 + $0xc] sm:$0xf]
      %v1094 = vld [vmem:[%s1089 + $0x10] sm:$0xf]
      %v1095 = vld [vmem:[%s1089 + $0x14] sm:$0xf]
      %v1096 = vld [vmem:[%s1089 + $0x18] sm:$0xf]
      %v1097 = vld [vmem:[%s1089 + $0x1c] sm:$0xf]
      %v1114 = vunpack.c.l.b16 %v1073
      %v1115 = vunpack.c.l.b16 %v1074
      %v1116 = vunpack.c.l.b16 %v1075
      %v1117 = vunpack.c.l.b16 %v1076
      %v1118 = vunpack.c.l.b16 %v1077
      %v1119 = vunpack.c.l.b16 %v1078
      %v1120 = vunpack.c.l.b16 %v1079
      %v1121 = vunpack.c.l.b16 %v1080
      %v1122 = vunpack.c.l.b16 %v1081
      %v1123 = vunpack.c.l.b16 %v1082
      %v1124 = vunpack.c.l.b16 %v1083
      %v1125 = vunpack.c.l.b16 %v1084
      %v1126 = vunpack.c.l.b16 %v1085
      %v1127 = vunpack.c.l.b16 %v1086
      %v1128 = vunpack.c.l.b16 %v1087
      %v1129 = vunpack.c.l.b16 %v1088
      %v1130 = vpack.c.b16 %v1115, %v1114
      %v1131 = vpack.c.b16 %v1117, %v1116
      %v1132 = vpack.c.b16 %v1119, %v1118
      %v1133 = vpack.c.b16 %v1121, %v1120
      %v1134 = vpack.c.b16 %v1123, %v1122
      %v1135 = vpack.c.b16 %v1125, %v1124
      %v1136 = vpack.c.b16 %v1127, %v1126
      %v1137 = vpack.c.b16 %v1129, %v1128
      %vm1138 = vcmask 1045504
      %v1139 = vrot.slane %v1130, 2
      %v1140 = vrot.slane %v1131, 2
      %v1141 = vsel %vm1138, %v1139, %v1140
      %v1142 = vrot.slane %v1132, 2
      %v1143 = vsel %vm1138, %v1140, %v1142
      %v1144 = vrot.slane %v1133, 2
      %v1145 = vsel %vm1138, %v1142, %v1144
      %v1146 = vrot.slane %v1134, 2
      %v1147 = vsel %vm1138, %v1144, %v1146
      %v1148 = vrot.slane %v1135, 2
      %v1149 = vsel %vm1138, %v1146, %v1148
      %v1150 = vrot.slane %v1136, 2
      %v1151 = vsel %vm1138, %v1148, %v1150
      %v1152 = vrot.slane %v1137, 2
      %v1153 = vsel %vm1138, %v1150, %v1152
      %v1162 = vunpack.c.l.b16 %v1090
      %v1163 = vunpack.c.l.b16 %v1091
      %v1164 = vunpack.c.l.b16 %v1092
      %v1165 = vunpack.c.l.b16 %v1093
      %v1166 = vunpack.c.l.b16 %v1094
      %v1167 = vunpack.c.l.b16 %v1095
      %v1168 = vunpack.c.l.b16 %v1096
      %v1169 = vunpack.c.l.b16 %v1097
      %v1170 = vpack.c.b16 %v1163, %v1162
      %v1171 = vpack.c.b16 %v1165, %v1164
      %v1172 = vpack.c.b16 %v1167, %v1166
      %v1173 = vpack.c.b16 %v1169, %v1168
      %v1179 = vsel %vm349, %v1141, 0
      %v1182 = vsel %vm349, %v1143, 0
      %v1185 = vsel %vm349, %v1145, 0
      %v1188 = vsel %vm349, %v1147, 0
      %v1191 = vsel %vm349, %v1149, 0
      %v1194 = vsel %vm349, %v1151, 0
      %v1197 = vsel %vm349, %v1153, 0
      %v1200 = vsel %vm349, %v1152, 0
      %1202 = vmatprep.subr.bf16.mxu0 0
      %1203 = vmatpush1.bf16.msra.mxu0 0
      %1204 = vmatprep.subr.bf16.mxu0 0
      %1205 = vmatpush1.bf16.msra.mxu0 0
      %1206 = vmatprep.subr.bf16.mxu0 0
      %1207 = vmatpush1.bf16.msra.mxu0 0
      %1208 = vmatprep.subr.bf16.mxu0 0
      %1209 = vmatpush1.bf16.msra.mxu0 0
      %1210 = vmatprep.subr.bf16.mxu0 0
      %1211 = vmatpush1.bf16.msra.mxu0 %v1173
      %1212 = vmatprep.subr.bf16.mxu0 0
      %1213 = vmatpush1.bf16.msra.mxu0 %v1172
      %1214 = vmatprep.subr.bf16.mxu0 0
      %1215 = vmatpush1.bf16.msra.mxu0 %v1171
      %1216 = vmatprep.subr.bf16.mxu0 0
      %1217 = vmatpush1.bf16.msra.mxu0 %v1170
      %1218 = vmatprep.subr.bf16.mxu0 0
      %1219 = vmatpush2.bf16.msra.mxu0 0
      %1220 = vmatprep.subr.bf16.mxu0 0
      %1221 = vmatpush2.bf16.msra.mxu0 0
      %1222 = vmatprep.subr.bf16.mxu0 0
      %1223 = vmatpush2.bf16.msra.mxu0 0
      %1224 = vmatprep.subr.bf16.mxu0 0
      %1225 = vmatpush2.bf16.msra.mxu0 0
      %1226 = vmatprep.subr.bf16.mxu0 0
      %1227 = vmatpush2.bf16.msra.mxu0 0
      %1228 = vmatprep.subr.bf16.mxu0 0
      %1229 = vmatpush2.bf16.msra.mxu0 0
      %1230 = vmatprep.subr.bf16.mxu0 0
      %1231 = vmatpush2.bf16.msra.mxu0 0
      %1232 = vmatprep.subr.bf16.mxu0 0
      %1233 = vmatpush2.bf16.msra.mxu0 0
      %1234 = vmatprep.mubr.bf16.mxu0 0
      %1235 = vmatmul.mubr.bf16.gmra.mxu0 %v1179
      %v1236 = vpop.f32.mrf.mxu0
      %v1237 = vadd.f32 0.0, %v1236
      %v1238 = vpop.f32.mrf.mxu0
      %v1239 = vpop.f32.mrf.mxu0
      %v1240 = vadd.f32 0.0, %v1239
      %v1241 = vpop.f32.mrf.mxu0
      %1242 = vmatprep.mubr.bf16.mxu0 0
      %1243 = vmatmul.mubr.bf16.gmra.mxu0 %v1182
      %v1244 = vpop.f32.mrf.mxu0
      %v1245 = vadd.f32 0.0, %v1244
      %v1246 = vpop.f32.mrf.mxu0
      %v1247 = vpop.f32.mrf.mxu0
      %v1248 = vadd.f32 0.0, %v1247
      %v1249 = vpop.f32.mrf.mxu0
      %1250 = vmatprep.mubr.bf16.mxu0 0
      %1251 = vmatmul.mubr.bf16.gmra.mxu0 %v1185
      %v1252 = vpop.f32.mrf.mxu0
      %v1253 = vadd.f32 0.0, %v1252
      %v1254 = vpop.f32.mrf.mxu0
      %v1255 = vpop.f32.mrf.mxu0
      %v1256 = vadd.f32 0.0, %v1255
      %v1257 = vpop.f32.mrf.mxu0
      %1258 = vmatprep.mubr.bf16.mxu0 0
      %1259 = vmatmul.mubr.bf16.gmra.mxu0 %v1188
      %v1260 = vpop.f32.mrf.mxu0
      %v1261 = vadd.f32 0.0, %v1260
      %v1262 = vpop.f32.mrf.mxu0
      %v1263 = vpop.f32.mrf.mxu0
      %v1264 = vadd.f32 0.0, %v1263
      %v1265 = vpop.f32.mrf.mxu0
      %1266 = vmatprep.mubr.bf16.mxu0 0
      %1267 = vmatmul.mubr.bf16.gmra.mxu0 %v1191
      %v1268 = vpop.f32.mrf.mxu0
      %v1269 = vadd.f32 0.0, %v1268
      %v1270 = vpop.f32.mrf.mxu0
      %v1271 = vpop.f32.mrf.mxu0
      %v1272 = vadd.f32 0.0, %v1271
      %v1273 = vpop.f32.mrf.mxu0
      %1274 = vmatprep.mubr.bf16.mxu0 0
      %1275 = vmatmul.mubr.bf16.gmra.mxu0 %v1194
      %v1276 = vpop.f32.mrf.mxu0
      %v1277 = vadd.f32 0.0, %v1276
      %v1278 = vpop.f32.mrf.mxu0
      %v1279 = vpop.f32.mrf.mxu0
      %v1280 = vadd.f32 0.0, %v1279
      %v1281 = vpop.f32.mrf.mxu0
      %1282 = vmatprep.mubr.bf16.mxu0 0
      %1283 = vmatmul.mubr.bf16.gmra.mxu0 %v1197
      %v1284 = vpop.f32.mrf.mxu0
      %v1285 = vadd.f32 0.0, %v1284
      %v1286 = vpop.f32.mrf.mxu0
      %v1287 = vpop.f32.mrf.mxu0
      %v1288 = vadd.f32 0.0, %v1287
      %v1289 = vpop.f32.mrf.mxu0
      %1290 = vmatprep.mubr.bf16.mxu0 0
      %1291 = vmatmul.mubr.bf16.gmra.mxu0 %v1200
      %v1292 = vpop.f32.mrf.mxu0
      %v1293 = vadd.f32 0.0, %v1292
      %v1294 = vpop.f32.mrf.mxu0
      %v1295 = vpop.f32.mrf.mxu0
      %v1296 = vpop.f32.mrf.mxu0
      %1297 = vdwg.mxu0
      %v1298 = vld [vmem:[#allocation2] sm:$0xff]
      %v1299 = vld [vmem:[#allocation2 + $0x8] sm:$0xff]
      %v1300 = vld [vmem:[#allocation2 + $0x10] sm:$0xff]
      %v1301 = vld [vmem:[#allocation2 + $0x18] sm:$0xff]
      %v1302 = vld [vmem:[#allocation2 + $0x20] sm:$0xff]
      %v1303 = vld [vmem:[#allocation2 + $0x28] sm:$0xff]
      %v1304 = vld [vmem:[#allocation2 + $0x30] sm:$0xff]
      %v1305 = vld [vmem:[#allocation2 + $0x38] sm:$0xff]
      %v1306 = vld [vmem:[#allocation2 + $0x40] sm:$0xff]
      %v1307 = vld [vmem:[#allocation2 + $0x48] sm:$0xff]
      %v1308 = vld [vmem:[#allocation2 + $0x50] sm:$0xff]
      %v1309 = vld [vmem:[#allocation2 + $0x58] sm:$0xff]
      %v1310 = vld [vmem:[#allocation2 + $0x60] sm:$0xff]
      %v1311 = vld [vmem:[#allocation2 + $0x68] sm:$0xff]
      %v1312 = vld [vmem:[#allocation2 + $0x70] sm:$0xff]
      %v1313 = vadd.f32 %v1298, %v1237
      %v1314 = vadd.f32 %v1299, %v1240
      %v1315 = vadd.f32 %v1300, %v1245
      %v1316 = vadd.f32 %v1301, %v1248
      %v1317 = vadd.f32 %v1302, %v1253
      %v1318 = vadd.f32 %v1303, %v1256
      %v1319 = vadd.f32 %v1304, %v1261
      %v1320 = vadd.f32 %v1305, %v1264
      %v1321 = vadd.f32 %v1306, %v1269
      %v1322 = vadd.f32 %v1307, %v1272
      %v1323 = vadd.f32 %v1308, %v1277
      %v1324 = vadd.f32 %v1309, %v1280
      %v1325 = vadd.f32 %v1310, %v1285
      %v1326 = vadd.f32 %v1311, %v1288
      %v1327 = vadd.f32 %v1312, %v1293
      %1328 = vst.msk [vmem:[#allocation2] sm:$0xff] %vm349, %v1313
      %1329 = vst.msk [vmem:[#allocation2 + $0x8] sm:$0xff] %vm349, %v1314
      %1330 = vst.msk [vmem:[#allocation2 + $0x10] sm:$0xff] %vm349, %v1315
      %1331 = vst.msk [vmem:[#allocation2 + $0x18] sm:$0xff] %vm349, %v1316
      %1332 = vst.msk [vmem:[#allocation2 + $0x20] sm:$0xff] %vm349, %v1317
      %1333 = vst.msk [vmem:[#allocation2 + $0x28] sm:$0xff] %vm349, %v1318
      %1334 = vst.msk [vmem:[#allocation2 + $0x30] sm:$0xff] %vm349, %v1319
      %1335 = vst.msk [vmem:[#allocation2 + $0x38] sm:$0xff] %vm349, %v1320
      %1336 = vst.msk [vmem:[#allocation2 + $0x40] sm:$0xff] %vm349, %v1321
      %1337 = vst.msk [vmem:[#allocation2 + $0x48] sm:$0xff] %vm349, %v1322
      %1338 = vst.msk [vmem:[#allocation2 + $0x50] sm:$0xff] %vm349, %v1323
      %1339 = vst.msk [vmem:[#allocation2 + $0x58] sm:$0xff] %vm349, %v1324
      %1340 = vst.msk [vmem:[#allocation2 + $0x60] sm:$0xff] %vm349, %v1325
      %1341 = vst.msk [vmem:[#allocation2 + $0x68] sm:$0xff] %vm349, %v1326
      %1342 = vst.msk [vmem:[#allocation2 + $0x70] sm:$0xff] %vm349, %v1327
      %v1343 = vld [vmem:[%s244 + $0x4] sm:$0xc]
      %v1344 = vld [vmem:[%s244 + $0x8] sm:$0xf]
      %v1345 = vld [vmem:[%s244 + $0xc] sm:$0xf]
      %v1346 = vld [vmem:[%s244 + $0x10] sm:$0xf]
      %v1347 = vld [vmem:[%s244 + $0x14] sm:$0xf]
      %v1348 = vld [vmem:[%s244 + $0x18] sm:$0xf]
      %v1349 = vld [vmem:[%s244 + $0x1c] sm:$0xf]
      %v1350 = vld [vmem:[%s244 + $0x20] sm:$0xf]
      %v1351 = vld [vmem:[%s244 + $0x24] sm:$0xf]
      %v1352 = vld [vmem:[%s244 + $0x28] sm:$0xf]
      %v1353 = vld [vmem:[%s244 + $0x2c] sm:$0xf]
      %v1354 = vld [vmem:[%s244 + $0x30] sm:$0xf]
      %v1355 = vld [vmem:[%s244 + $0x34] sm:$0xf]
      %v1356 = vld [vmem:[%s244 + $0x38] sm:$0xf]
      %v1357 = vld [vmem:[%s244 + $0x3c] sm:$0xf]
      %v1358 = vld [vmem:[%s244 + $0x40] sm:$0x7]
      %s1359 = scalar_lea.vmem %s248, 128
      %v1360 = vld [vmem:[%s1359] sm:$0xf]
      %v1361 = vld [vmem:[%s1359 + $0x4] sm:$0xf]
      %v1362 = vld [vmem:[%s1359 + $0x8] sm:$0xf]
      %v1363 = vld [vmem:[%s1359 + $0xc] sm:$0xf]
      %v1364 = vld [vmem:[%s1359 + $0x10] sm:$0xf]
      %v1365 = vld [vmem:[%s1359 + $0x14] sm:$0xf]
      %v1366 = vld [vmem:[%s1359 + $0x18] sm:$0xf]
      %v1367 = vld [vmem:[%s1359 + $0x1c] sm:$0xf]
      %v1384 = vunpack.c.l.b16 %v1343
      %v1385 = vunpack.c.l.b16 %v1344
      %v1386 = vunpack.c.l.b16 %v1345
      %v1387 = vunpack.c.l.b16 %v1346
      %v1388 = vunpack.c.l.b16 %v1347
      %v1389 = vunpack.c.l.b16 %v1348
      %v1390 = vunpack.c.l.b16 %v1349
      %v1391 = vunpack.c.l.b16 %v1350
      %v1392 = vunpack.c.l.b16 %v1351
      %v1393 = vunpack.c.l.b16 %v1352
      %v1394 = vunpack.c.l.b16 %v1353
      %v1395 = vunpack.c.l.b16 %v1354
      %v1396 = vunpack.c.l.b16 %v1355
      %v1397 = vunpack.c.l.b16 %v1356
      %v1398 = vunpack.c.l.b16 %v1357
      %v1399 = vunpack.c.l.b16 %v1358
      %v1400 = vpack.c.b16 %v1385, %v1384
      %v1401 = vpack.c.b16 %v1387, %v1386
      %v1402 = vpack.c.b16 %v1389, %v1388
      %v1403 = vpack.c.b16 %v1391, %v1390
      %v1404 = vpack.c.b16 %v1393, %v1392
      %v1405 = vpack.c.b16 %v1395, %v1394
      %v1406 = vpack.c.b16 %v1397, %v1396
      %v1407 = vpack.c.b16 %v1399, %v1398
      %vm1408 = vsmask.f32 5376
      %v1410 = vshrl.u32 %v1400, 16
      %v1412 = vrot.slane %v1410, 2
      %v1413 = vshll.u32 %v1400, 16
      %v1415 = vrot.slane %v1413, 3
      %v1416 = vor.u32 %v1412, %v1415
      %v1418 = vshrl.u32 %v1401, 16
      %v1420 = vrot.slane %v1418, 2
      %v1421 = vshll.u32 %v1401, 16
      %v1423 = vrot.slane %v1421, 3
      %v1424 = vor.u32 %v1420, %v1423
      %v1425 = vsel %vm1408, %v1416, %v1424
      %v1427 = vshrl.u32 %v1402, 16
      %v1429 = vrot.slane %v1427, 2
      %v1430 = vshll.u32 %v1402, 16
      %v1432 = vrot.slane %v1430, 3
      %v1433 = vor.u32 %v1429, %v1432
      %v1434 = vsel %vm1408, %v1424, %v1433
      %v1436 = vshrl.u32 %v1403, 16
      %v1438 = vrot.slane %v1436, 2
      %v1439 = vshll.u32 %v1403, 16
      %v1441 = vrot.slane %v1439, 3
      %v1442 = vor.u32 %v1438, %v1441
      %v1443 = vsel %vm1408, %v1433, %v1442
      %v1445 = vshrl.u32 %v1404, 16
      %v1447 = vrot.slane %v1445, 2
      %v1448 = vshll.u32 %v1404, 16
      %v1450 = vrot.slane %v1448, 3
      %v1451 = vor.u32 %v1447, %v1450
      %v1452 = vsel %vm1408, %v1442, %v1451
      %v1454 = vshrl.u32 %v1405, 16
      %v1456 = vrot.slane %v1454, 2
      %v1457 = vshll.u32 %v1405, 16
      %v1459 = vrot.slane %v1457, 3
      %v1460 = vor.u32 %v1456, %v1459
      %v1461 = vsel %vm1408, %v1451, %v1460
      %v1463 = vshrl.u32 %v1406, 16
      %v1465 = vrot.slane %v1463, 2
      %v1466 = vshll.u32 %v1406, 16
      %v1468 = vrot.slane %v1466, 3
      %v1469 = vor.u32 %v1465, %v1468
      %v1470 = vsel %vm1408, %v1460, %v1469
      %v1472 = vshrl.u32 %v1407, 16
      %v1474 = vrot.slane %v1472, 2
      %v1475 = vshll.u32 %v1407, 16
      %v1477 = vrot.slane %v1475, 3
      %v1478 = vor.u32 %v1474, %v1477
      %v1479 = vsel %vm1408, %v1469, %v1478
      %v1488 = vunpack.c.l.b16 %v1360
      %v1489 = vunpack.c.l.b16 %v1361
      %v1490 = vunpack.c.l.b16 %v1362
      %v1491 = vunpack.c.l.b16 %v1363
      %v1492 = vunpack.c.l.b16 %v1364
      %v1493 = vunpack.c.l.b16 %v1365
      %v1494 = vunpack.c.l.b16 %v1366
      %v1495 = vunpack.c.l.b16 %v1367
      %v1496 = vpack.c.b16 %v1489, %v1488
      %v1497 = vpack.c.b16 %v1491, %v1490
      %v1498 = vpack.c.b16 %v1493, %v1492
      %v1499 = vpack.c.b16 %v1495, %v1494
      %v1505 = vsel %vm349, %v1425, 0
      %v1508 = vsel %vm349, %v1434, 0
      %v1511 = vsel %vm349, %v1443, 0
      %v1514 = vsel %vm349, %v1452, 0
      %v1517 = vsel %vm349, %v1461, 0
      %v1520 = vsel %vm349, %v1470, 0
      %v1523 = vsel %vm349, %v1479, 0
      %v1526 = vsel %vm349, %v1478, 0
      %1528 = vmatprep.subr.bf16.mxu0 0
      %1529 = vmatpush1.bf16.msra.mxu0 0
      %1530 = vmatprep.subr.bf16.mxu0 0
      %1531 = vmatpush1.bf16.msra.mxu0 0
      %1532 = vmatprep.subr.bf16.mxu0 0
      %1533 = vmatpush1.bf16.msra.mxu0 0
      %1534 = vmatprep.subr.bf16.mxu0 0
      %1535 = vmatpush1.bf16.msra.mxu0 0
      %1536 = vmatprep.subr.bf16.mxu0 0
      %1537 = vmatpush1.bf16.msra.mxu0 %v1499
      %1538 = vmatprep.subr.bf16.mxu0 0
      %1539 = vmatpush1.bf16.msra.mxu0 %v1498
      %1540 = vmatprep.subr.bf16.mxu0 0
      %1541 = vmatpush1.bf16.msra.mxu0 %v1497
      %1542 = vmatprep.subr.bf16.mxu0 0
      %1543 = vmatpush1.bf16.msra.mxu0 %v1496
      %1544 = vmatprep.subr.bf16.mxu0 0
      %1545 = vmatpush2.bf16.msra.mxu0 0
      %1546 = vmatprep.subr.bf16.mxu0 0
      %1547 = vmatpush2.bf16.msra.mxu0 0
      %1548 = vmatprep.subr.bf16.mxu0 0
      %1549 = vmatpush2.bf16.msra.mxu0 0
      %1550 = vmatprep.subr.bf16.mxu0 0
      %1551 = vmatpush2.bf16.msra.mxu0 0
      %1552 = vmatprep.subr.bf16.mxu0 0
      %1553 = vmatpush2.bf16.msra.mxu0 0
      %1554 = vmatprep.subr.bf16.mxu0 0
      %1555 = vmatpush2.bf16.msra.mxu0 0
      %1556 = vmatprep.subr.bf16.mxu0 0
      %1557 = vmatpush2.bf16.msra.mxu0 0
      %1558 = vmatprep.subr.bf16.mxu0 0
      %1559 = vmatpush2.bf16.msra.mxu0 0
      %1560 = vmatprep.mubr.bf16.mxu0 0
      %1561 = vmatmul.mubr.bf16.gmra.mxu0 %v1505
      %v1562 = vpop.f32.mrf.mxu0
      %v1563 = vadd.f32 0.0, %v1562
      %v1564 = vpop.f32.mrf.mxu0
      %v1565 = vpop.f32.mrf.mxu0
      %v1566 = vadd.f32 0.0, %v1565
      %v1567 = vpop.f32.mrf.mxu0
      %1568 = vmatprep.mubr.bf16.mxu0 0
      %1569 = vmatmul.mubr.bf16.gmra.mxu0 %v1508
      %v1570 = vpop.f32.mrf.mxu0
      %v1571 = vadd.f32 0.0, %v1570
      %v1572 = vpop.f32.mrf.mxu0
      %v1573 = vpop.f32.mrf.mxu0
      %v1574 = vadd.f32 0.0, %v1573
      %v1575 = vpop.f32.mrf.mxu0
      %1576 = vmatprep.mubr.bf16.mxu0 0
      %1577 = vmatmul.mubr.bf16.gmra.mxu0 %v1511
      %v1578 = vpop.f32.mrf.mxu0
      %v1579 = vadd.f32 0.0, %v1578
      %v1580 = vpop.f32.mrf.mxu0
      %v1581 = vpop.f32.mrf.mxu0
      %v1582 = vadd.f32 0.0, %v1581
      %v1583 = vpop.f32.mrf.mxu0
      %1584 = vmatprep.mubr.bf16.mxu0 0
      %1585 = vmatmul.mubr.bf16.gmra.mxu0 %v1514
      %v1586 = vpop.f32.mrf.mxu0
      %v1587 = vadd.f32 0.0, %v1586
      %v1588 = vpop.f32.mrf.mxu0
      %v1589 = vpop.f32.mrf.mxu0
      %v1590 = vadd.f32 0.0, %v1589
      %v1591 = vpop.f32.mrf.mxu0
      %1592 = vmatprep.mubr.bf16.mxu0 0
      %1593 = vmatmul.mubr.bf16.gmra.mxu0 %v1517
      %v1594 = vpop.f32.mrf.mxu0
      %v1595 = vadd.f32 0.0, %v1594
      %v1596 = vpop.f32.mrf.mxu0
      %v1597 = vpop.f32.mrf.mxu0
      %v1598 = vadd.f32 0.0, %v1597
      %v1599 = vpop.f32.mrf.mxu0
      %1600 = vmatprep.mubr.bf16.mxu0 0
      %1601 = vmatmul.mubr.bf16.gmra.mxu0 %v1520
      %v1602 = vpop.f32.mrf.mxu0
      %v1603 = vadd.f32 0.0, %v1602
      %v1604 = vpop.f32.mrf.mxu0
      %v1605 = vpop.f32.mrf.mxu0
      %v1606 = vadd.f32 0.0, %v1605
      %v1607 = vpop.f32.mrf.mxu0
      %1608 = vmatprep.mubr.bf16.mxu0 0
      %1609 = vmatmul.mubr.bf16.gmra.mxu0 %v1523
      %v1610 = vpop.f32.mrf.mxu0
      %v1611 = vadd.f32 0.0, %v1610
      %v1612 = vpop.f32.mrf.mxu0
      %v1613 = vpop.f32.mrf.mxu0
      %v1614 = vadd.f32 0.0, %v1613
      %v1615 = vpop.f32.mrf.mxu0
      %1616 = vmatprep.mubr.bf16.mxu0 0
      %1617 = vmatmul.mubr.bf16.gmra.mxu0 %v1526
      %v1618 = vpop.f32.mrf.mxu0
      %v1619 = vadd.f32 0.0, %v1618
      %v1620 = vpop.f32.mrf.mxu0
      %v1621 = vpop.f32.mrf.mxu0
      %v1622 = vpop.f32.mrf.mxu0
      %1623 = vdwg.mxu0
      %v1624 = vld [vmem:[#allocation2] sm:$0xff]
      %v1625 = vld [vmem:[#allocation2 + $0x8] sm:$0xff]
      %v1626 = vld [vmem:[#allocation2 + $0x10] sm:$0xff]
      %v1627 = vld [vmem:[#allocation2 + $0x18] sm:$0xff]
      %v1628 = vld [vmem:[#allocation2 + $0x20] sm:$0xff]
      %v1629 = vld [vmem:[#allocation2 + $0x28] sm:$0xff]
      %v1630 = vld [vmem:[#allocation2 + $0x30] sm:$0xff]
      %v1631 = vld [vmem:[#allocation2 + $0x38] sm:$0xff]
      %v1632 = vld [vmem:[#allocation2 + $0x40] sm:$0xff]
      %v1633 = vld [vmem:[#allocation2 + $0x48] sm:$0xff]
      %v1634 = vld [vmem:[#allocation2 + $0x50] sm:$0xff]
      %v1635 = vld [vmem:[#allocation2 + $0x58] sm:$0xff]
      %v1636 = vld [vmem:[#allocation2 + $0x60] sm:$0xff]
      %v1637 = vld [vmem:[#allocation2 + $0x68] sm:$0xff]
      %v1638 = vld [vmem:[#allocation2 + $0x70] sm:$0xff]
      %v1639 = vadd.f32 %v1624, %v1563
      %v1640 = vadd.f32 %v1625, %v1566
      %v1641 = vadd.f32 %v1626, %v1571
      %v1642 = vadd.f32 %v1627, %v1574
      %v1643 = vadd.f32 %v1628, %v1579
      %v1644 = vadd.f32 %v1629, %v1582
      %v1645 = vadd.f32 %v1630, %v1587
      %v1646 = vadd.f32 %v1631, %v1590
      %v1647 = vadd.f32 %v1632, %v1595
      %v1648 = vadd.f32 %v1633, %v1598
      %v1649 = vadd.f32 %v1634, %v1603
      %v1650 = vadd.f32 %v1635, %v1606
      %v1651 = vadd.f32 %v1636, %v1611
      %v1652 = vadd.f32 %v1637, %v1614
      %v1653 = vadd.f32 %v1638, %v1619
      %1654 = vst.msk [vmem:[#allocation2] sm:$0xff] %vm349, %v1639
      %1655 = vst.msk [vmem:[#allocation2 + $0x8] sm:$0xff] %vm349, %v1640
      %1656 = vst.msk [vmem:[#allocation2 + $0x10] sm:$0xff] %vm349, %v1641
      %1657 = vst.msk [vmem:[#allocation2 + $0x18] sm:$0xff] %vm349, %v1642
      %1658 = vst.msk [vmem:[#allocation2 + $0x20] sm:$0xff] %vm349, %v1643
      %1659 = vst.msk [vmem:[#allocation2 + $0x28] sm:$0xff] %vm349, %v1644
      %1660 = vst.msk [vmem:[#allocation2 + $0x30] sm:$0xff] %vm349, %v1645
      %1661 = vst.msk [vmem:[#allocation2 + $0x38] sm:$0xff] %vm349, %v1646
      %1662 = vst.msk [vmem:[#allocation2 + $0x40] sm:$0xff] %vm349, %v1647
      %1663 = vst.msk [vmem:[#allocation2 + $0x48] sm:$0xff] %vm349, %v1648
      %1664 = vst.msk [vmem:[#allocation2 + $0x50] sm:$0xff] %vm349, %v1649
      %1665 = vst.msk [vmem:[#allocation2 + $0x58] sm:$0xff] %vm349, %v1650
      %1666 = vst.msk [vmem:[#allocation2 + $0x60] sm:$0xff] %vm349, %v1651
      %1667 = vst.msk [vmem:[#allocation2 + $0x68] sm:$0xff] %vm349, %v1652
      %1668 = vst.msk [vmem:[#allocation2 + $0x70] sm:$0xff] %vm349, %v1653
      %v1669 = vld [vmem:[%s244 + $0x4] sm:$0x8]
      %v1670 = vld [vmem:[%s244 + $0x8] sm:$0xf]
      %v1671 = vld [vmem:[%s244 + $0xc] sm:$0xf]
      %v1672 = vld [vmem:[%s244 + $0x10] sm:$0xf]
      %v1673 = vld [vmem:[%s244 + $0x14] sm:$0xf]
      %v1674 = vld [vmem:[%s244 + $0x18] sm:$0xf]
      %v1675 = vld [vmem:[%s244 + $0x1c] sm:$0xf]
      %v1676 = vld [vmem:[%s244 + $0x20] sm:$0xf]
      %v1677 = vld [vmem:[%s244 + $0x24] sm:$0xf]
      %v1678 = vld [vmem:[%s244 + $0x28] sm:$0xf]
      %v1679 = vld [vmem:[%s244 + $0x2c] sm:$0xf]
      %v1680 = vld [vmem:[%s244 + $0x30] sm:$0xf]
      %v1681 = vld [vmem:[%s244 + $0x34] sm:$0xf]
      %v1682 = vld [vmem:[%s244 + $0x38] sm:$0xf]
      %v1683 = vld [vmem:[%s244 + $0x3c] sm:$0xf]
      %v1684 = vld [vmem:[%s244 + $0x40] sm:$0x7]
      %s1685 = scalar_lea.vmem %s248, 160
      %v1686 = vld [vmem:[%s1685] sm:$0xf]
      %v1687 = vld [vmem:[%s1685 + $0x4] sm:$0xf]
      %v1688 = vld [vmem:[%s1685 + $0x8] sm:$0xf]
      %v1689 = vld [vmem:[%s1685 + $0xc] sm:$0xf]
      %v1690 = vld [vmem:[%s1685 + $0x10] sm:$0xf]
      %v1691 = vld [vmem:[%s1685 + $0x14] sm:$0xf]
      %v1692 = vld [vmem:[%s1685 + $0x18] sm:$0xf]
      %v1693 = vld [vmem:[%s1685 + $0x1c] sm:$0xf]
      %v1710 = vunpack.c.l.b16 %v1669
      %v1711 = vunpack.c.l.b16 %v1670
      %v1712 = vunpack.c.l.b16 %v1671
      %v1713 = vunpack.c.l.b16 %v1672
      %v1714 = vunpack.c.l.b16 %v1673
      %v1715 = vunpack.c.l.b16 %v1674
      %v1716 = vunpack.c.l.b16 %v1675
      %v1717 = vunpack.c.l.b16 %v1676
      %v1718 = vunpack.c.l.b16 %v1677
      %v1719 = vunpack.c.l.b16 %v1678
      %v1720 = vunpack.c.l.b16 %v1679
      %v1721 = vunpack.c.l.b16 %v1680
      %v1722 = vunpack.c.l.b16 %v1681
      %v1723 = vunpack.c.l.b16 %v1682
      %v1724 = vunpack.c.l.b16 %v1683
      %v1725 = vunpack.c.l.b16 %v1684
      %v1726 = vpack.c.b16 %v1711, %v1710
      %v1727 = vpack.c.b16 %v1713, %v1712
      %v1728 = vpack.c.b16 %v1715, %v1714
      %v1729 = vpack.c.b16 %v1717, %v1716
      %v1730 = vpack.c.b16 %v1719, %v1718
      %v1731 = vpack.c.b16 %v1721, %v1720
      %v1732 = vpack.c.b16 %v1723, %v1722
      %v1733 = vpack.c.b16 %v1725, %v1724
      %vm1734 = vcmask 1044480
      %v1735 = vrot.slane %v1726, 3
      %v1736 = vrot.slane %v1727, 3
      %v1737 = vsel %vm1734, %v1735, %v1736
      %v1738 = vrot.slane %v1728, 3
      %v1739 = vsel %vm1734, %v1736, %v1738
      %v1740 = vrot.slane %v1729, 3
      %v1741 = vsel %vm1734, %v1738, %v1740
      %v1742 = vrot.slane %v1730, 3
      %v1743 = vsel %vm1734, %v1740, %v1742
      %v1744 = vrot.slane %v1731, 3
      %v1745 = vsel %vm1734, %v1742, %v1744
      %v1746 = vrot.slane %v1732, 3
      %v1747 = vsel %vm1734, %v1744, %v1746
      %v1748 = vrot.slane %v1733, 3
      %v1749 = vsel %vm1734, %v1746, %v1748
      %v1758 = vunpack.c.l.b16 %v1686
      %v1759 = vunpack.c.l.b16 %v1687
      %v1760 = vunpack.c.l.b16 %v1688
      %v1761 = vunpack.c.l.b16 %v1689
      %v1762 = vunpack.c.l.b16 %v1690
      %v1763 = vunpack.c.l.b16 %v1691
      %v1764 = vunpack.c.l.b16 %v1692
      %v1765 = vunpack.c.l.b16 %v1693
      %v1766 = vpack.c.b16 %v1759, %v1758
      %v1767 = vpack.c.b16 %v1761, %v1760
      %v1768 = vpack.c.b16 %v1763, %v1762
      %v1769 = vpack.c.b16 %v1765, %v1764
      %v1775 = vsel %vm349, %v1737, 0
      %v1778 = vsel %vm349, %v1739, 0
      %v1781 = vsel %vm349, %v1741, 0
      %v1784 = vsel %vm349, %v1743, 0
      %v1787 = vsel %vm349, %v1745, 0
      %v1790 = vsel %vm349, %v1747, 0
      %v1793 = vsel %vm349, %v1749, 0
      %v1796 = vsel %vm349, %v1748, 0
      %1798 = vmatprep.subr.bf16.mxu0 0
      %1799 = vmatpush1.bf16.msra.mxu0 0
      %1800 = vmatprep.subr.bf16.mxu0 0
      %1801 = vmatpush1.bf16.msra.mxu0 0
      %1802 = vmatprep.subr.bf16.mxu0 0
      %1803 = vmatpush1.bf16.msra.mxu0 0
      %1804 = vmatprep.subr.bf16.mxu0 0
      %1805 = vmatpush1.bf16.msra.mxu0 0
      %1806 = vmatprep.subr.bf16.mxu0 0
      %1807 = vmatpush1.bf16.msra.mxu0 %v1769
      %1808 = vmatprep.subr.bf16.mxu0 0
      %1809 = vmatpush1.bf16.msra.mxu0 %v1768
      %1810 = vmatprep.subr.bf16.mxu0 0
      %1811 = vmatpush1.bf16.msra.mxu0 %v1767
      %1812 = vmatprep.subr.bf16.mxu0 0
      %1813 = vmatpush1.bf16.msra.mxu0 %v1766
      %1814 = vmatprep.subr.bf16.mxu0 0
      %1815 = vmatpush2.bf16.msra.mxu0 0
      %1816 = vmatprep.subr.bf16.mxu0 0
      %1817 = vmatpush2.bf16.msra.mxu0 0
      %1818 = vmatprep.subr.bf16.mxu0 0
      %1819 = vmatpush2.bf16.msra.mxu0 0
      %1820 = vmatprep.subr.bf16.mxu0 0
      %1821 = vmatpush2.bf16.msra.mxu0 0
      %1822 = vmatprep.subr.bf16.mxu0 0
      %1823 = vmatpush2.bf16.msra.mxu0 0
      %1824 = vmatprep.subr.bf16.mxu0 0
      %1825 = vmatpush2.bf16.msra.mxu0 0
      %1826 = vmatprep.subr.bf16.mxu0 0
      %1827 = vmatpush2.bf16.msra.mxu0 0
      %1828 = vmatprep.subr.bf16.mxu0 0
      %1829 = vmatpush2.bf16.msra.mxu0 0
      %1830 = vmatprep.mubr.bf16.mxu0 0
      %1831 = vmatmul.mubr.bf16.gmra.mxu0 %v1775
      %v1832 = vpop.f32.mrf.mxu0
      %v1833 = vadd.f32 0.0, %v1832
      %v1834 = vpop.f32.mrf.mxu0
      %v1835 = vpop.f32.mrf.mxu0
      %v1836 = vadd.f32 0.0, %v1835
      %v1837 = vpop.f32.mrf.mxu0
      %1838 = vmatprep.mubr.bf16.mxu0 0
      %1839 = vmatmul.mubr.bf16.gmra.mxu0 %v1778
      %v1840 = vpop.f32.mrf.mxu0
      %v1841 = vadd.f32 0.0, %v1840
      %v1842 = vpop.f32.mrf.mxu0
      %v1843 = vpop.f32.mrf.mxu0
      %v1844 = vadd.f32 0.0, %v1843
      %v1845 = vpop.f32.mrf.mxu0
      %1846 = vmatprep.mubr.bf16.mxu0 0
      %1847 = vmatmul.mubr.bf16.gmra.mxu0 %v1781
      %v1848 = vpop.f32.mrf.mxu0
      %v1849 = vadd.f32 0.0, %v1848
      %v1850 = vpop.f32.mrf.mxu0
      %v1851 = vpop.f32.mrf.mxu0
      %v1852 = vadd.f32 0.0, %v1851
      %v1853 = vpop.f32.mrf.mxu0
      %1854 = vmatprep.mubr.bf16.mxu0 0
      %1855 = vmatmul.mubr.bf16.gmra.mxu0 %v1784
      %v1856 = vpop.f32.mrf.mxu0
      %v1857 = vadd.f32 0.0, %v1856
      %v1858 = vpop.f32.mrf.mxu0
      %v1859 = vpop.f32.mrf.mxu0
      %v1860 = vadd.f32 0.0, %v1859
      %v1861 = vpop.f32.mrf.mxu0
      %1862 = vmatprep.mubr.bf16.mxu0 0
      %1863 = vmatmul.mubr.bf16.gmra.mxu0 %v1787
      %v1864 = vpop.f32.mrf.mxu0
      %v1865 = vadd.f32 0.0, %v1864
      %v1866 = vpop.f32.mrf.mxu0
      %v1867 = vpop.f32.mrf.mxu0
      %v1868 = vadd.f32 0.0, %v1867
      %v1869 = vpop.f32.mrf.mxu0
      %1870 = vmatprep.mubr.bf16.mxu0 0
      %1871 = vmatmul.mubr.bf16.gmra.mxu0 %v1790
      %v1872 = vpop.f32.mrf.mxu0
      %v1873 = vadd.f32 0.0, %v1872
      %v1874 = vpop.f32.mrf.mxu0
      %v1875 = vpop.f32.mrf.mxu0
      %v1876 = vadd.f32 0.0, %v1875
      %v1877 = vpop.f32.mrf.mxu0
      %1878 = vmatprep.mubr.bf16.mxu0 0
      %1879 = vmatmul.mubr.bf16.gmra.mxu0 %v1793
      %v1880 = vpop.f32.mrf.mxu0
      %v1881 = vadd.f32 0.0, %v1880
      %v1882 = vpop.f32.mrf.mxu0
      %v1883 = vpop.f32.mrf.mxu0
      %v1884 = vadd.f32 0.0, %v1883
      %v1885 = vpop.f32.mrf.mxu0
      %1886 = vmatprep.mubr.bf16.mxu0 0
      %1887 = vmatmul.mubr.bf16.gmra.mxu0 %v1796
      %v1888 = vpop.f32.mrf.mxu0
      %v1889 = vadd.f32 0.0, %v1888
      %v1890 = vpop.f32.mrf.mxu0
      %v1891 = vpop.f32.mrf.mxu0
      %v1892 = vpop.f32.mrf.mxu0
      %1893 = vdwg.mxu0
      %v1894 = vld [vmem:[#allocation2] sm:$0xff]
      %v1895 = vld [vmem:[#allocation2 + $0x8] sm:$0xff]
      %v1896 = vld [vmem:[#allocation2 + $0x10] sm:$0xff]
      %v1897 = vld [vmem:[#allocation2 + $0x18] sm:$0xff]
      %v1898 = vld [vmem:[#allocation2 + $0x20] sm:$0xff]
      %v1899 = vld [vmem:[#allocation2 + $0x28] sm:$0xff]
      %v1900 = vld [vmem:[#allocation2 + $0x30] sm:$0xff]
      %v1901 = vld [vmem:[#allocation2 + $0x38] sm:$0xff]
      %v1902 = vld [vmem:[#allocation2 + $0x40] sm:$0xff]
      %v1903 = vld [vmem:[#allocation2 + $0x48] sm:$0xff]
      %v1904 = vld [vmem:[#allocation2 + $0x50] sm:$0xff]
      %v1905 = vld [vmem:[#allocation2 + $0x58] sm:$0xff]
      %v1906 = vld [vmem:[#allocation2 + $0x60] sm:$0xff]
      %v1907 = vld [vmem:[#allocation2 + $0x68] sm:$0xff]
      %v1908 = vld [vmem:[#allocation2 + $0x70] sm:$0xff]
      %v1909 = vadd.f32 %v1894, %v1833
      %v1910 = vadd.f32 %v1895, %v1836
      %v1911 = vadd.f32 %v1896, %v1841
      %v1912 = vadd.f32 %v1897, %v1844
      %v1913 = vadd.f32 %v1898, %v1849
      %v1914 = vadd.f32 %v1899, %v1852
      %v1915 = vadd.f32 %v1900, %v1857
      %v1916 = vadd.f32 %v1901, %v1860
      %v1917 = vadd.f32 %v1902, %v1865
      %v1918 = vadd.f32 %v1903, %v1868
      %v1919 = vadd.f32 %v1904, %v1873
      %v1920 = vadd.f32 %v1905, %v1876
      %v1921 = vadd.f32 %v1906, %v1881
      %v1922 = vadd.f32 %v1907, %v1884
      %v1923 = vadd.f32 %v1908, %v1889
      %1924 = vst.msk [vmem:[#allocation2] sm:$0xff] %vm349, %v1909
      %1925 = vst.msk [vmem:[#allocation2 + $0x8] sm:$0xff] %vm349, %v1910
      %1926 = vst.msk [vmem:[#allocation2 + $0x10] sm:$0xff] %vm349, %v1911
      %1927 = vst.msk [vmem:[#allocation2 + $0x18] sm:$0xff] %vm349, %v1912
      %1928 = vst.msk [vmem:[#allocation2 + $0x20] sm:$0xff] %vm349, %v1913
      %1929 = vst.msk [vmem:[#allocation2 + $0x28] sm:$0xff] %vm349, %v1914
      %1930 = vst.msk [vmem:[#allocation2 + $0x30] sm:$0xff] %vm349, %v1915
      %1931 = vst.msk [vmem:[#allocation2 + $0x38] sm:$0xff] %vm349, %v1916
      %1932 = vst.msk [vmem:[#allocation2 + $0x40] sm:$0xff] %vm349, %v1917
      %1933 = vst.msk [vmem:[#allocation2 + $0x48] sm:$0xff] %vm349, %v1918
      %1934 = vst.msk [vmem:[#allocation2 + $0x50] sm:$0xff] %vm349, %v1919
      %1935 = vst.msk [vmem:[#allocation2 + $0x58] sm:$0xff] %vm349, %v1920
      %1936 = vst.msk [vmem:[#allocation2 + $0x60] sm:$0xff] %vm349, %v1921
      %1937 = vst.msk [vmem:[#allocation2 + $0x68] sm:$0xff] %vm349, %v1922
      %1938 = vst.msk [vmem:[#allocation2 + $0x70] sm:$0xff] %vm349, %v1923
      %v1939 = vld [vmem:[%s244 + $0xc] sm:$0xf]
      %v1940 = vld [vmem:[%s244 + $0x10] sm:$0xf]
      %v1941 = vld [vmem:[%s244 + $0x14] sm:$0xf]
      %v1942 = vld [vmem:[%s244 + $0x18] sm:$0xf]
      %v1943 = vld [vmem:[%s244 + $0x1c] sm:$0xf]
      %v1944 = vld [vmem:[%s244 + $0x20] sm:$0xf]
      %v1945 = vld [vmem:[%s244 + $0x24] sm:$0xf]
      %v1946 = vld [vmem:[%s244 + $0x28] sm:$0xf]
      %v1947 = vld [vmem:[%s244 + $0x2c] sm:$0xf]
      %v1948 = vld [vmem:[%s244 + $0x30] sm:$0xf]
      %v1949 = vld [vmem:[%s244 + $0x34] sm:$0xf]
      %v1950 = vld [vmem:[%s244 + $0x38] sm:$0xf]
      %v1951 = vld [vmem:[%s244 + $0x3c] sm:$0xf]
      %v1952 = vld [vmem:[%s244 + $0x40] sm:$0xf]
      %v1953 = vld [vmem:[%s244 + $0x44] sm:$0xf]
      %s1954 = scalar_lea.vmem %s248, 192
      %v1955 = vld [vmem:[%s1954] sm:$0xf]
      %v1956 = vld [vmem:[%s1954 + $0x4] sm:$0xf]
      %v1957 = vld [vmem:[%s1954 + $0x8] sm:$0xf]
      %v1958 = vld [vmem:[%s1954 + $0xc] sm:$0xf]
      %v1959 = vld [vmem:[%s1954 + $0x10] sm:$0xf]
      %v1960 = vld [vmem:[%s1954 + $0x14] sm:$0xf]
      %v1961 = vld [vmem:[%s1954 + $0x18] sm:$0xf]
      %v1962 = vld [vmem:[%s1954 + $0x1c] sm:$0xf]
      %v1978 = vunpack.c.l.b16 %v1939
      %v1979 = vunpack.c.l.b16 %v1940
      %v1980 = vunpack.c.l.b16 %v1941
      %v1981 = vunpack.c.l.b16 %v1942
      %v1982 = vunpack.c.l.b16 %v1943
      %v1983 = vunpack.c.l.b16 %v1944
      %v1984 = vunpack.c.l.b16 %v1945
      %v1985 = vunpack.c.l.b16 %v1946
      %v1986 = vunpack.c.l.b16 %v1947
      %v1987 = vunpack.c.l.b16 %v1948
      %v1988 = vunpack.c.l.b16 %v1949
      %v1989 = vunpack.c.l.b16 %v1950
      %v1990 = vunpack.c.l.b16 %v1951
      %v1991 = vunpack.c.l.b16 %v1952
      %v1992 = vunpack.c.l.b16 %v1953
      %v1993 = vpack.c.b16 %v1979, %v1978
      %v1994 = vpack.c.b16 %v1981, %v1980
      %v1995 = vpack.c.b16 %v1983, %v1982
      %v1996 = vpack.c.b16 %v1985, %v1984
      %v1997 = vpack.c.b16 %v1987, %v1986
      %v1998 = vpack.c.b16 %v1989, %v1988
      %v1999 = vpack.c.b16 %v1991, %v1990
      %v2000 = vpack.c.b16 %v1992, %v1992
      %v2009 = vunpack.c.l.b16 %v1955
      %v2010 = vunpack.c.l.b16 %v1956
      %v2011 = vunpack.c.l.b16 %v1957
      %v2012 = vunpack.c.l.b16 %v1958
      %v2013 = vunpack.c.l.b16 %v1959
      %v2014 = vunpack.c.l.b16 %v1960
      %v2015 = vunpack.c.l.b16 %v1961
      %v2016 = vunpack.c.l.b16 %v1962
      %v2017 = vpack.c.b16 %v2010, %v2009
      %v2018 = vpack.c.b16 %v2012, %v2011
      %v2019 = vpack.c.b16 %v2014, %v2013
      %v2020 = vpack.c.b16 %v2016, %v2015
      %v2026 = vsel %vm349, %v1993, 0
      %v2029 = vsel %vm349, %v1994, 0
      %v2032 = vsel %vm349, %v1995, 0
      %v2035 = vsel %vm349, %v1996, 0
      %v2038 = vsel %vm349, %v1997, 0
      %v2041 = vsel %vm349, %v1998, 0
      %v2044 = vsel %vm349, %v1999, 0
      %v2047 = vsel %vm349, %v2000, 0
      %2049 = vmatprep.subr.bf16.mxu0 0
      %2050 = vmatpush1.bf16.msra.mxu0 0
      %2051 = vmatprep.subr.bf16.mxu0 0
      %2052 = vmatpush1.bf16.msra.mxu0 0
      %2053 = vmatprep.subr.bf16.mxu0 0
      %2054 = vmatpush1.bf16.msra.mxu0 0
      %2055 = vmatprep.subr.bf16.mxu0 0
      %2056 = vmatpush1.bf16.msra.mxu0 0
      %2057 = vmatprep.subr.bf16.mxu0 0
      %2058 = vmatpush1.bf16.msra.mxu0 %v2020
      %2059 = vmatprep.subr.bf16.mxu0 0
      %2060 = vmatpush1.bf16.msra.mxu0 %v2019
      %2061 = vmatprep.subr.bf16.mxu0 0
      %2062 = vmatpush1.bf16.msra.mxu0 %v2018
      %2063 = vmatprep.subr.bf16.mxu0 0
      %2064 = vmatpush1.bf16.msra.mxu0 %v2017
      %2065 = vmatprep.subr.bf16.mxu0 0
      %2066 = vmatpush2.bf16.msra.mxu0 0
      %2067 = vmatprep.subr.bf16.mxu0 0
      %2068 = vmatpush2.bf16.msra.mxu0 0
      %2069 = vmatprep.subr.bf16.mxu0 0
      %2070 = vmatpush2.bf16.msra.mxu0 0
      %2071 = vmatprep.subr.bf16.mxu0 0
      %2072 = vmatpush2.bf16.msra.mxu0 0
      %2073 = vmatprep.subr.bf16.mxu0 0
      %2074 = vmatpush2.bf16.msra.mxu0 0
      %2075 = vmatprep.subr.bf16.mxu0 0
      %2076 = vmatpush2.bf16.msra.mxu0 0
      %2077 = vmatprep.subr.bf16.mxu0 0
      %2078 = vmatpush2.bf16.msra.mxu0 0
      %2079 = vmatprep.subr.bf16.mxu0 0
      %2080 = vmatpush2.bf16.msra.mxu0 0
      %2081 = vmatprep.mubr.bf16.mxu0 0
      %2082 = vmatmul.mubr.bf16.gmra.mxu0 %v2026
      %v2083 = vpop.f32.mrf.mxu0
      %v2084 = vadd.f32 0.0, %v2083
      %v2085 = vpop.f32.mrf.mxu0
      %v2086 = vpop.f32.mrf.mxu0
      %v2087 = vadd.f32 0.0, %v2086
      %v2088 = vpop.f32.mrf.mxu0
      %2089 = vmatprep.mubr.bf16.mxu0 0
      %2090 = vmatmul.mubr.bf16.gmra.mxu0 %v2029
      %v2091 = vpop.f32.mrf.mxu0
      %v2092 = vadd.f32 0.0, %v2091
      %v2093 = vpop.f32.mrf.mxu0
      %v2094 = vpop.f32.mrf.mxu0
      %v2095 = vadd.f32 0.0, %v2094
      %v2096 = vpop.f32.mrf.mxu0
      %2097 = vmatprep.mubr.bf16.mxu0 0
      %2098 = vmatmul.mubr.bf16.gmra.mxu0 %v2032
      %v2099 = vpop.f32.mrf.mxu0
      %v2100 = vadd.f32 0.0, %v2099
      %v2101 = vpop.f32.mrf.mxu0
      %v2102 = vpop.f32.mrf.mxu0
      %v2103 = vadd.f32 0.0, %v2102
      %v2104 = vpop.f32.mrf.mxu0
      %2105 = vmatprep.mubr.bf16.mxu0 0
      %2106 = vmatmul.mubr.bf16.gmra.mxu0 %v2035
      %v2107 = vpop.f32.mrf.mxu0
      %v2108 = vadd.f32 0.0, %v2107
      %v2109 = vpop.f32.mrf.mxu0
      %v2110 = vpop.f32.mrf.mxu0
      %v2111 = vadd.f32 0.0, %v2110
      %v2112 = vpop.f32.mrf.mxu0
      %2113 = vmatprep.mubr.bf16.mxu0 0
      %2114 = vmatmul.mubr.bf16.gmra.mxu0 %v2038
      %v2115 = vpop.f32.mrf.mxu0
      %v2116 = vadd.f32 0.0, %v2115
      %v2117 = vpop.f32.mrf.mxu0
      %v2118 = vpop.f32.mrf.mxu0
      %v2119 = vadd.f32 0.0, %v2118
      %v2120 = vpop.f32.mrf.mxu0
      %2121 = vmatprep.mubr.bf16.mxu0 0
      %2122 = vmatmul.mubr.bf16.gmra.mxu0 %v2041
      %v2123 = vpop.f32.mrf.mxu0
      %v2124 = vadd.f32 0.0, %v2123
      %v2125 = vpop.f32.mrf.mxu0
      %v2126 = vpop.f32.mrf.mxu0
      %v2127 = vadd.f32 0.0, %v2126
      %v2128 = vpop.f32.mrf.mxu0
      %2129 = vmatprep.mubr.bf16.mxu0 0
      %2130 = vmatmul.mubr.bf16.gmra.mxu0 %v2044
      %v2131 = vpop.f32.mrf.mxu0
      %v2132 = vadd.f32 0.0, %v2131
      %v2133 = vpop.f32.mrf.mxu0
      %v2134 = vpop.f32.mrf.mxu0
      %v2135 = vadd.f32 0.0, %v2134
      %v2136 = vpop.f32.mrf.mxu0
      %2137 = vmatprep.mubr.bf16.mxu0 0
      %2138 = vmatmul.mubr.bf16.gmra.mxu0 %v2047
      %v2139 = vpop.f32.mrf.mxu0
      %v2140 = vadd.f32 0.0, %v2139
      %v2141 = vpop.f32.mrf.mxu0
      %v2142 = vpop.f32.mrf.mxu0
      %v2143 = vpop.f32.mrf.mxu0
      %2144 = vdwg.mxu0
      %v2145 = vld [vmem:[#allocation2] sm:$0xff]
      %v2146 = vld [vmem:[#allocation2 + $0x8] sm:$0xff]
      %v2147 = vld [vmem:[#allocation2 + $0x10] sm:$0xff]
      %v2148 = vld [vmem:[#allocation2 + $0x18] sm:$0xff]
      %v2149 = vld [vmem:[#allocation2 + $0x20] sm:$0xff]
      %v2150 = vld [vmem:[#allocation2 + $0x28] sm:$0xff]
      %v2151 = vld [vmem:[#allocation2 + $0x30] sm:$0xff]
      %v2152 = vld [vmem:[#allocation2 + $0x38] sm:$0xff]
      %v2153 = vld [vmem:[#allocation2 + $0x40] sm:$0xff]
      %v2154 = vld [vmem:[#allocation2 + $0x48] sm:$0xff]
      %v2155 = vld [vmem:[#allocation2 + $0x50] sm:$0xff]
      %v2156 = vld [vmem:[#allocation2 + $0x58] sm:$0xff]
      %v2157 = vld [vmem:[#allocation2 + $0x60] sm:$0xff]
      %v2158 = vld [vmem:[#allocation2 + $0x68] sm:$0xff]
      %v2159 = vld [vmem:[#allocation2 + $0x70] sm:$0xff]
      %v2160 = vadd.f32 %v2145, %v2084
      %v2161 = vadd.f32 %v2146, %v2087
      %v2162 = vadd.f32 %v2147, %v2092
      %v2163 = vadd.f32 %v2148, %v2095
      %v2164 = vadd.f32 %v2149, %v2100
      %v2165 = vadd.f32 %v2150, %v2103
      %v2166 = vadd.f32 %v2151, %v2108
      %v2167 = vadd.f32 %v2152, %v2111
      %v2168 = vadd.f32 %v2153, %v2116
      %v2169 = vadd.f32 %v2154, %v2119
      %v2170 = vadd.f32 %v2155, %v2124
      %v2171 = vadd.f32 %v2156, %v2127
      %v2172 = vadd.f32 %v2157, %v2132
      %v2173 = vadd.f32 %v2158, %v2135
      %v2174 = vadd.f32 %v2159, %v2140
      %2175 = vst.msk [vmem:[#allocation2] sm:$0xff] %vm349, %v2160
      %2176 = vst.msk [vmem:[#allocation2 + $0x8] sm:$0xff] %vm349, %v2161
      %2177 = vst.msk [vmem:[#allocation2 + $0x10] sm:$0xff] %vm349, %v2162
      %2178 = vst.msk [vmem:[#allocation2 + $0x18] sm:$0xff] %vm349, %v2163
      %2179 = vst.msk [vmem:[#allocation2 + $0x20] sm:$0xff] %vm349, %v2164
      %2180 = vst.msk [vmem:[#allocation2 + $0x28] sm:$0xff] %vm349, %v2165
      %2181 = vst.msk [vmem:[#allocation2 + $0x30] sm:$0xff] %vm349, %v2166
      %2182 = vst.msk [vmem:[#allocation2 + $0x38] sm:$0xff] %vm349, %v2167
      %2183 = vst.msk [vmem:[#allocation2 + $0x40] sm:$0xff] %vm349, %v2168
      %2184 = vst.msk [vmem:[#allocation2 + $0x48] sm:$0xff] %vm349, %v2169
      %2185 = vst.msk [vmem:[#allocation2 + $0x50] sm:$0xff] %vm349, %v2170
      %2186 = vst.msk [vmem:[#allocation2 + $0x58] sm:$0xff] %vm349, %v2171
      %2187 = vst.msk [vmem:[#allocation2 + $0x60] sm:$0xff] %vm349, %v2172
      %2188 = vst.msk [vmem:[#allocation2 + $0x68] sm:$0xff] %vm349, %v2173
      %2189 = vst.msk [vmem:[#allocation2 + $0x70] sm:$0xff] %vm349, %v2174
      %v2190 = vld [vmem:[%s244 + $0xc] sm:$0xf]
      %v2191 = vld [vmem:[%s244 + $0x10] sm:$0xf]
      %v2192 = vld [vmem:[%s244 + $0x14] sm:$0xf]
      %v2193 = vld [vmem:[%s244 + $0x18] sm:$0xf]
      %v2194 = vld [vmem:[%s244 + $0x1c] sm:$0xf]
      %v2195 = vld [vmem:[%s244 + $0x20] sm:$0xf]
      %v2196 = vld [vmem:[%s244 + $0x24] sm:$0xf]
      %v2197 = vld [vmem:[%s244 + $0x28] sm:$0xf]
      %v2198 = vld [vmem:[%s244 + $0x2c] sm:$0xf]
      %v2199 = vld [vmem:[%s244 + $0x30] sm:$0xf]
      %v2200 = vld [vmem:[%s244 + $0x34] sm:$0xf]
      %v2201 = vld [vmem:[%s244 + $0x38] sm:$0xf]
      %v2202 = vld [vmem:[%s244 + $0x3c] sm:$0xf]
      %v2203 = vld [vmem:[%s244 + $0x40] sm:$0xf]
      %v2204 = vld [vmem:[%s244 + $0x44] sm:$0xf]
      %v2205 = vld [vmem:[%s244 + $0x48] sm:$0x1]
      %s2206 = scalar_lea.vmem %s248, 224
      %v2207 = vld [vmem:[%s2206] sm:$0xf]
      %v2208 = vld [vmem:[%s2206 + $0x4] sm:$0xf]
      %v2209 = vld [vmem:[%s2206 + $0x8] sm:$0xf]
      %v2210 = vld [vmem:[%s2206 + $0xc] sm:$0xf]
      %v2211 = vld [vmem:[%s2206 + $0x10] sm:$0xf]
      %v2212 = vld [vmem:[%s2206 + $0x14] sm:$0xf]
      %v2213 = vld [vmem:[%s2206 + $0x18] sm:$0xf]
      %v2214 = vld [vmem:[%s2206 + $0x1c] sm:$0xf]
      %v2231 = vunpack.c.l.b16 %v2190
      %v2232 = vunpack.c.l.b16 %v2191
      %v2233 = vunpack.c.l.b16 %v2192
      %v2234 = vunpack.c.l.b16 %v2193
      %v2235 = vunpack.c.l.b16 %v2194
      %v2236 = vunpack.c.l.b16 %v2195
      %v2237 = vunpack.c.l.b16 %v2196
      %v2238 = vunpack.c.l.b16 %v2197
      %v2239 = vunpack.c.l.b16 %v2198
      %v2240 = vunpack.c.l.b16 %v2199
      %v2241 = vunpack.c.l.b16 %v2200
      %v2242 = vunpack.c.l.b16 %v2201
      %v2243 = vunpack.c.l.b16 %v2202
      %v2244 = vunpack.c.l.b16 %v2203
      %v2245 = vunpack.c.l.b16 %v2204
      %v2246 = vunpack.c.l.b16 %v2205
      %v2247 = vpack.c.b16 %v2232, %v2231
      %v2248 = vpack.c.b16 %v2234, %v2233
      %v2249 = vpack.c.b16 %v2236, %v2235
      %v2250 = vpack.c.b16 %v2238, %v2237
      %v2251 = vpack.c.b16 %v2240, %v2239
      %v2252 = vpack.c.b16 %v2242, %v2241
      %v2253 = vpack.c.b16 %v2244, %v2243
      %v2254 = vpack.c.b16 %v2246, %v2245
      %v2256 = vshrl.u32 %v2247, 16
      %v2258 = vshll.u32 %v2247, 16
      %v2260 = vrot.slane %v2258, 1
      %v2261 = vor.u32 %v2256, %v2260
      %v2263 = vshll.u32 %v2248, 16
      %v2265 = vrot.slane %v2263, 1
      %v2266 = vsel %vm550, %v2261, %v2265
      %v2267 = vshrl.u32 %v2248, 16
      %v2269 = vor.u32 %v2267, %v2265
      %v2271 = vshll.u32 %v2249, 16
      %v2273 = vrot.slane %v2271, 1
      %v2274 = vsel %vm550, %v2269, %v2273
      %v2275 = vshrl.u32 %v2249, 16
      %v2277 = vor.u32 %v2275, %v2273
      %v2279 = vshll.u32 %v2250, 16
      %v2281 = vrot.slane %v2279, 1
      %v2282 = vsel %vm550, %v2277, %v2281
      %v2283 = vshrl.u32 %v2250, 16
      %v2285 = vor.u32 %v2283, %v2281
      %v2287 = vshll.u32 %v2251, 16
      %v2289 = vrot.slane %v2287, 1
      %v2290 = vsel %vm550, %v2285, %v2289
      %v2291 = vshrl.u32 %v2251, 16
      %v2293 = vor.u32 %v2291, %v2289
      %v2295 = vshll.u32 %v2252, 16
      %v2297 = vrot.slane %v2295, 1
      %v2298 = vsel %vm550, %v2293, %v2297
      %v2299 = vshrl.u32 %v2252, 16
      %v2301 = vor.u32 %v2299, %v2297
      %v2303 = vshll.u32 %v2253, 16
      %v2305 = vrot.slane %v2303, 1
      %v2306 = vsel %vm550, %v2301, %v2305
      %v2307 = vshrl.u32 %v2253, 16
      %v2309 = vor.u32 %v2307, %v2305
      %v2311 = vshll.u32 %v2254, 16
      %v2313 = vrot.slane %v2311, 1
      %v2314 = vsel %vm550, %v2309, %v2313
      %v2315 = vshrl.u32 %v2254, 16
      %v2317 = vor.u32 %v2315, %v2313
      %v2326 = vunpack.c.l.b16 %v2207
      %v2327 = vunpack.c.l.b16 %v2208
      %v2328 = vunpack.c.l.b16 %v2209
      %v2329 = vunpack.c.l.b16 %v2210
      %v2330 = vunpack.c.l.b16 %v2211
      %v2331 = vunpack.c.l.b16 %v2212
      %v2332 = vunpack.c.l.b16 %v2213
      %v2333 = vunpack.c.l.b16 %v2214
      %v2334 = vpack.c.b16 %v2327, %v2326
      %v2335 = vpack.c.b16 %v2329, %v2328
      %v2336 = vpack.c.b16 %v2331, %v2330
      %v2337 = vpack.c.b16 %v2333, %v2332
      %v2343 = vsel %vm349, %v2266, 0
      %v2346 = vsel %vm349, %v2274, 0
      %v2349 = vsel %vm349, %v2282, 0
      %v2352 = vsel %vm349, %v2290, 0
      %v2355 = vsel %vm349, %v2298, 0
      %v2358 = vsel %vm349, %v2306, 0
      %v2361 = vsel %vm349, %v2314, 0
      %v2364 = vsel %vm349, %v2317, 0
      %2366 = vmatprep.subr.bf16.mxu0 0
      %2367 = vmatpush1.bf16.msra.mxu0 0
      %2368 = vmatprep.subr.bf16.mxu0 0
      %2369 = vmatpush1.bf16.msra.mxu0 0
      %2370 = vmatprep.subr.bf16.mxu0 0
      %2371 = vmatpush1.bf16.msra.mxu0 0
      %2372 = vmatprep.subr.bf16.mxu0 0
      %2373 = vmatpush1.bf16.msra.mxu0 0
      %2374 = vmatprep.subr.bf16.mxu0 0
      %2375 = vmatpush1.bf16.msra.mxu0 %v2337
      %2376 = vmatprep.subr.bf16.mxu0 0
      %2377 = vmatpush1.bf16.msra.mxu0 %v2336
      %2378 = vmatprep.subr.bf16.mxu0 0
      %2379 = vmatpush1.bf16.msra.mxu0 %v2335
      %2380 = vmatprep.subr.bf16.mxu0 0
      %2381 = vmatpush1.bf16.msra.mxu0 %v2334
      %2382 = vmatprep.subr.bf16.mxu0 0
      %2383 = vmatpush2.bf16.msra.mxu0 0
      %2384 = vmatprep.subr.bf16.mxu0 0
      %2385 = vmatpush2.bf16.msra.mxu0 0
      %2386 = vmatprep.subr.bf16.mxu0 0
      %2387 = vmatpush2.bf16.msra.mxu0 0
      %2388 = vmatprep.subr.bf16.mxu0 0
      %2389 = vmatpush2.bf16.msra.mxu0 0
      %2390 = vmatprep.subr.bf16.mxu0 0
      %2391 = vmatpush2.bf16.msra.mxu0 0
      %2392 = vmatprep.subr.bf16.mxu0 0
      %2393 = vmatpush2.bf16.msra.mxu0 0
      %2394 = vmatprep.subr.bf16.mxu0 0
      %2395 = vmatpush2.bf16.msra.mxu0 0
      %2396 = vmatprep.subr.bf16.mxu0 0
      %2397 = vmatpush2.bf16.msra.mxu0 0
      %2398 = vmatprep.mubr.bf16.mxu0 0
      %2399 = vmatmul.mubr.bf16.gmra.mxu0 %v2343
      %v2400 = vpop.f32.mrf.mxu0
      %v2401 = vadd.f32 0.0, %v2400
      %v2402 = vpop.f32.mrf.mxu0
      %v2403 = vpop.f32.mrf.mxu0
      %v2404 = vadd.f32 0.0, %v2403
      %v2405 = vpop.f32.mrf.mxu0
      %2406 = vmatprep.mubr.bf16.mxu0 0
      %2407 = vmatmul.mubr.bf16.gmra.mxu0 %v2346
      %v2408 = vpop.f32.mrf.mxu0
      %v2409 = vadd.f32 0.0, %v2408
      %v2410 = vpop.f32.mrf.mxu0
      %v2411 = vpop.f32.mrf.mxu0
      %v2412 = vadd.f32 0.0, %v2411
      %v2413 = vpop.f32.mrf.mxu0
      %2414 = vmatprep.mubr.bf16.mxu0 0
      %2415 = vmatmul.mubr.bf16.gmra.mxu0 %v2349
      %v2416 = vpop.f32.mrf.mxu0
      %v2417 = vadd.f32 0.0, %v2416
      %v2418 = vpop.f32.mrf.mxu0
      %v2419 = vpop.f32.mrf.mxu0
      %v2420 = vadd.f32 0.0, %v2419
      %v2421 = vpop.f32.mrf.mxu0
      %2422 = vmatprep.mubr.bf16.mxu0 0
      %2423 = vmatmul.mubr.bf16.gmra.mxu0 %v2352
      %v2424 = vpop.f32.mrf.mxu0
      %v2425 = vadd.f32 0.0, %v2424
      %v2426 = vpop.f32.mrf.mxu0
      %v2427 = vpop.f32.mrf.mxu0
      %v2428 = vadd.f32 0.0, %v2427
      %v2429 = vpop.f32.mrf.mxu0
      %2430 = vmatprep.mubr.bf16.mxu0 0
      %2431 = vmatmul.mubr.bf16.gmra.mxu0 %v2355
      %v2432 = vpop.f32.mrf.mxu0
      %v2433 = vadd.f32 0.0, %v2432
      %v2434 = vpop.f32.mrf.mxu0
      %v2435 = vpop.f32.mrf.mxu0
      %v2436 = vadd.f32 0.0, %v2435
      %v2437 = vpop.f32.mrf.mxu0
      %2438 = vmatprep.mubr.bf16.mxu0 0
      %2439 = vmatmul.mubr.bf16.gmra.mxu0 %v2358
      %v2440 = vpop.f32.mrf.mxu0
      %v2441 = vadd.f32 0.0, %v2440
      %v2442 = vpop.f32.mrf.mxu0
      %v2443 = vpop.f32.mrf.mxu0
      %v2444 = vadd.f32 0.0, %v2443
      %v2445 = vpop.f32.mrf.mxu0
      %2446 = vmatprep.mubr.bf16.mxu0 0
      %2447 = vmatmul.mubr.bf16.gmra.mxu0 %v2361
      %v2448 = vpop.f32.mrf.mxu0
      %v2449 = vadd.f32 0.0, %v2448
      %v2450 = vpop.f32.mrf.mxu0
      %v2451 = vpop.f32.mrf.mxu0
      %v2452 = vadd.f32 0.0, %v2451
      %v2453 = vpop.f32.mrf.mxu0
      %2454 = vmatprep.mubr.bf16.mxu0 0
      %2455 = vmatmul.mubr.bf16.gmra.mxu0 %v2364
      %v2456 = vpop.f32.mrf.mxu0
      %v2457 = vadd.f32 0.0, %v2456
      %v2458 = vpop.f32.mrf.mxu0
      %v2459 = vpop.f32.mrf.mxu0
      %v2460 = vpop.f32.mrf.mxu0
      %2461 = vdwg.mxu0
      %v2462 = vld [vmem:[#allocation2] sm:$0xff]
      %v2463 = vld [vmem:[#allocation2 + $0x8] sm:$0xff]
      %v2464 = vld [vmem:[#allocation2 + $0x10] sm:$0xff]
      %v2465 = vld [vmem:[#allocation2 + $0x18] sm:$0xff]
      %v2466 = vld [vmem:[#allocation2 + $0x20] sm:$0xff]
      %v2467 = vld [vmem:[#allocation2 + $0x28] sm:$0xff]
      %v2468 = vld [vmem:[#allocation2 + $0x30] sm:$0xff]
      %v2469 = vld [vmem:[#allocation2 + $0x38] sm:$0xff]
      %v2470 = vld [vmem:[#allocation2 + $0x40] sm:$0xff]
      %v2471 = vld [vmem:[#allocation2 + $0x48] sm:$0xff]
      %v2472 = vld [vmem:[#allocation2 + $0x50] sm:$0xff]
      %v2473 = vld [vmem:[#allocation2 + $0x58] sm:$0xff]
      %v2474 = vld [vmem:[#allocation2 + $0x60] sm:$0xff]
      %v2475 = vld [vmem:[#allocation2 + $0x68] sm:$0xff]
      %v2476 = vld [vmem:[#allocation2 + $0x70] sm:$0xff]
      %v2477 = vadd.f32 %v2462, %v2401
      %v2478 = vadd.f32 %v2463, %v2404
      %v2479 = vadd.f32 %v2464, %v2409
      %v2480 = vadd.f32 %v2465, %v2412
      %v2481 = vadd.f32 %v2466, %v2417
      %v2482 = vadd.f32 %v2467, %v2420
      %v2483 = vadd.f32 %v2468, %v2425
      %v2484 = vadd.f32 %v2469, %v2428
      %v2485 = vadd.f32 %v2470, %v2433
      %v2486 = vadd.f32 %v2471, %v2436
      %v2487 = vadd.f32 %v2472, %v2441
      %v2488 = vadd.f32 %v2473, %v2444
      %v2489 = vadd.f32 %v2474, %v2449
      %v2490 = vadd.f32 %v2475, %v2452
      %v2491 = vadd.f32 %v2476, %v2457
      %2492 = vst.msk [vmem:[#allocation2] sm:$0xff] %vm349, %v2477
      %2493 = vst.msk [vmem:[#allocation2 + $0x8] sm:$0xff] %vm349, %v2478
      %2494 = vst.msk [vmem:[#allocation2 + $0x10] sm:$0xff] %vm349, %v2479
      %2495 = vst.msk [vmem:[#allocation2 + $0x18] sm:$0xff] %vm349, %v2480
      %2496 = vst.msk [vmem:[#allocation2 + $0x20] sm:$0xff] %vm349, %v2481
      %2497 = vst.msk [vmem:[#allocation2 + $0x28] sm:$0xff] %vm349, %v2482
      %2498 = vst.msk [vmem:[#allocation2 + $0x30] sm:$0xff] %vm349, %v2483
      %2499 = vst.msk [vmem:[#allocation2 + $0x38] sm:$0xff] %vm349, %v2484
      %2500 = vst.msk [vmem:[#allocation2 + $0x40] sm:$0xff] %vm349, %v2485
      %2501 = vst.msk [vmem:[#allocation2 + $0x48] sm:$0xff] %vm349, %v2486
      %2502 = vst.msk [vmem:[#allocation2 + $0x50] sm:$0xff] %vm349, %v2487
      %2503 = vst.msk [vmem:[#allocation2 + $0x58] sm:$0xff] %vm349, %v2488
      %2504 = vst.msk [vmem:[#allocation2 + $0x60] sm:$0xff] %vm349, %v2489
      %2505 = vst.msk [vmem:[#allocation2 + $0x68] sm:$0xff] %vm349, %v2490
      %2506 = vst.msk [vmem:[#allocation2 + $0x70] sm:$0xff] %vm349, %v2491
      %v2507 = vld [vmem:[%s244 + $0xc] sm:$0xe]
      %v2508 = vld [vmem:[%s244 + $0x10] sm:$0xf]
      %v2509 = vld [vmem:[%s244 + $0x14] sm:$0xf]
      %v2510 = vld [vmem:[%s244 + $0x18] sm:$0xf]
      %v2511 = vld [vmem:[%s244 + $0x1c] sm:$0xf]
      %v2512 = vld [vmem:[%s244 + $0x20] sm:$0xf]
      %v2513 = vld [vmem:[%s244 + $0x24] sm:$0xf]
      %v2514 = vld [vmem:[%s244 + $0x28] sm:$0xf]
      %v2515 = vld [vmem:[%s244 + $0x2c] sm:$0xf]
      %v2516 = vld [vmem:[%s244 + $0x30] sm:$0xf]
      %v2517 = vld [vmem:[%s244 + $0x34] sm:$0xf]
      %v2518 = vld [vmem:[%s244 + $0x38] sm:$0xf]
      %v2519 = vld [vmem:[%s244 + $0x3c] sm:$0xf]
      %v2520 = vld [vmem:[%s244 + $0x40] sm:$0xf]
      %v2521 = vld [vmem:[%s244 + $0x44] sm:$0xf]
      %v2522 = vld [vmem:[%s244 + $0x48] sm:$0x1]
      %s2523 = scalar_lea.vmem %s248, 256
      %v2524 = vld [vmem:[%s2523] sm:$0xf]
      %v2525 = vld [vmem:[%s2523 + $0x4] sm:$0xf]
      %v2526 = vld [vmem:[%s2523 + $0x8] sm:$0xf]
      %v2527 = vld [vmem:[%s2523 + $0xc] sm:$0xf]
      %v2528 = vld [vmem:[%s2523 + $0x10] sm:$0xf]
      %v2529 = vld [vmem:[%s2523 + $0x14] sm:$0xf]
      %v2530 = vld [vmem:[%s2523 + $0x18] sm:$0xf]
      %v2531 = vld [vmem:[%s2523 + $0x1c] sm:$0xf]
      %v2548 = vunpack.c.l.b16 %v2507
      %v2549 = vunpack.c.l.b16 %v2508
      %v2550 = vunpack.c.l.b16 %v2509
      %v2551 = vunpack.c.l.b16 %v2510
      %v2552 = vunpack.c.l.b16 %v2511
      %v2553 = vunpack.c.l.b16 %v2512
      %v2554 = vunpack.c.l.b16 %v2513
      %v2555 = vunpack.c.l.b16 %v2514
      %v2556 = vunpack.c.l.b16 %v2515
      %v2557 = vunpack.c.l.b16 %v2516
      %v2558 = vunpack.c.l.b16 %v2517
      %v2559 = vunpack.c.l.b16 %v2518
      %v2560 = vunpack.c.l.b16 %v2519
      %v2561 = vunpack.c.l.b16 %v2520
      %v2562 = vunpack.c.l.b16 %v2521
      %v2563 = vunpack.c.l.b16 %v2522
      %v2564 = vpack.c.b16 %v2549, %v2548
      %v2565 = vpack.c.b16 %v2551, %v2550
      %v2566 = vpack.c.b16 %v2553, %v2552
      %v2567 = vpack.c.b16 %v2555, %v2554
      %v2568 = vpack.c.b16 %v2557, %v2556
      %v2569 = vpack.c.b16 %v2559, %v2558
      %v2570 = vpack.c.b16 %v2561, %v2560
      %v2571 = vpack.c.b16 %v2563, %v2562
      %v2572 = vrot.slane %v2564, 1
      %v2573 = vrot.slane %v2565, 1
      %v2574 = vsel %vm868, %v2572, %v2573
      %v2575 = vrot.slane %v2566, 1
      %v2576 = vsel %vm868, %v2573, %v2575
      %v2577 = vrot.slane %v2567, 1
      %v2578 = vsel %vm868, %v2575, %v2577
      %v2579 = vrot.slane %v2568, 1
      %v2580 = vsel %vm868, %v2577, %v2579
      %v2581 = vrot.slane %v2569, 1
      %v2582 = vsel %vm868, %v2579, %v2581
      %v2583 = vrot.slane %v2570, 1
      %v2584 = vsel %vm868, %v2581, %v2583
      %v2585 = vrot.slane %v2571, 1
      %v2586 = vsel %vm868, %v2583, %v2585
      %v2595 = vunpack.c.l.b16 %v2524
      %v2596 = vunpack.c.l.b16 %v2525
      %v2597 = vunpack.c.l.b16 %v2526
      %v2598 = vunpack.c.l.b16 %v2527
      %v2599 = vunpack.c.l.b16 %v2528
      %v2600 = vunpack.c.l.b16 %v2529
      %v2601 = vunpack.c.l.b16 %v2530
      %v2602 = vunpack.c.l.b16 %v2531
      %v2603 = vpack.c.b16 %v2596, %v2595
      %v2604 = vpack.c.b16 %v2598, %v2597
      %v2605 = vpack.c.b16 %v2600, %v2599
      %v2606 = vpack.c.b16 %v2602, %v2601
      %v2612 = vsel %vm349, %v2574, 0
      %v2615 = vsel %vm349, %v2576, 0
      %v2618 = vsel %vm349, %v2578, 0
      %v2621 = vsel %vm349, %v2580, 0
      %v2624 = vsel %vm349, %v2582, 0
      %v2627 = vsel %vm349, %v2584, 0
      %v2630 = vsel %vm349, %v2586, 0
      %v2633 = vsel %vm349, %v2585, 0
      %2635 = vmatprep.subr.bf16.mxu0 0
      %2636 = vmatpush1.bf16.msra.mxu0 0
      %2637 = vmatprep.subr.bf16.mxu0 0
      %2638 = vmatpush1.bf16.msra.mxu0 0
      %2639 = vmatprep.subr.bf16.mxu0 0
      %2640 = vmatpush1.bf16.msra.mxu0 0
      %2641 = vmatprep.subr.bf16.mxu0 0
      %2642 = vmatpush1.bf16.msra.mxu0 0
      %2643 = vmatprep.subr.bf16.mxu0 0
      %2644 = vmatpush1.bf16.msra.mxu0 %v2606
      %2645 = vmatprep.subr.bf16.mxu0 0
      %2646 = vmatpush1.bf16.msra.mxu0 %v2605
      %2647 = vmatprep.subr.bf16.mxu0 0
      %2648 = vmatpush1.bf16.msra.mxu0 %v2604
      %2649 = vmatprep.subr.bf16.mxu0 0
      %2650 = vmatpush1.bf16.msra.mxu0 %v2603
      %2651 = vmatprep.subr.bf16.mxu0 0
      %2652 = vmatpush2.bf16.msra.mxu0 0
      %2653 = vmatprep.subr.bf16.mxu0 0
      %2654 = vmatpush2.bf16.msra.mxu0 0
      %2655 = vmatprep.subr.bf16.mxu0 0
      %2656 = vmatpush2.bf16.msra.mxu0 0
      %2657 = vmatprep.subr.bf16.mxu0 0
      %2658 = vmatpush2.bf16.msra.mxu0 0
      %2659 = vmatprep.subr.bf16.mxu0 0
      %2660 = vmatpush2.bf16.msra.mxu0 0
      %2661 = vmatprep.subr.bf16.mxu0 0
      %2662 = vmatpush2.bf16.msra.mxu0 0
      %2663 = vmatprep.subr.bf16.mxu0 0
      %2664 = vmatpush2.bf16.msra.mxu0 0
      %2665 = vmatprep.subr.bf16.mxu0 0
      %2666 = vmatpush2.bf16.msra.mxu0 0
      %2667 = vmatprep.mubr.bf16.mxu0 0
      %2668 = vmatmul.mubr.bf16.gmra.mxu0 %v2612
      %v2669 = vpop.f32.mrf.mxu0
      %v2670 = vadd.f32 0.0, %v2669
      %v2671 = vpop.f32.mrf.mxu0
      %v2672 = vpop.f32.mrf.mxu0
      %v2673 = vadd.f32 0.0, %v2672
      %v2674 = vpop.f32.mrf.mxu0
      %2675 = vmatprep.mubr.bf16.mxu0 0
      %2676 = vmatmul.mubr.bf16.gmra.mxu0 %v2615
      %v2677 = vpop.f32.mrf.mxu0
      %v2678 = vadd.f32 0.0, %v2677
      %v2679 = vpop.f32.mrf.mxu0
      %v2680 = vpop.f32.mrf.mxu0
      %v2681 = vadd.f32 0.0, %v2680
      %v2682 = vpop.f32.mrf.mxu0
      %2683 = vmatprep.mubr.bf16.mxu0 0
      %2684 = vmatmul.mubr.bf16.gmra.mxu0 %v2618
      %v2685 = vpop.f32.mrf.mxu0
      %v2686 = vadd.f32 0.0, %v2685
      %v2687 = vpop.f32.mrf.mxu0
      %v2688 = vpop.f32.mrf.mxu0
      %v2689 = vadd.f32 0.0, %v2688
      %v2690 = vpop.f32.mrf.mxu0
      %2691 = vmatprep.mubr.bf16.mxu0 0
      %2692 = vmatmul.mubr.bf16.gmra.mxu0 %v2621
      %v2693 = vpop.f32.mrf.mxu0
      %v2694 = vadd.f32 0.0, %v2693
      %v2695 = vpop.f32.mrf.mxu0
      %v2696 = vpop.f32.mrf.mxu0
      %v2697 = vadd.f32 0.0, %v2696
      %v2698 = vpop.f32.mrf.mxu0
      %2699 = vmatprep.mubr.bf16.mxu0 0
      %2700 = vmatmul.mubr.bf16.gmra.mxu0 %v2624
      %v2701 = vpop.f32.mrf.mxu0
      %v2702 = vadd.f32 0.0, %v2701
      %v2703 = vpop.f32.mrf.mxu0
      %v2704 = vpop.f32.mrf.mxu0
      %v2705 = vadd.f32 0.0, %v2704
      %v2706 = vpop.f32.mrf.mxu0
      %2707 = vmatprep.mubr.bf16.mxu0 0
      %2708 = vmatmul.mubr.bf16.gmra.mxu0 %v2627
      %v2709 = vpop.f32.mrf.mxu0
      %v2710 = vadd.f32 0.0, %v2709
      %v2711 = vpop.f32.mrf.mxu0
      %v2712 = vpop.f32.mrf.mxu0
      %v2713 = vadd.f32 0.0, %v2712
      %v2714 = vpop.f32.mrf.mxu0
      %2715 = vmatprep.mubr.bf16.mxu0 0
      %2716 = vmatmul.mubr.bf16.gmra.mxu0 %v2630
      %v2717 = vpop.f32.mrf.mxu0
      %v2718 = vadd.f32 0.0, %v2717
      %v2719 = vpop.f32.mrf.mxu0
      %v2720 = vpop.f32.mrf.mxu0
      %v2721 = vadd.f32 0.0, %v2720
      %v2722 = vpop.f32.mrf.mxu0
      %2723 = vmatprep.mubr.bf16.mxu0 0
      %2724 = vmatmul.mubr.bf16.gmra.mxu0 %v2633
      %v2725 = vpop.f32.mrf.mxu0
      %v2726 = vadd.f32 0.0, %v2725
      %v2727 = vpop.f32.mrf.mxu0
      %v2728 = vpop.f32.mrf.mxu0
      %v2729 = vpop.f32.mrf.mxu0
      %2730 = vdwg.mxu0
      %v2731 = vld [vmem:[#allocation2] sm:$0xff]
      %v2732 = vld [vmem:[#allocation2 + $0x8] sm:$0xff]
      %v2733 = vld [vmem:[#allocation2 + $0x10] sm:$0xff]
      %v2734 = vld [vmem:[#allocation2 + $0x18] sm:$0xff]
      %v2735 = vld [vmem:[#allocation2 + $0x20] sm:$0xff]
      %v2736 = vld [vmem:[#allocation2 + $0x28] sm:$0xff]
      %v2737 = vld [vmem:[#allocation2 + $0x30] sm:$0xff]
      %v2738 = vld [vmem:[#allocation2 + $0x38] sm:$0xff]
      %v2739 = vld [vmem:[#allocation2 + $0x40] sm:$0xff]
      %v2740 = vld [vmem:[#allocation2 + $0x48] sm:$0xff]
      %v2741 = vld [vmem:[#allocation2 + $0x50] sm:$0xff]
      %v2742 = vld [vmem:[#allocation2 + $0x58] sm:$0xff]
      %v2743 = vld [vmem:[#allocation2 + $0x60] sm:$0xff]
      %v2744 = vld [vmem:[#allocation2 + $0x68] sm:$0xff]
      %v2745 = vld [vmem:[#allocation2 + $0x70] sm:$0xff]
      %v2746 = vadd.f32 %v2731, %v2670
      %v2747 = vadd.f32 %v2732, %v2673
      %v2748 = vadd.f32 %v2733, %v2678
      %v2749 = vadd.f32 %v2734, %v2681
      %v2750 = vadd.f32 %v2735, %v2686
      %v2751 = vadd.f32 %v2736, %v2689
      %v2752 = vadd.f32 %v2737, %v2694
      %v2753 = vadd.f32 %v2738, %v2697
      %v2754 = vadd.f32 %v2739, %v2702
      %v2755 = vadd.f32 %v2740, %v2705
      %v2756 = vadd.f32 %v2741, %v2710
      %v2757 = vadd.f32 %v2742, %v2713
      %v2758 = vadd.f32 %v2743, %v2718
      %v2759 = vadd.f32 %v2744, %v2721
      %v2760 = vadd.f32 %v2745, %v2726
      %2761 = vst.msk [vmem:[#allocation2] sm:$0xff] %vm349, %v2746
      %2762 = vst.msk [vmem:[#allocation2 + $0x8] sm:$0xff] %vm349, %v2747
      %2763 = vst.msk [vmem:[#allocation2 + $0x10] sm:$0xff] %vm349, %v2748
      %2764 = vst.msk [vmem:[#allocation2 + $0x18] sm:$0xff] %vm349, %v2749
      %2765 = vst.msk [vmem:[#allocation2 + $0x20] sm:$0xff] %vm349, %v2750
      %2766 = vst.msk [vmem:[#allocation2 + $0x28] sm:$0xff] %vm349, %v2751
      %2767 = vst.msk [vmem:[#allocation2 + $0x30] sm:$0xff] %vm349, %v2752
      %2768 = vst.msk [vmem:[#allocation2 + $0x38] sm:$0xff] %vm349, %v2753
      %2769 = vst.msk [vmem:[#allocation2 + $0x40] sm:$0xff] %vm349, %v2754
      %2770 = vst.msk [vmem:[#allocation2 + $0x48] sm:$0xff] %vm349, %v2755
      %2771 = vst.msk [vmem:[#allocation2 + $0x50] sm:$0xff] %vm349, %v2756
      %2772 = vst.msk [vmem:[#allocation2 + $0x58] sm:$0xff] %vm349, %v2757
      %2773 = vst.msk [vmem:[#allocation2 + $0x60] sm:$0xff] %vm349, %v2758
      %2774 = vst.msk [vmem:[#allocation2 + $0x68] sm:$0xff] %vm349, %v2759
      %2775 = vst.msk [vmem:[#allocation2 + $0x70] sm:$0xff] %vm349, %v2760
      %v2776 = vld [vmem:[%s251] sm:$0x1]
      %v2777 = vld [vmem:[%s254] sm:$0x1]
      %v2778 = vld [vmem:[#allocation2] sm:$0xff]
      %v2779 = vld [vmem:[#allocation2 + $0x8] sm:$0x3]
      %v2781 = vlaneseq
      %v2782 = vshrl.u32 %v2781, 7
      %v2783 = vsub.s32 0, %v2782
      %v2784 = vrot.slane %v2776, %v2783
      %v2786 = vmul.f32 %v2778, %v2784
      %v2787 = vmul.f32 %v2779, %v2784
      %v2789 = vlaneseq
      %v2790 = vshrl.u32 %v2789, 7
      %v2791 = vsub.s32 0, %v2790
      %v2792 = vrot.slane %v2777, %v2791
      %v2794 = vadd.f32 %v2786, %v2792
      %v2795 = vadd.f32 %v2787, %v2792
      %v2796 = vmax.f32 %v2794, 0.0
      %v2797 = vmax.f32 %v2795, 0.0
      %v2798 = vpack.c.bf16 %v2797, %v2796
      %v2800 = vunpack.c.l.b16 %v2798
      %v2801 = vunpack.c.h.b16 %v2798
      %v2802 = vpack.c.b16 %v2800, %v2800
      %v2803 = vpack.c.b16 %v2801, %v2801
      %vm2806 = vcmask 519168
      %2807 = vst.msk [vmem:[%s262] sm:$0xf] %vm2806, %v2802
      %vm2808 = vcmask 516096
      %2809 = vst.msk [vmem:[%s262 + $0x4] sm:$0x1] %vm2808, %v2803
      %v2810 = vld [vmem:[#allocation2 + $0xc] sm:$0xff]
      %v2811 = vld [vmem:[#allocation2 + $0x14] sm:$0x3]
      %v2812 = vmul.f32 %v2810, %v2784
      %v2813 = vmul.f32 %v2811, %v2784
      %v2814 = vadd.f32 %v2812, %v2792
      %v2815 = vadd.f32 %v2813, %v2792
      %v2816 = vmax.f32 %v2814, 0.0
      %v2817 = vmax.f32 %v2815, 0.0
      %v2818 = vpack.c.bf16 %v2817, %v2816
      %v2820 = vunpack.c.l.b16 %v2818
      %v2821 = vunpack.c.h.b16 %v2818
      %v2822 = vpack.c.b16 %v2820, %v2820
      %v2823 = vpack.c.b16 %v2821, %v2821
      %s2826 = scalar_lea.vmem %s262, 8
      %2827 = vst.msk [vmem:[%s2826] sm:$0xf] %vm2806, %v2822
      %2828 = vst.msk [vmem:[%s2826 + $0x4] sm:$0x1] %vm2808, %v2823
      %v2829 = vld [vmem:[#allocation2 + $0x18] sm:$0xff]
      %v2830 = vld [vmem:[#allocation2 + $0x20] sm:$0x3]
      %v2831 = vmul.f32 %v2829, %v2784
      %v2832 = vmul.f32 %v2830, %v2784
      %v2833 = vadd.f32 %v2831, %v2792
      %v2834 = vadd.f32 %v2832, %v2792
      %v2835 = vmax.f32 %v2833, 0.0
      %v2836 = vmax.f32 %v2834, 0.0
      %v2837 = vpack.c.bf16 %v2836, %v2835
      %v2839 = vunpack.c.l.b16 %v2837
      %v2840 = vunpack.c.h.b16 %v2837
      %v2841 = vpack.c.b16 %v2839, %v2839
      %v2842 = vpack.c.b16 %v2840, %v2840
      %s2845 = scalar_lea.vmem %s262, 16
      %2846 = vst.msk [vmem:[%s2845] sm:$0xf] %vm2806, %v2841
      %2847 = vst.msk [vmem:[%s2845 + $0x4] sm:$0x1] %vm2808, %v2842
      %v2848 = vld [vmem:[#allocation2 + $0x24] sm:$0xff]
      %v2849 = vld [vmem:[#allocation2 + $0x2c] sm:$0x3]
      %v2850 = vmul.f32 %v2848, %v2784
      %v2851 = vmul.f32 %v2849, %v2784
      %v2852 = vadd.f32 %v2850, %v2792
      %v2853 = vadd.f32 %v2851, %v2792
      %v2854 = vmax.f32 %v2852, 0.0
      %v2855 = vmax.f32 %v2853, 0.0
      %v2856 = vpack.c.bf16 %v2855, %v2854
      %v2858 = vunpack.c.l.b16 %v2856
      %v2859 = vunpack.c.h.b16 %v2856
      %v2860 = vpack.c.b16 %v2858, %v2858
      %v2861 = vpack.c.b16 %v2859, %v2859
      %s2864 = scalar_lea.vmem %s262, 24
      %2865 = vst.msk [vmem:[%s2864] sm:$0xf] %vm2806, %v2860
      %2866 = vst.msk [vmem:[%s2864 + $0x4] sm:$0x1] %vm2808, %v2861
      %v2867 = vld [vmem:[#allocation2 + $0x30] sm:$0xff]
      %v2868 = vld [vmem:[#allocation2 + $0x38] sm:$0x3]
      %v2869 = vmul.f32 %v2867, %v2784
      %v2870 = vmul.f32 %v2868, %v2784
      %v2871 = vadd.f32 %v2869, %v2792
      %v2872 = vadd.f32 %v2870, %v2792
      %v2873 = vmax.f32 %v2871, 0.0
      %v2874 = vmax.f32 %v2872, 0.0
      %v2875 = vpack.c.bf16 %v2874, %v2873
      %v2877 = vunpack.c.l.b16 %v2875
      %v2878 = vunpack.c.h.b16 %v2875
      %v2879 = vpack.c.b16 %v2877, %v2877
      %v2880 = vpack.c.b16 %v2878, %v2878
      %s2883 = scalar_lea.vmem %s262, 32
      %2884 = vst.msk [vmem:[%s2883] sm:$0xf] %vm2806, %v2879
      %2885 = vst.msk [vmem:[%s2883 + $0x4] sm:$0x1] %vm2808, %v2880
      %v2886 = vld [vmem:[#allocation2 + $0x3c] sm:$0xff]
      %v2887 = vld [vmem:[#allocation2 + $0x44] sm:$0x3]
      %v2888 = vmul.f32 %v2886, %v2784
      %v2889 = vmul.f32 %v2887, %v2784
      %v2890 = vadd.f32 %v2888, %v2792
      %v2891 = vadd.f32 %v2889, %v2792
      %v2892 = vmax.f32 %v2890, 0.0
      %v2893 = vmax.f32 %v2891, 0.0
      %v2894 = vpack.c.bf16 %v2893, %v2892
      %v2896 = vunpack.c.l.b16 %v2894
      %v2897 = vunpack.c.h.b16 %v2894
      %v2898 = vpack.c.b16 %v2896, %v2896
      %v2899 = vpack.c.b16 %v2897, %v2897
      %s2902 = scalar_lea.vmem %s262, 40
      %2903 = vst.msk [vmem:[%s2902] sm:$0xf] %vm2806, %v2898
      %2904 = vst.msk [vmem:[%s2902 + $0x4] sm:$0x1] %vm2808, %v2899
      %v2905 = vld [vmem:[#allocation2 + $0x48] sm:$0xff]
      %v2906 = vld [vmem:[#allocation2 + $0x50] sm:$0x3]
      %v2907 = vmul.f32 %v2905, %v2784
      %v2908 = vmul.f32 %v2906, %v2784
      %v2909 = vadd.f32 %v2907, %v2792
      %v2910 = vadd.f32 %v2908, %v2792
      %v2911 = vmax.f32 %v2909, 0.0
      %v2912 = vmax.f32 %v2910, 0.0
      %v2913 = vpack.c.bf16 %v2912, %v2911
      %v2915 = vunpack.c.l.b16 %v2913
      %v2916 = vunpack.c.h.b16 %v2913
      %v2917 = vpack.c.b16 %v2915, %v2915
      %v2918 = vpack.c.b16 %v2916, %v2916
      %s2921 = scalar_lea.vmem %s262, 48
      %2922 = vst.msk [vmem:[%s2921] sm:$0xf] %vm2806, %v2917
      %2923 = vst.msk [vmem:[%s2921 + $0x4] sm:$0x1] %vm2808, %v2918
      %v2924 = vld [vmem:[#allocation2 + $0x54] sm:$0xff]
      %v2925 = vld [vmem:[#allocation2 + $0x5c] sm:$0x3]
      %v2926 = vmul.f32 %v2924, %v2784
      %v2927 = vmul.f32 %v2925, %v2784
      %v2928 = vadd.f32 %v2926, %v2792
      %v2929 = vadd.f32 %v2927, %v2792
      %v2930 = vmax.f32 %v2928, 0.0
      %v2931 = vmax.f32 %v2929, 0.0
      %v2932 = vpack.c.bf16 %v2931, %v2930
      %v2934 = vunpack.c.l.b16 %v2932
      %v2935 = vunpack.c.h.b16 %v2932
      %v2936 = vpack.c.b16 %v2934, %v2934
      %v2937 = vpack.c.b16 %v2935, %v2935
      %s2940 = scalar_lea.vmem %s262, 56
      %2941 = vst.msk [vmem:[%s2940] sm:$0xf] %vm2806, %v2936
      %2942 = vst.msk [vmem:[%s2940 + $0x4] sm:$0x1] %vm2808, %v2937
      %v2943 = vld [vmem:[#allocation2 + $0x60] sm:$0xff]
      %v2944 = vld [vmem:[#allocation2 + $0x68] sm:$0x3]
      %v2945 = vmul.f32 %v2943, %v2784
      %v2946 = vmul.f32 %v2944, %v2784
      %v2947 = vadd.f32 %v2945, %v2792
      %v2948 = vadd.f32 %v2946, %v2792
      %v2949 = vmax.f32 %v2947, 0.0
      %v2950 = vmax.f32 %v2948, 0.0
      %v2951 = vpack.c.bf16 %v2950, %v2949
      %v2953 = vunpack.c.l.b16 %v2951
      %v2954 = vunpack.c.h.b16 %v2951
      %v2955 = vpack.c.b16 %v2953, %v2953
      %v2956 = vpack.c.b16 %v2954, %v2954
      %s2959 = scalar_lea.vmem %s262, 64
      %2960 = vst.msk [vmem:[%s2959] sm:$0xf] %vm2806, %v2955
      %2961 = vst.msk [vmem:[%s2959 + $0x4] sm:$0x1] %vm2808, %v2956
      %v2962 = vld [vmem:[#allocation2 + $0x6c] sm:$0xff]
      %v2963 = vld [vmem:[#allocation2 + $0x74] sm:$0x3]
      %v2964 = vmul.f32 %v2962, %v2784
      %v2965 = vmul.f32 %v2963, %v2784
      %v2966 = vadd.f32 %v2964, %v2792
      %v2967 = vadd.f32 %v2965, %v2792
      %v2968 = vmax.f32 %v2966, 0.0
      %v2969 = vmax.f32 %v2967, 0.0
      %v2970 = vpack.c.bf16 %v2969, %v2968
      %v2972 = vunpack.c.l.b16 %v2970
      %v2973 = vunpack.c.h.b16 %v2970
      %v2974 = vpack.c.b16 %v2972, %v2972
      %v2975 = vpack.c.b16 %v2973, %v2973
      %s2978 = scalar_lea.vmem %s262, 72
      %2979 = vst.msk [vmem:[%s2978] sm:$0xf] %vm2806, %v2974
      %2980 = vst.msk [vmem:[%s2978 + $0x4] sm:$0x1] %vm2808, %v2975
      %p2981 = scmp.lt.s32.totalorder %s19, 1
      %s2982 = scalar_select %p2981, %s19, 1
      %p2983 = scmp.lt.s32.totalorder %s20, 0
      %s2984 = scalar_select %p2983, %s20, 0
      %s2985 = smul.addr %s2982, 20
      %s2986 = sadd.s32 %s2984, %s2985
      %s2987 = smul.addr %s2986, 4
      %s2988 = scalar_lea.vmem %s4, %s2987
      // Predicated region
      $region37: #{tpu_custom_call.1} parent=35 // pred_check
        %p2989 = pneg %p151
      $region38: #{tpu_custom_call.1} parent=35 // pred_check_branch
        %2991 = sbr.rel (%p2989) target = $region40
      $region39: #{tpu_custom_call.1} parent=35 // pred_region
        _
      $region40: #{tpu_custom_call.1} parent=35 // pred_fallthru
        _
    $region36: #{tpu_custom_call.1} parent=5 // pred_fallthru
      _
    %p2992 = scmp.le.s32.totalorder 2, %s10
    // Predicated region
    $region41: #{tpu_custom_call.1} parent=5 // pred_check
      %p2993 = pneg %p2992
    $region42: #{tpu_custom_call.1} parent=5 // pred_check_branch
      %2995 = sbr.rel (%p2993) target = $region44
    $region43: #{tpu_custom_call.1} parent=5 // pred_region
      %s2996 = ssub.s32 %s10, 2
      // Predicated region
      $region45: #{tpu_custom_call.1} parent=43 // pred_check
        %p2997 = pneg %p157
      $region46: #{tpu_custom_call.1} parent=43 // pred_check_branch
        %2999 = sbr.rel (%p2997) target = $region48
      $region47: #{tpu_custom_call.1} parent=43 // pred_region
        %p3000 = scmp.lt.s32.totalorder %s21, 1
        %s3001 = scalar_select %p3000, %s21, 1
        %p3002 = scmp.lt.s32.totalorder %s22, 0
        %s3003 = scalar_select %p3002, %s22, 0
        %s3004 = smul.addr %s3001, 20
        %s3005 = sadd.s32 %s3003, %s3004
        %s3006 = smul.addr %s3005, 4
        %s3007 = scalar_lea.vmem %s4, %s3006
      $region48: #{tpu_custom_call.1} parent=43 // pred_fallthru
        _
    $region44: #{tpu_custom_call.1} parent=5 // pred_fallthru
      _
  $region6: #{tpu_custom_call.1} parent=0 // loop_footer
    %s14 = sadd.s32 1, %s10
  $region7: #{tpu_custom_call.1} parent=0 // loop_footer_branch
    %9 = sbr.rel target = $region3
  $region8: #{tpu_custom_call.1} parent=0 // loop_exit
    _

</llo_original>
